<compile_context>
chip_gen: v7x
topology: tpu7x:2x2x1
jax: 0.10.0
libtpu: 0.0.40
codegen_flags: <defaults>
</compile_context>

<pallas_src>
import jax
import jax.numpy as jnp
import numpy as np
from jax.experimental import pallas as pl
from jax.experimental.pallas import tpu as pltpu

# ------------------------- model geometry (fixed by the reference module) -----------
H_IN, W_IN, C_IN = 52, 52, 4
OUT_SIZE = 6
LANES = 128                      # only the fc2 output is lane-padded to 128

_K1, _ST1 = 8, 4                 # conv1:  4 -> 32 ch
_K2, _ST2 = 4, 2                 # conv2: 32 -> 64 ch
_K3, _ST3 = 2, 1                 # conv3: 64 -> 64 ch

_P1 = (H_IN - _K1) // _ST1 + 1   # 12
_P2 = (_P1 - _K2) // _ST2 + 1    # 5
_P3 = (_P2 - _K3) // _ST3 + 1    # 4

N_POS1 = _P1 * _P1               # 144 conv1 output positions
N_POS2 = _P2 * _P2               # 25  conv2 output positions
N_POS2_PAD = 32                  # padded per-kk row block (tile aligned; pad rows inert)
N_POS3 = _P3 * _P3               # 16  conv3 output positions
PATCH1 = C_IN * _K1 * _K1        # 256 = conv1 im2col feature width

C1, C2, C3 = 32, 64, 64          # conv channel widths
CF = 64                          # fc1 width

# AdaptiveMaxPool2d((4,4)) over a 4x4 map is the identity (and ReLU o ReLU = ReLU),
# so the fused kernel elides it. Guard that assumption.
assert _P3 == 4, "pool elision assumes conv3 produces a 4x4 map"
# TODO(synk): general AdaptiveMaxPool2d (non-identity geometries) is not implemented.

_VMEM = pl.BlockSpec(memory_space=pltpu.MemorySpace.VMEM)


# ------------------------- trace-time constant builders (numpy) ---------------------

def _conv1_patch_indices():
    """Flat gather indices: patches[oh*12+ow, ci*64+kh*8+kw] = x[ci, oh*4+kh, ow*4+kw]."""
    oh = np.arange(_P1).reshape(-1, 1, 1, 1, 1)
    ow = np.arange(_P1).reshape(1, -1, 1, 1, 1)
    ci = np.arange(C_IN).reshape(1, 1, -1, 1, 1)
    kh = np.arange(_K1).reshape(1, 1, 1, -1, 1)
    kw = np.arange(_K1).reshape(1, 1, 1, 1, -1)
    idx = ci * (H_IN * W_IN) + (oh * _ST1 + kh) * W_IN + (ow * _ST1 + kw)
    return idx.reshape(N_POS1, PATCH1).astype(np.int32)


_CONV1_IDX = _conv1_patch_indices()


def _conv_selector(size_in, size_out, k, stride, pos_out_pad, pos_in_pad):
    """Merged 0/1 row-gather matrix for ALL k*k kernel offsets.

    sel[kk*pos_out_pad + oh*size_out + ow, (oh*stride+kh)*size_in + (ow*stride+kw)] = 1
    """
    sel = np.zeros((k * k * pos_out_pad, pos_in_pad), np.float32)
    for kh in range(k):
        for kw in range(k):
            kk = kh * k + kw
            for oh in range(size_out):
                for ow in range(size_out):
                    src = (oh * stride + kh) * size_in + (ow * stride + kw)
                    sel[kk * pos_out_pad + oh * size_out + ow, src] = 1.0
    return sel


_S2_NP = _conv_selector(_P1, _P2, _K2, _ST2, N_POS2_PAD, N_POS1)     # [512, 144]
_S3_NP = _conv_selector(_P2, _P3, _K3, _ST3, N_POS3, N_POS2_PAD)     # [64, 32]
# Padding rows 25..31 of the conv2 activation hold relu(conv2_b); this is harmless
# iff conv3's selector never reads them. Assert that invariant at build time.
assert not _S3_NP[:, N_POS2:].any(), "conv3 selector must ignore conv2 padding rows"


# ------------------------- fused forward kernel -------------------------------------

def _fused_forward_kernel(patches_ref, w1_ref, b1_ref,
                          s2_ref, w2_ref, b2_ref,
                          s3_ref, w3_ref, b3_ref,
                          wf1_ref, bf1_ref, wf2_ref, bf2_ref,
                          out_ref):
    f32 = jnp.float32

    # conv1 + ReLU: single MXU matmul on the pre-gathered im2col patches.
    a1 = jnp.dot(patches_ref[...], w1_ref[...], preferred_element_type=f32)  # [144, 32]
    a1 = jnp.maximum(a1 + b1_ref[...], 0.0)

    # conv2 + ReLU: ONE merged 0/1 row-gather matmul for all 16 kernel offsets,
    # then 16 small dense weight matmuls accumulated into [32, 64].
    s2 = s2_ref[...].astype(f32)                                    # [512, 144] (0/1 exact)
    g2 = jnp.dot(s2, a1, preferred_element_type=f32)                # [512, 32]
    acc2 = jnp.zeros((N_POS2_PAD, C2), f32)
    for kk in range(_K2 * _K2):
        blk = g2[kk * N_POS2_PAD:(kk + 1) * N_POS2_PAD, :]          # tile-aligned slice
        acc2 = acc2 + jnp.dot(blk, w2_ref[kk], preferred_element_type=f32)
    a2 = jnp.maximum(acc2 + b2_ref[...], 0.0)                       # [32, 64] (25 valid)

    # conv3 + ReLU: same structure (one merged gather matmul + 4 weight matmuls).
    s3 = s3_ref[...].astype(f32)                                    # [64, 32]
    g3 = jnp.dot(s3, a2, preferred_element_type=f32)                # [64, 64]
    acc3 = jnp.zeros((N_POS3, C3), f32)
    for kk in range(_K3 * _K3):
        blk = g3[kk * N_POS3:(kk + 1) * N_POS3, :]
        acc3 = acc3 + jnp.dot(blk, w3_ref[kk], preferred_element_type=f32)
    a3 = jnp.maximum(acc3 + b3_ref[...], 0.0)                       # [16, 64]

    # AdaptiveMaxPool2d((4,4)) on a 4x4 map == identity; trailing ReLU idempotent -> elided.

    # fc1 + ReLU: per-position [1,64]@[64,64] blocks realize the PyTorch (C,H,W)
    # flatten order with no transpose.  (See TODO at file top re: single contraction.)
    acc_f1 = jnp.zeros((1, CF), f32)
    for p in range(N_POS3):
        acc_f1 = acc_f1 + jnp.dot(a3[p:p + 1, :], wf1_ref[p], preferred_element_type=f32)
    h1 = jnp.maximum(acc_f1 + bf1_ref[...], 0.0)                    # [1, 64]

    # fc2 (no activation); wf2 is lane-padded to 128 so the store is full-width.
    out_ref[...] = jnp.dot(h1, wf2_ref[...], preferred_element_type=f32) + bf2_ref[...]


def _fused_call(patches, prep):
    return pl.pallas_call(
        _fused_forward_kernel,
        out_shape=jax.ShapeDtypeStruct((1, LANES), jnp.float32),
        in_specs=[_VMEM] * 13,
        out_specs=_VMEM,
    )(patches, prep["w1"], prep["b1"],
      prep["s2"], prep["w2"], prep["b2"],
      prep["s3"], prep["w3"], prep["b3"],
      prep["wf1"], prep["bf1"], prep["wf2"], prep["bf2"])


# ------------------------- parameter handling ----------------------------------------

def init_params(key):
    """Parameters in the PyTorch layout of the reference module."""
    ks = jax.random.split(key, 10)

    def rnd(k, shape, scale=0.05):
        return jax.random.normal(k, shape, jnp.float32) * scale

    return {
        "conv1_w": rnd(ks[0], (C1, C_IN, _K1, _K1)),
        "conv1_b": rnd(ks[1], (C1,)),
        "conv2_w": rnd(ks[2], (C2, C1, _K2, _K2)),
        "conv2_b": rnd(ks[3], (C2,)),
        "conv3_w": rnd(ks[4], (C3, C2, _K3, _K3)),
        "conv3_b": rnd(ks[5], (C3,)),
        "fc1_w": rnd(ks[6], (CF, C3 * _P3 * _P3)),
        "fc1_b": rnd(ks[7], (CF,)),
        "fc2_w": rnd(ks[8], (OUT_SIZE, CF)),
        "fc2_b": rnd(ks[9], (OUT_SIZE,)),
    }


def prepare_params(params):
    """One-time repack of PyTorch-layout weights into COMPACT, MXU-friendly blocks.

    Real weights stay f32 (exact parity with the reference); the 0/1 selection
    matrices are stored bf16 (exactly representable) and upcast in-kernel.
    """
    f32 = jnp.float32

    def row_bias(b, width):
        return jnp.asarray(b, f32).reshape(1, -1)[:, :width]

    # conv1: [256, 32]; row index = ci*64 + kh*8 + kw (matches the patch gather order)
    w1 = jnp.asarray(params["conv1_w"], f32).reshape(C1, PATCH1).T
    # conv2/conv3: [k*k, Cin, Cout] with [kk][ci, co] = w[co, ci, kh, kw]
    w2 = jnp.asarray(params["conv2_w"], f32).transpose(2, 3, 1, 0).reshape(_K2 * _K2, C1, C2)
    w3 = jnp.asarray(params["conv3_w"], f32).transpose(2, 3, 1, 0).reshape(_K3 * _K3, C2, C3)
    # fc1: [16, 64, 64] with [p][c, n] = fc1_w[n, c*16 + p]  (PyTorch (C,H,W) flatten)
    wf1 = jnp.asarray(params["fc1_w"], f32).reshape(CF, C3, N_POS3).transpose(2, 1, 0)
    # fc2: lane-padded to 128 (cols >= OUT_SIZE are zero) so the kernel's store is dense.
    wf2 = jnp.zeros((CF, LANES), f32).at[:, :OUT_SIZE].set(jnp.asarray(params["fc2_w"], f32).T)
    bf2 = jnp.zeros((1, LANES), f32).at[0, :OUT_SIZE].set(jnp.asarray(params["fc2_b"], f32))

    return {
        "w1": w1, "b1": row_bias(params["conv1_b"], C1),
        "s2": jnp.asarray(_S2_NP, jnp.bfloat16),          # [512, 144] 0/1, exact in bf16
        "w2": w2, "b2": row_bias(params["conv2_b"], C2),
        "s3": jnp.asarray(_S3_NP, jnp.bfloat16),          # [64, 32]
        "w3": w3, "b3": row_bias(params["conv3_b"], C3),
        "wf1": wf1, "bf1": row_bias(params["fc1_b"], CF),
        "wf2": wf2, "bf2": bf2,
    }


# ------------------------- forward ----------------------------------------------------

def forward(x, prep):
    # x: (C_IN, H, W)  == PyTorch x.view(1, C, H, W) with the unit batch dim squeezed.
    patches = x.reshape(-1)[_CONV1_IDX]          # single fused XLA gather -> [144, 256]
    out = _fused_call(patches, prep)             # fused Pallas kernel -> [1, 128]
    return out[:, :OUT_SIZE]                     # [1, 6]


if __name__ == "__main__":
    key = jax.random.PRNGKey(0)
    kx, kp = jax.random.split(key)
    x = jax.random.normal(kx, (C_IN, H_IN, W_IN), jnp.float32)
    params = init_params(kp)
    prep = prepare_params(params)                # one-time weight repack (outside jit)

    fwd = jax.jit(forward)
    out = jax.block_until_ready(fwd(x, prep))
    assert out.shape == (1, OUT_SIZE), out.shape
    assert bool(jnp.all(jnp.isfinite(out)))
    print("KERNEL_OK")
</pallas_src>

<mosaic_0001>
module attributes {stable_mosaic.version = 11 : i64} {
  func.func @_fused_forward_kernel(%arg0: memref<144x256xf32, #tpu.memory_space<vmem>>, %arg1: memref<256x32xf32, #tpu.memory_space<vmem>>, %arg2: memref<1x32xf32, #tpu.memory_space<vmem>>, %arg3: memref<512x144xbf16, #tpu.memory_space<vmem>>, %arg4: memref<16x32x64xf32, #tpu.memory_space<vmem>>, %arg5: memref<1x64xf32, #tpu.memory_space<vmem>>, %arg6: memref<64x32xbf16, #tpu.memory_space<vmem>>, %arg7: memref<4x64x64xf32, #tpu.memory_space<vmem>>, %arg8: memref<1x64xf32, #tpu.memory_space<vmem>>, %arg9: memref<16x64x64xf32, #tpu.memory_space<vmem>>, %arg10: memref<1x64xf32, #tpu.memory_space<vmem>>, %arg11: memref<64x128xf32, #tpu.memory_space<vmem>>, %arg12: memref<1x128xf32, #tpu.memory_space<vmem>>, %arg13: memref<1x128xf32, #tpu.memory_space<vmem>>) attributes {dimension_semantics = [], scalar_prefetch = 0 : i64, scratch_operands = 0 : i64, tpu.core_type = #tpu.core_type<tc>} {
    %c0 = arith.constant 0 : index
    %c0_0 = arith.constant 0 : index
    %0 = vector.load %arg0[%c0, %c0_0] : memref<144x256xf32, #tpu.memory_space<vmem>>, vector<144x256xf32>
    %c0_1 = arith.constant 0 : index
    %c0_2 = arith.constant 0 : index
    %1 = vector.load %arg1[%c0_1, %c0_2] : memref<256x32xf32, #tpu.memory_space<vmem>>, vector<256x32xf32>
    %cst = arith.constant dense<0.000000e+00> : vector<144x32xf32>
    %2 = tpu.matmul %0, %1, %cst {dimension_numbers = #tpu.dot_dimension_numbers<[1], [0], [0], [1], [0, 0, 1, 1], [], []>} : vector<144x256xf32>, vector<256x32xf32>, vector<144x32xf32> -> vector<144x32xf32>
    %c0_3 = arith.constant 0 : index
    %c0_4 = arith.constant 0 : index
    %3 = vector.load %arg2[%c0_3, %c0_4] : memref<1x32xf32, #tpu.memory_space<vmem>>, vector<1x32xf32>
    %4 = vector.broadcast %3 : vector<1x32xf32> to vector<144x32xf32>
    %5 = arith.addf %2, %4 : vector<144x32xf32>
    %cst_5 = arith.constant 0.000000e+00 : f32
    %6 = vector.broadcast %cst_5 : f32 to vector<144x32xf32>
    %7 = arith.maximumf %5, %6 : vector<144x32xf32>
    %c0_6 = arith.constant 0 : index
    %c0_7 = arith.constant 0 : index
    %8 = vector.load %arg3[%c0_6, %c0_7] : memref<512x144xbf16, #tpu.memory_space<vmem>>, vector<512x144xbf16>
    %9 = arith.extf %8 : vector<512x144xbf16> to vector<512x144xf32>
    %cst_8 = arith.constant dense<0.000000e+00> : vector<512x32xf32>
    %10 = tpu.matmul %9, %7, %cst_8 {dimension_numbers = #tpu.dot_dimension_numbers<[1], [0], [0], [1], [0, 0, 1, 1], [], []>} : vector<512x144xf32>, vector<144x32xf32>, vector<512x32xf32> -> vector<512x32xf32>
    %cst_9 = arith.constant 0.000000e+00 : f32
    %11 = vector.broadcast %cst_9 : f32 to vector<32x64xf32>
    %12 = vector.extract_strided_slice %10 {offsets = [0, 0], sizes = [32, 32], strides = [1, 1]} : vector<512x32xf32> to vector<32x32xf32>
    %c0_10 = arith.constant 0 : index
    %c0_11 = arith.constant 0 : index
    %c0_12 = arith.constant 0 : index
    %13 = vector.load %arg4[%c0_10, %c0_11, %c0_12] : memref<16x32x64xf32, #tpu.memory_space<vmem>>, vector<1x32x64xf32>
    %14 = vector.shape_cast %13 : vector<1x32x64xf32> to vector<32x64xf32>
    %cst_13 = arith.constant dense<0.000000e+00> : vector<32x64xf32>
    %15 = tpu.matmul %12, %14, %cst_13 {dimension_numbers = #tpu.dot_dimension_numbers<[1], [0], [0], [1], [0, 0, 1, 1], [], []>} : vector<32x32xf32>, vector<32x64xf32>, vector<32x64xf32> -> vector<32x64xf32>
    %16 = arith.addf %11, %15 : vector<32x64xf32>
    %17 = vector.extract_strided_slice %10 {offsets = [32, 0], sizes = [32, 32], strides = [1, 1]} : vector<512x32xf32> to vector<32x32xf32>
    %c1 = arith.constant 1 : index
    %c0_14 = arith.constant 0 : index
    %c0_15 = arith.constant 0 : index
    %18 = vector.load %arg4[%c1, %c0_14, %c0_15] : memref<16x32x64xf32, #tpu.memory_space<vmem>>, vector<1x32x64xf32>
    %19 = vector.shape_cast %18 : vector<1x32x64xf32> to vector<32x64xf32>
    %cst_16 = arith.constant dense<0.000000e+00> : vector<32x64xf32>
    %20 = tpu.matmul %17, %19, %cst_16 {dimension_numbers = #tpu.dot_dimension_numbers<[1], [0], [0], [1], [0, 0, 1, 1], [], []>} : vector<32x32xf32>, vector<32x64xf32>, vector<32x64xf32> -> vector<32x64xf32>
    %21 = arith.addf %16, %20 : vector<32x64xf32>
    %22 = vector.extract_strided_slice %10 {offsets = [64, 0], sizes = [32, 32], strides = [1, 1]} : vector<512x32xf32> to vector<32x32xf32>
    %c2 = arith.constant 2 : index
    %c0_17 = arith.constant 0 : index
    %c0_18 = arith.constant 0 : index
    %23 = vector.load %arg4[%c2, %c0_17, %c0_18] : memref<16x32x64xf32, #tpu.memory_space<vmem>>, vector<1x32x64xf32>
    %24 = vector.shape_cast %23 : vector<1x32x64xf32> to vector<32x64xf32>
    %cst_19 = arith.constant dense<0.000000e+00> : vector<32x64xf32>
    %25 = tpu.matmul %22, %24, %cst_19 {dimension_numbers = #tpu.dot_dimension_numbers<[1], [0], [0], [1], [0, 0, 1, 1], [], []>} : vector<32x32xf32>, vector<32x64xf32>, vector<32x64xf32> -> vector<32x64xf32>
    %26 = arith.addf %21, %25 : vector<32x64xf32>
    %27 = vector.extract_strided_slice %10 {offsets = [96, 0], sizes = [32, 32], strides = [1, 1]} : vector<512x32xf32> to vector<32x32xf32>
    %c3 = arith.constant 3 : index
    %c0_20 = arith.constant 0 : index
    %c0_21 = arith.constant 0 : index
    %28 = vector.load %arg4[%c3, %c0_20, %c0_21] : memref<16x32x64xf32, #tpu.memory_space<vmem>>, vector<1x32x64xf32>
    %29 = vector.shape_cast %28 : vector<1x32x64xf32> to vector<32x64xf32>
    %cst_22 = arith.constant dense<0.000000e+00> : vector<32x64xf32>
    %30 = tpu.matmul %27, %29, %cst_22 {dimension_numbers = #tpu.dot_dimension_numbers<[1], [0], [0], [1], [0, 0, 1, 1], [], []>} : vector<32x32xf32>, vector<32x64xf32>, vector<32x64xf32> -> vector<32x64xf32>
    %31 = arith.addf %26, %30 : vector<32x64xf32>
    %32 = vector.extract_strided_slice %10 {offsets = [128, 0], sizes = [32, 32], strides = [1, 1]} : vector<512x32xf32> to vector<32x32xf32>
    %c4 = arith.constant 4 : index
    %c0_23 = arith.constant 0 : index
    %c0_24 = arith.constant 0 : index
    %33 = vector.load %arg4[%c4, %c0_23, %c0_24] : memref<16x32x64xf32, #tpu.memory_space<vmem>>, vector<1x32x64xf32>
    %34 = vector.shape_cast %33 : vector<1x32x64xf32> to vector<32x64xf32>
    %cst_25 = arith.constant dense<0.000000e+00> : vector<32x64xf32>
    %35 = tpu.matmul %32, %34, %cst_25 {dimension_numbers = #tpu.dot_dimension_numbers<[1], [0], [0], [1], [0, 0, 1, 1], [], []>} : vector<32x32xf32>, vector<32x64xf32>, vector<32x64xf32> -> vector<32x64xf32>
    %36 = arith.addf %31, %35 : vector<32x64xf32>
    %37 = vector.extract_strided_slice %10 {offsets = [160, 0], sizes = [32, 32], strides = [1, 1]} : vector<512x32xf32> to vector<32x32xf32>
    %c5 = arith.constant 5 : index
    %c0_26 = arith.constant 0 : index
    %c0_27 = arith.constant 0 : index
    %38 = vector.load %arg4[%c5, %c0_26, %c0_27] : memref<16x32x64xf32, #tpu.memory_space<vmem>>, vector<1x32x64xf32>
    %39 = vector.shape_cast %38 : vector<1x32x64xf32> to vector<32x64xf32>
    %cst_28 = arith.constant dense<0.000000e+00> : vector<32x64xf32>
    %40 = tpu.matmul %37, %39, %cst_28 {dimension_numbers = #tpu.dot_dimension_numbers<[1], [0], [0], [1], [0, 0, 1, 1], [], []>} : vector<32x32xf32>, vector<32x64xf32>, vector<32x64xf32> -> vector<32x64xf32>
    %41 = arith.addf %36, %40 : vector<32x64xf32>
    %42 = vector.extract_strided_slice %10 {offsets = [192, 0], sizes = [32, 32], strides = [1, 1]} : vector<512x32xf32> to vector<32x32xf32>
    %c6 = arith.constant 6 : index
    %c0_29 = arith.constant 0 : index
    %c0_30 = arith.constant 0 : index
    %43 = vector.load %arg4[%c6, %c0_29, %c0_30] : memref<16x32x64xf32, #tpu.memory_space<vmem>>, vector<1x32x64xf32>
    %44 = vector.shape_cast %43 : vector<1x32x64xf32> to vector<32x64xf32>
    %cst_31 = arith.constant dense<0.000000e+00> : vector<32x64xf32>
    %45 = tpu.matmul %42, %44, %cst_31 {dimension_numbers = #tpu.dot_dimension_numbers<[1], [0], [0], [1], [0, 0, 1, 1], [], []>} : vector<32x32xf32>, vector<32x64xf32>, vector<32x64xf32> -> vector<32x64xf32>
    %46 = arith.addf %41, %45 : vector<32x64xf32>
    %47 = vector.extract_strided_slice %10 {offsets = [224, 0], sizes = [32, 32], strides = [1, 1]} : vector<512x32xf32> to vector<32x32xf32>
    %c7 = arith.constant 7 : index
    %c0_32 = arith.constant 0 : index
    %c0_33 = arith.constant 0 : index
    %48 = vector.load %arg4[%c7, %c0_32, %c0_33] : memref<16x32x64xf32, #tpu.memory_space<vmem>>, vector<1x32x64xf32>
    %49 = vector.shape_cast %48 : vector<1x32x64xf32> to vector<32x64xf32>
    %cst_34 = arith.constant dense<0.000000e+00> : vector<32x64xf32>
    %50 = tpu.matmul %47, %49, %cst_34 {dimension_numbers = #tpu.dot_dimension_numbers<[1], [0], [0], [1], [0, 0, 1, 1], [], []>} : vector<32x32xf32>, vector<32x64xf32>, vector<32x64xf32> -> vector<32x64xf32>
    %51 = arith.addf %46, %50 : vector<32x64xf32>
    %52 = vector.extract_strided_slice %10 {offsets = [256, 0], sizes = [32, 32], strides = [1, 1]} : vector<512x32xf32> to vector<32x32xf32>
    %c8 = arith.constant 8 : index
    %c0_35 = arith.constant 0 : index
    %c0_36 = arith.constant 0 : index
    %53 = vector.load %arg4[%c8, %c0_35, %c0_36] : memref<16x32x64xf32, #tpu.memory_space<vmem>>, vector<1x32x64xf32>
    %54 = vector.shape_cast %53 : vector<1x32x64xf32> to vector<32x64xf32>
    %cst_37 = arith.constant dense<0.000000e+00> : vector<32x64xf32>
    %55 = tpu.matmul %52, %54, %cst_37 {dimension_numbers = #tpu.dot_dimension_numbers<[1], [0], [0], [1], [0, 0, 1, 1], [], []>} : vector<32x32xf32>, vector<32x64xf32>, vector<32x64xf32> -> vector<32x64xf32>
    %56 = arith.addf %51, %55 : vector<32x64xf32>
    %57 = vector.extract_strided_slice %10 {offsets = [288, 0], sizes = [32, 32], strides = [1, 1]} : vector<512x32xf32> to vector<32x32xf32>
    %c9 = arith.constant 9 : index
    %c0_38 = arith.constant 0 : index
    %c0_39 = arith.constant 0 : index
    %58 = vector.load %arg4[%c9, %c0_38, %c0_39] : memref<16x32x64xf32, #tpu.memory_space<vmem>>, vector<1x32x64xf32>
    %59 = vector.shape_cast %58 : vector<1x32x64xf32> to vector<32x64xf32>
    %cst_40 = arith.constant dense<0.000000e+00> : vector<32x64xf32>
    %60 = tpu.matmul %57, %59, %cst_40 {dimension_numbers = #tpu.dot_dimension_numbers<[1], [0], [0], [1], [0, 0, 1, 1], [], []>} : vector<32x32xf32>, vector<32x64xf32>, vector<32x64xf32> -> vector<32x64xf32>
    %61 = arith.addf %56, %60 : vector<32x64xf32>
    %62 = vector.extract_strided_slice %10 {offsets = [320, 0], sizes = [32, 32], strides = [1, 1]} : vector<512x32xf32> to vector<32x32xf32>
    %c10 = arith.constant 10 : index
    %c0_41 = arith.constant 0 : index
    %c0_42 = arith.constant 0 : index
    %63 = vector.load %arg4[%c10, %c0_41, %c0_42] : memref<16x32x64xf32, #tpu.memory_space<vmem>>, vector<1x32x64xf32>
    %64 = vector.shape_cast %63 : vector<1x32x64xf32> to vector<32x64xf32>
    %cst_43 = arith.constant dense<0.000000e+00> : vector<32x64xf32>
    %65 = tpu.matmul %62, %64, %cst_43 {dimension_numbers = #tpu.dot_dimension_numbers<[1], [0], [0], [1], [0, 0, 1, 1], [], []>} : vector<32x32xf32>, vector<32x64xf32>, vector<32x64xf32> -> vector<32x64xf32>
    %66 = arith.addf %61, %65 : vector<32x64xf32>
    %67 = vector.extract_strided_slice %10 {offsets = [352, 0], sizes = [32, 32], strides = [1, 1]} : vector<512x32xf32> to vector<32x32xf32>
    %c11 = arith.constant 11 : index
    %c0_44 = arith.constant 0 : index
    %c0_45 = arith.constant 0 : index
    %68 = vector.load %arg4[%c11, %c0_44, %c0_45] : memref<16x32x64xf32, #tpu.memory_space<vmem>>, vector<1x32x64xf32>
    %69 = vector.shape_cast %68 : vector<1x32x64xf32> to vector<32x64xf32>
    %cst_46 = arith.constant dense<0.000000e+00> : vector<32x64xf32>
    %70 = tpu.matmul %67, %69, %cst_46 {dimension_numbers = #tpu.dot_dimension_numbers<[1], [0], [0], [1], [0, 0, 1, 1], [], []>} : vector<32x32xf32>, vector<32x64xf32>, vector<32x64xf32> -> vector<32x64xf32>
    %71 = arith.addf %66, %70 : vector<32x64xf32>
    %72 = vector.extract_strided_slice %10 {offsets = [384, 0], sizes = [32, 32], strides = [1, 1]} : vector<512x32xf32> to vector<32x32xf32>
    %c12 = arith.constant 12 : index
    %c0_47 = arith.constant 0 : index
    %c0_48 = arith.constant 0 : index
    %73 = vector.load %arg4[%c12, %c0_47, %c0_48] : memref<16x32x64xf32, #tpu.memory_space<vmem>>, vector<1x32x64xf32>
    %74 = vector.shape_cast %73 : vector<1x32x64xf32> to vector<32x64xf32>
    %cst_49 = arith.constant dense<0.000000e+00> : vector<32x64xf32>
    %75 = tpu.matmul %72, %74, %cst_49 {dimension_numbers = #tpu.dot_dimension_numbers<[1], [0], [0], [1], [0, 0, 1, 1], [], []>} : vector<32x32xf32>, vector<32x64xf32>, vector<32x64xf32> -> vector<32x64xf32>
    %76 = arith.addf %71, %75 : vector<32x64xf32>
    %77 = vector.extract_strided_slice %10 {offsets = [416, 0], sizes = [32, 32], strides = [1, 1]} : vector<512x32xf32> to vector<32x32xf32>
    %c13 = arith.constant 13 : index
    %c0_50 = arith.constant 0 : index
    %c0_51 = arith.constant 0 : index
    %78 = vector.load %arg4[%c13, %c0_50, %c0_51] : memref<16x32x64xf32, #tpu.memory_space<vmem>>, vector<1x32x64xf32>
    %79 = vector.shape_cast %78 : vector<1x32x64xf32> to vector<32x64xf32>
    %cst_52 = arith.constant dense<0.000000e+00> : vector<32x64xf32>
    %80 = tpu.matmul %77, %79, %cst_52 {dimension_numbers = #tpu.dot_dimension_numbers<[1], [0], [0], [1], [0, 0, 1, 1], [], []>} : vector<32x32xf32>, vector<32x64xf32>, vector<32x64xf32> -> vector<32x64xf32>
    %81 = arith.addf %76, %80 : vector<32x64xf32>
    %82 = vector.extract_strided_slice %10 {offsets = [448, 0], sizes = [32, 32], strides = [1, 1]} : vector<512x32xf32> to vector<32x32xf32>
    %c14 = arith.constant 14 : index
    %c0_53 = arith.constant 0 : index
    %c0_54 = arith.constant 0 : index
    %83 = vector.load %arg4[%c14, %c0_53, %c0_54] : memref<16x32x64xf32, #tpu.memory_space<vmem>>, vector<1x32x64xf32>
    %84 = vector.shape_cast %83 : vector<1x32x64xf32> to vector<32x64xf32>
    %cst_55 = arith.constant dense<0.000000e+00> : vector<32x64xf32>
    %85 = tpu.matmul %82, %84, %cst_55 {dimension_numbers = #tpu.dot_dimension_numbers<[1], [0], [0], [1], [0, 0, 1, 1], [], []>} : vector<32x32xf32>, vector<32x64xf32>, vector<32x64xf32> -> vector<32x64xf32>
    %86 = arith.addf %81, %85 : vector<32x64xf32>
    %87 = vector.extract_strided_slice %10 {offsets = [480, 0], sizes = [32, 32], strides = [1, 1]} : vector<512x32xf32> to vector<32x32xf32>
    %c15 = arith.constant 15 : index
    %c0_56 = arith.constant 0 : index
    %c0_57 = arith.constant 0 : index
    %88 = vector.load %arg4[%c15, %c0_56, %c0_57] : memref<16x32x64xf32, #tpu.memory_space<vmem>>, vector<1x32x64xf32>
    %89 = vector.shape_cast %88 : vector<1x32x64xf32> to vector<32x64xf32>
    %cst_58 = arith.constant dense<0.000000e+00> : vector<32x64xf32>
    %90 = tpu.matmul %87, %89, %cst_58 {dimension_numbers = #tpu.dot_dimension_numbers<[1], [0], [0], [1], [0, 0, 1, 1], [], []>} : vector<32x32xf32>, vector<32x64xf32>, vector<32x64xf32> -> vector<32x64xf32>
    %91 = arith.addf %86, %90 : vector<32x64xf32>
    %c0_59 = arith.constant 0 : index
    %c0_60 = arith.constant 0 : index
    %92 = vector.load %arg5[%c0_59, %c0_60] : memref<1x64xf32, #tpu.memory_space<vmem>>, vector<1x64xf32>
    %93 = vector.broadcast %92 : vector<1x64xf32> to vector<32x64xf32>
    %94 = arith.addf %91, %93 : vector<32x64xf32>
    %cst_61 = arith.constant 0.000000e+00 : f32
    %95 = vector.broadcast %cst_61 : f32 to vector<32x64xf32>
    %96 = arith.maximumf %94, %95 : vector<32x64xf32>
    %c0_62 = arith.constant 0 : index
    %c0_63 = arith.constant 0 : index
    %97 = vector.load %arg6[%c0_62, %c0_63] : memref<64x32xbf16, #tpu.memory_space<vmem>>, vector<64x32xbf16>
    %98 = arith.extf %97 : vector<64x32xbf16> to vector<64x32xf32>
    %cst_64 = arith.constant dense<0.000000e+00> : vector<64x64xf32>
    %99 = tpu.matmul %98, %96, %cst_64 {dimension_numbers = #tpu.dot_dimension_numbers<[1], [0], [0], [1], [0, 0, 1, 1], [], []>} : vector<64x32xf32>, vector<32x64xf32>, vector<64x64xf32> -> vector<64x64xf32>
    %cst_65 = arith.constant 0.000000e+00 : f32
    %100 = vector.broadcast %cst_65 : f32 to vector<16x64xf32>
    %101 = vector.extract_strided_slice %99 {offsets = [0, 0], sizes = [16, 64], strides = [1, 1]} : vector<64x64xf32> to vector<16x64xf32>
    %c0_66 = arith.constant 0 : index
    %c0_67 = arith.constant 0 : index
    %c0_68 = arith.constant 0 : index
    %102 = vector.load %arg7[%c0_66, %c0_67, %c0_68] : memref<4x64x64xf32, #tpu.memory_space<vmem>>, vector<1x64x64xf32>
    %103 = vector.shape_cast %102 : vector<1x64x64xf32> to vector<64x64xf32>
    %cst_69 = arith.constant dense<0.000000e+00> : vector<16x64xf32>
    %104 = tpu.matmul %101, %103, %cst_69 {dimension_numbers = #tpu.dot_dimension_numbers<[1], [0], [0], [1], [0, 0, 1, 1], [], []>} : vector<16x64xf32>, vector<64x64xf32>, vector<16x64xf32> -> vector<16x64xf32>
    %105 = arith.addf %100, %104 : vector<16x64xf32>
    %106 = vector.extract_strided_slice %99 {offsets = [16, 0], sizes = [16, 64], strides = [1, 1]} : vector<64x64xf32> to vector<16x64xf32>
    %c1_70 = arith.constant 1 : index
    %c0_71 = arith.constant 0 : index
    %c0_72 = arith.constant 0 : index
    %107 = vector.load %arg7[%c1_70, %c0_71, %c0_72] : memref<4x64x64xf32, #tpu.memory_space<vmem>>, vector<1x64x64xf32>
    %108 = vector.shape_cast %107 : vector<1x64x64xf32> to vector<64x64xf32>
    %cst_73 = arith.constant dense<0.000000e+00> : vector<16x64xf32>
    %109 = tpu.matmul %106, %108, %cst_73 {dimension_numbers = #tpu.dot_dimension_numbers<[1], [0], [0], [1], [0, 0, 1, 1], [], []>} : vector<16x64xf32>, vector<64x64xf32>, vector<16x64xf32> -> vector<16x64xf32>
    %110 = arith.addf %105, %109 : vector<16x64xf32>
    %111 = vector.extract_strided_slice %99 {offsets = [32, 0], sizes = [16, 64], strides = [1, 1]} : vector<64x64xf32> to vector<16x64xf32>
    %c2_74 = arith.constant 2 : index
    %c0_75 = arith.constant 0 : index
    %c0_76 = arith.constant 0 : index
    %112 = vector.load %arg7[%c2_74, %c0_75, %c0_76] : memref<4x64x64xf32, #tpu.memory_space<vmem>>, vector<1x64x64xf32>
    %113 = vector.shape_cast %112 : vector<1x64x64xf32> to vector<64x64xf32>
    %cst_77 = arith.constant dense<0.000000e+00> : vector<16x64xf32>
    %114 = tpu.matmul %111, %113, %cst_77 {dimension_numbers = #tpu.dot_dimension_numbers<[1], [0], [0], [1], [0, 0, 1, 1], [], []>} : vector<16x64xf32>, vector<64x64xf32>, vector<16x64xf32> -> vector<16x64xf32>
    %115 = arith.addf %110, %114 : vector<16x64xf32>
    %116 = vector.extract_strided_slice %99 {offsets = [48, 0], sizes = [16, 64], strides = [1, 1]} : vector<64x64xf32> to vector<16x64xf32>
    %c3_78 = arith.constant 3 : index
    %c0_79 = arith.constant 0 : index
    %c0_80 = arith.constant 0 : index
    %117 = vector.load %arg7[%c3_78, %c0_79, %c0_80] : memref<4x64x64xf32, #tpu.memory_space<vmem>>, vector<1x64x64xf32>
    %118 = vector.shape_cast %117 : vector<1x64x64xf32> to vector<64x64xf32>
    %cst_81 = arith.constant dense<0.000000e+00> : vector<16x64xf32>
    %119 = tpu.matmul %116, %118, %cst_81 {dimension_numbers = #tpu.dot_dimension_numbers<[1], [0], [0], [1], [0, 0, 1, 1], [], []>} : vector<16x64xf32>, vector<64x64xf32>, vector<16x64xf32> -> vector<16x64xf32>
    %120 = arith.addf %115, %119 : vector<16x64xf32>
    %c0_82 = arith.constant 0 : index
    %c0_83 = arith.constant 0 : index
    %121 = vector.load %arg8[%c0_82, %c0_83] : memref<1x64xf32, #tpu.memory_space<vmem>>, vector<1x64xf32>
    %122 = vector.broadcast %121 : vector<1x64xf32> to vector<16x64xf32>
    %123 = arith.addf %120, %122 : vector<16x64xf32>
    %cst_84 = arith.constant 0.000000e+00 : f32
    %124 = vector.broadcast %cst_84 : f32 to vector<16x64xf32>
    %125 = arith.maximumf %123, %124 : vector<16x64xf32>
    %cst_85 = arith.constant 0.000000e+00 : f32
    %126 = vector.broadcast %cst_85 : f32 to vector<1x64xf32>
    %127 = vector.extract_strided_slice %125 {offsets = [0, 0], sizes = [1, 64], strides = [1, 1]} : vector<16x64xf32> to vector<1x64xf32>
    %c0_86 = arith.constant 0 : index
    %c0_87 = arith.constant 0 : index
    %c0_88 = arith.constant 0 : index
    %128 = vector.load %arg9[%c0_86, %c0_87, %c0_88] : memref<16x64x64xf32, #tpu.memory_space<vmem>>, vector<1x64x64xf32>
    %129 = vector.shape_cast %128 : vector<1x64x64xf32> to vector<64x64xf32>
    %cst_89 = arith.constant dense<0.000000e+00> : vector<1x64xf32>
    %130 = tpu.matmul %127, %129, %cst_89 {dimension_numbers = #tpu.dot_dimension_numbers<[1], [0], [0], [1], [0, 0, 1, 1], [], []>} : vector<1x64xf32>, vector<64x64xf32>, vector<1x64xf32> -> vector<1x64xf32>
    %131 = arith.addf %126, %130 : vector<1x64xf32>
    %132 = vector.extract_strided_slice %125 {offsets = [1, 0], sizes = [1, 64], strides = [1, 1]} : vector<16x64xf32> to vector<1x64xf32>
    %c1_90 = arith.constant 1 : index
    %c0_91 = arith.constant 0 : index
    %c0_92 = arith.constant 0 : index
    %133 = vector.load %arg9[%c1_90, %c0_91, %c0_92] : memref<16x64x64xf32, #tpu.memory_space<vmem>>, vector<1x64x64xf32>
    %134 = vector.shape_cast %133 : vector<1x64x64xf32> to vector<64x64xf32>
    %cst_93 = arith.constant dense<0.000000e+00> : vector<1x64xf32>
    %135 = tpu.matmul %132, %134, %cst_93 {dimension_numbers = #tpu.dot_dimension_numbers<[1], [0], [0], [1], [0, 0, 1, 1], [], []>} : vector<1x64xf32>, vector<64x64xf32>, vector<1x64xf32> -> vector<1x64xf32>
    %136 = arith.addf %131, %135 : vector<1x64xf32>
    %137 = vector.extract_strided_slice %125 {offsets = [2, 0], sizes = [1, 64], strides = [1, 1]} : vector<16x64xf32> to vector<1x64xf32>
    %c2_94 = arith.constant 2 : index
    %c0_95 = arith.constant 0 : index
    %c0_96 = arith.constant 0 : index
    %138 = vector.load %arg9[%c2_94, %c0_95, %c0_96] : memref<16x64x64xf32, #tpu.memory_space<vmem>>, vector<1x64x64xf32>
    %139 = vector.shape_cast %138 : vector<1x64x64xf32> to vector<64x64xf32>
    %cst_97 = arith.constant dense<0.000000e+00> : vector<1x64xf32>
    %140 = tpu.matmul %137, %139, %cst_97 {dimension_numbers = #tpu.dot_dimension_numbers<[1], [0], [0], [1], [0, 0, 1, 1], [], []>} : vector<1x64xf32>, vector<64x64xf32>, vector<1x64xf32> -> vector<1x64xf32>
    %141 = arith.addf %136, %140 : vector<1x64xf32>
    %142 = vector.extract_strided_slice %125 {offsets = [3, 0], sizes = [1, 64], strides = [1, 1]} : vector<16x64xf32> to vector<1x64xf32>
    %c3_98 = arith.constant 3 : index
    %c0_99 = arith.constant 0 : index
    %c0_100 = arith.constant 0 : index
    %143 = vector.load %arg9[%c3_98, %c0_99, %c0_100] : memref<16x64x64xf32, #tpu.memory_space<vmem>>, vector<1x64x64xf32>
    %144 = vector.shape_cast %143 : vector<1x64x64xf32> to vector<64x64xf32>
    %cst_101 = arith.constant dense<0.000000e+00> : vector<1x64xf32>
    %145 = tpu.matmul %142, %144, %cst_101 {dimension_numbers = #tpu.dot_dimension_numbers<[1], [0], [0], [1], [0, 0, 1, 1], [], []>} : vector<1x64xf32>, vector<64x64xf32>, vector<1x64xf32> -> vector<1x64xf32>
    %146 = arith.addf %141, %145 : vector<1x64xf32>
    %147 = vector.extract_strided_slice %125 {offsets = [4, 0], sizes = [1, 64], strides = [1, 1]} : vector<16x64xf32> to vector<1x64xf32>
    %c4_102 = arith.constant 4 : index
    %c0_103 = arith.constant 0 : index
    %c0_104 = arith.constant 0 : index
    %148 = vector.load %arg9[%c4_102, %c0_103, %c0_104] : memref<16x64x64xf32, #tpu.memory_space<vmem>>, vector<1x64x64xf32>
    %149 = vector.shape_cast %148 : vector<1x64x64xf32> to vector<64x64xf32>
    %cst_105 = arith.constant dense<0.000000e+00> : vector<1x64xf32>
    %150 = tpu.matmul %147, %149, %cst_105 {dimension_numbers = #tpu.dot_dimension_numbers<[1], [0], [0], [1], [0, 0, 1, 1], [], []>} : vector<1x64xf32>, vector<64x64xf32>, vector<1x64xf32> -> vector<1x64xf32>
    %151 = arith.addf %146, %150 : vector<1x64xf32>
    %152 = vector.extract_strided_slice %125 {offsets = [5, 0], sizes = [1, 64], strides = [1, 1]} : vector<16x64xf32> to vector<1x64xf32>
    %c5_106 = arith.constant 5 : index
    %c0_107 = arith.constant 0 : index
    %c0_108 = arith.constant 0 : index
    %153 = vector.load %arg9[%c5_106, %c0_107, %c0_108] : memref<16x64x64xf32, #tpu.memory_space<vmem>>, vector<1x64x64xf32>
    %154 = vector.shape_cast %153 : vector<1x64x64xf32> to vector<64x64xf32>
    %cst_109 = arith.constant dense<0.000000e+00> : vector<1x64xf32>
    %155 = tpu.matmul %152, %154, %cst_109 {dimension_numbers = #tpu.dot_dimension_numbers<[1], [0], [0], [1], [0, 0, 1, 1], [], []>} : vector<1x64xf32>, vector<64x64xf32>, vector<1x64xf32> -> vector<1x64xf32>
    %156 = arith.addf %151, %155 : vector<1x64xf32>
    %157 = vector.extract_strided_slice %125 {offsets = [6, 0], sizes = [1, 64], strides = [1, 1]} : vector<16x64xf32> to vector<1x64xf32>
    %c6_110 = arith.constant 6 : index
    %c0_111 = arith.constant 0 : index
    %c0_112 = arith.constant 0 : index
    %158 = vector.load %arg9[%c6_110, %c0_111, %c0_112] : memref<16x64x64xf32, #tpu.memory_space<vmem>>, vector<1x64x64xf32>
    %159 = vector.shape_cast %158 : vector<1x64x64xf32> to vector<64x64xf32>
    %cst_113 = arith.constant dense<0.000000e+00> : vector<1x64xf32>
    %160 = tpu.matmul %157, %159, %cst_113 {dimension_numbers = #tpu.dot_dimension_numbers<[1], [0], [0], [1], [0, 0, 1, 1], [], []>} : vector<1x64xf32>, vector<64x64xf32>, vector<1x64xf32> -> vector<1x64xf32>
    %161 = arith.addf %156, %160 : vector<1x64xf32>
    %162 = vector.extract_strided_slice %125 {offsets = [7, 0], sizes = [1, 64], strides = [1, 1]} : vector<16x64xf32> to vector<1x64xf32>
    %c7_114 = arith.constant 7 : index
    %c0_115 = arith.constant 0 : index
    %c0_116 = arith.constant 0 : index
    %163 = vector.load %arg9[%c7_114, %c0_115, %c0_116] : memref<16x64x64xf32, #tpu.memory_space<vmem>>, vector<1x64x64xf32>
    %164 = vector.shape_cast %163 : vector<1x64x64xf32> to vector<64x64xf32>
    %cst_117 = arith.constant dense<0.000000e+00> : vector<1x64xf32>
    %165 = tpu.matmul %162, %164, %cst_117 {dimension_numbers = #tpu.dot_dimension_numbers<[1], [0], [0], [1], [0, 0, 1, 1], [], []>} : vector<1x64xf32>, vector<64x64xf32>, vector<1x64xf32> -> vector<1x64xf32>
    %166 = arith.addf %161, %165 : vector<1x64xf32>
    %167 = vector.extract_strided_slice %125 {offsets = [8, 0], sizes = [1, 64], strides = [1, 1]} : vector<16x64xf32> to vector<1x64xf32>
    %c8_118 = arith.constant 8 : index
    %c0_119 = arith.constant 0 : index
    %c0_120 = arith.constant 0 : index
    %168 = vector.load %arg9[%c8_118, %c0_119, %c0_120] : memref<16x64x64xf32, #tpu.memory_space<vmem>>, vector<1x64x64xf32>
    %169 = vector.shape_cast %168 : vector<1x64x64xf32> to vector<64x64xf32>
    %cst_121 = arith.constant dense<0.000000e+00> : vector<1x64xf32>
    %170 = tpu.matmul %167, %169, %cst_121 {dimension_numbers = #tpu.dot_dimension_numbers<[1], [0], [0], [1], [0, 0, 1, 1], [], []>} : vector<1x64xf32>, vector<64x64xf32>, vector<1x64xf32> -> vector<1x64xf32>
    %171 = arith.addf %166, %170 : vector<1x64xf32>
    %172 = vector.extract_strided_slice %125 {offsets = [9, 0], sizes = [1, 64], strides = [1, 1]} : vector<16x64xf32> to vector<1x64xf32>
    %c9_122 = arith.constant 9 : index
    %c0_123 = arith.constant 0 : index
    %c0_124 = arith.constant 0 : index
    %173 = vector.load %arg9[%c9_122, %c0_123, %c0_124] : memref<16x64x64xf32, #tpu.memory_space<vmem>>, vector<1x64x64xf32>
    %174 = vector.shape_cast %173 : vector<1x64x64xf32> to vector<64x64xf32>
    %cst_125 = arith.constant dense<0.000000e+00> : vector<1x64xf32>
    %175 = tpu.matmul %172, %174, %cst_125 {dimension_numbers = #tpu.dot_dimension_numbers<[1], [0], [0], [1], [0, 0, 1, 1], [], []>} : vector<1x64xf32>, vector<64x64xf32>, vector<1x64xf32> -> vector<1x64xf32>
    %176 = arith.addf %171, %175 : vector<1x64xf32>
    %177 = vector.extract_strided_slice %125 {offsets = [10, 0], sizes = [1, 64], strides = [1, 1]} : vector<16x64xf32> to vector<1x64xf32>
    %c10_126 = arith.constant 10 : index
    %c0_127 = arith.constant 0 : index
    %c0_128 = arith.constant 0 : index
    %178 = vector.load %arg9[%c10_126, %c0_127, %c0_128] : memref<16x64x64xf32, #tpu.memory_space<vmem>>, vector<1x64x64xf32>
    %179 = vector.shape_cast %178 : vector<1x64x64xf32> to vector<64x64xf32>
    %cst_129 = arith.constant dense<0.000000e+00> : vector<1x64xf32>
    %180 = tpu.matmul %177, %179, %cst_129 {dimension_numbers = #tpu.dot_dimension_numbers<[1], [0], [0], [1], [0, 0, 1, 1], [], []>} : vector<1x64xf32>, vector<64x64xf32>, vector<1x64xf32> -> vector<1x64xf32>
    %181 = arith.addf %176, %180 : vector<1x64xf32>
    %182 = vector.extract_strided_slice %125 {offsets = [11, 0], sizes = [1, 64], strides = [1, 1]} : vector<16x64xf32> to vector<1x64xf32>
    %c11_130 = arith.constant 11 : index
    %c0_131 = arith.constant 0 : index
    %c0_132 = arith.constant 0 : index
    %183 = vector.load %arg9[%c11_130, %c0_131, %c0_132] : memref<16x64x64xf32, #tpu.memory_space<vmem>>, vector<1x64x64xf32>
    %184 = vector.shape_cast %183 : vector<1x64x64xf32> to vector<64x64xf32>
    %cst_133 = arith.constant dense<0.000000e+00> : vector<1x64xf32>
    %185 = tpu.matmul %182, %184, %cst_133 {dimension_numbers = #tpu.dot_dimension_numbers<[1], [0], [0], [1], [0, 0, 1, 1], [], []>} : vector<1x64xf32>, vector<64x64xf32>, vector<1x64xf32> -> vector<1x64xf32>
    %186 = arith.addf %181, %185 : vector<1x64xf32>
    %187 = vector.extract_strided_slice %125 {offsets = [12, 0], sizes = [1, 64], strides = [1, 1]} : vector<16x64xf32> to vector<1x64xf32>
    %c12_134 = arith.constant 12 : index
    %c0_135 = arith.constant 0 : index
    %c0_136 = arith.constant 0 : index
    %188 = vector.load %arg9[%c12_134, %c0_135, %c0_136] : memref<16x64x64xf32, #tpu.memory_space<vmem>>, vector<1x64x64xf32>
    %189 = vector.shape_cast %188 : vector<1x64x64xf32> to vector<64x64xf32>
    %cst_137 = arith.constant dense<0.000000e+00> : vector<1x64xf32>
    %190 = tpu.matmul %187, %189, %cst_137 {dimension_numbers = #tpu.dot_dimension_numbers<[1], [0], [0], [1], [0, 0, 1, 1], [], []>} : vector<1x64xf32>, vector<64x64xf32>, vector<1x64xf32> -> vector<1x64xf32>
    %191 = arith.addf %186, %190 : vector<1x64xf32>
    %192 = vector.extract_strided_slice %125 {offsets = [13, 0], sizes = [1, 64], strides = [1, 1]} : vector<16x64xf32> to vector<1x64xf32>
    %c13_138 = arith.constant 13 : index
    %c0_139 = arith.constant 0 : index
    %c0_140 = arith.constant 0 : index
    %193 = vector.load %arg9[%c13_138, %c0_139, %c0_140] : memref<16x64x64xf32, #tpu.memory_space<vmem>>, vector<1x64x64xf32>
    %194 = vector.shape_cast %193 : vector<1x64x64xf32> to vector<64x64xf32>
    %cst_141 = arith.constant dense<0.000000e+00> : vector<1x64xf32>
    %195 = tpu.matmul %192, %194, %cst_141 {dimension_numbers = #tpu.dot_dimension_numbers<[1], [0], [0], [1], [0, 0, 1, 1], [], []>} : vector<1x64xf32>, vector<64x64xf32>, vector<1x64xf32> -> vector<1x64xf32>
    %196 = arith.addf %191, %195 : vector<1x64xf32>
    %197 = vector.extract_strided_slice %125 {offsets = [14, 0], sizes = [1, 64], strides = [1, 1]} : vector<16x64xf32> to vector<1x64xf32>
    %c14_142 = arith.constant 14 : index
    %c0_143 = arith.constant 0 : index
    %c0_144 = arith.constant 0 : index
    %198 = vector.load %arg9[%c14_142, %c0_143, %c0_144] : memref<16x64x64xf32, #tpu.memory_space<vmem>>, vector<1x64x64xf32>
    %199 = vector.shape_cast %198 : vector<1x64x64xf32> to vector<64x64xf32>
    %cst_145 = arith.constant dense<0.000000e+00> : vector<1x64xf32>
    %200 = tpu.matmul %197, %199, %cst_145 {dimension_numbers = #tpu.dot_dimension_numbers<[1], [0], [0], [1], [0, 0, 1, 1], [], []>} : vector<1x64xf32>, vector<64x64xf32>, vector<1x64xf32> -> vector<1x64xf32>
    %201 = arith.addf %196, %200 : vector<1x64xf32>
    %202 = vector.extract_strided_slice %125 {offsets = [15, 0], sizes = [1, 64], strides = [1, 1]} : vector<16x64xf32> to vector<1x64xf32>
    %c15_146 = arith.constant 15 : index
    %c0_147 = arith.constant 0 : index
    %c0_148 = arith.constant 0 : index
    %203 = vector.load %arg9[%c15_146, %c0_147, %c0_148] : memref<16x64x64xf32, #tpu.memory_space<vmem>>, vector<1x64x64xf32>
    %204 = vector.shape_cast %203 : vector<1x64x64xf32> to vector<64x64xf32>
    %cst_149 = arith.constant dense<0.000000e+00> : vector<1x64xf32>
    %205 = tpu.matmul %202, %204, %cst_149 {dimension_numbers = #tpu.dot_dimension_numbers<[1], [0], [0], [1], [0, 0, 1, 1], [], []>} : vector<1x64xf32>, vector<64x64xf32>, vector<1x64xf32> -> vector<1x64xf32>
    %206 = arith.addf %201, %205 : vector<1x64xf32>
    %c0_150 = arith.constant 0 : index
    %c0_151 = arith.constant 0 : index
    %207 = vector.load %arg10[%c0_150, %c0_151] : memref<1x64xf32, #tpu.memory_space<vmem>>, vector<1x64xf32>
    %208 = arith.addf %206, %207 : vector<1x64xf32>
    %cst_152 = arith.constant 0.000000e+00 : f32
    %209 = vector.broadcast %cst_152 : f32 to vector<1x64xf32>
    %210 = arith.maximumf %208, %209 : vector<1x64xf32>
    %c0_153 = arith.constant 0 : index
    %c0_154 = arith.constant 0 : index
    %211 = vector.load %arg11[%c0_153, %c0_154] : memref<64x128xf32, #tpu.memory_space<vmem>>, vector<64x128xf32>
    %cst_155 = arith.constant dense<0.000000e+00> : vector<1x128xf32>
    %212 = tpu.matmul %210, %211, %cst_155 {dimension_numbers = #tpu.dot_dimension_numbers<[1], [0], [0], [1], [0, 0, 1, 1], [], []>} : vector<1x64xf32>, vector<64x128xf32>, vector<1x128xf32> -> vector<1x128xf32>
    %c0_156 = arith.constant 0 : index
    %c0_157 = arith.constant 0 : index
    %213 = vector.load %arg12[%c0_156, %c0_157] : memref<1x128xf32, #tpu.memory_space<vmem>>, vector<1x128xf32>
    %214 = arith.addf %212, %213 : vector<1x128xf32>
    %c0_158 = arith.constant 0 : index
    %c0_159 = arith.constant 0 : index
    %215 = vector.load %arg13[%c0_158, %c0_159] : memref<1x128xf32, #tpu.memory_space<vmem>>, vector<1x128xf32>
    tpu.vector_store %arg13[%c0_158, %c0_159], %214 {strides = array<i32>} : memref<1x128xf32, #tpu.memory_space<vmem>>, vector<1x128xf32>,
    return
  }
}

</mosaic_0001>

<llo_original>
// kernel: forward.1
$region0: #{forward.1}
  #allocation0 [shape = 'u32[]', space=smem, size = 0x4, offset = 0x4, fixed_abs, tag = 'smem constant byte address 0x4 - core index']
  #allocation1 [shape = 'u32[144,128]{1,0:T(1,128)}', space=vmem, size = 0x12000, scoped, tag = 'internal scratch']
  %s0 = inlined_call_operand.vmem [shape: f32[144,256], index: 0, kind: input, shape index: {}]
  %s1 = inlined_call_operand.vmem [shape: f32[256,32], index: 1, kind: input, shape index: {}]
  %s2 = inlined_call_operand.vmem [shape: f32[1,32], index: 2, kind: input, shape index: {}]
  %s3 = inlined_call_operand.vmem [shape: bf16[512,144], index: 3, kind: input, shape index: {}]
  %s4 = inlined_call_operand.vmem [shape: f32[16,32,64], index: 4, kind: input, shape index: {}]
  %s5 = inlined_call_operand.vmem [shape: f32[1,64], index: 5, kind: input, shape index: {}]
  %s6 = inlined_call_operand.vmem [shape: bf16[64,32], index: 6, kind: input, shape index: {}]
  %s7 = inlined_call_operand.vmem [shape: f32[4,64,64], index: 7, kind: input, shape index: {}]
  %s8 = inlined_call_operand.vmem [shape: f32[1,64], index: 8, kind: input, shape index: {}]
  %s9 = inlined_call_operand.vmem [shape: f32[16,64,64], index: 9, kind: input, shape index: {}]
  %s10 = inlined_call_operand.vmem [shape: f32[1,64], index: 10, kind: input, shape index: {}]
  %s11 = inlined_call_operand.vmem [shape: f32[64,128], index: 11, kind: input, shape index: {}]
  %s12 = inlined_call_operand.vmem [shape: f32[1,128], index: 12, kind: input, shape index: {}]
  %s13 = inlined_call_operand.hbm [shape: f32[1,128], index: 13, kind: output, shape index: {}]
  %s14 = sld [smem:[#allocation0]]
  $region62: #{forward.1} parent=0
    _
  %s16 = ssub.s32 1, %s14
  %s17 = scalar_select 0, %s16, %s14
  $region1: #{forward.1} parent=0
    #allocation2 [shape = 'u8[512]{0}', space=vmem, size = 0x400, scoped, tag = 'output window, operand 0, single buffered']
    #allocation3 [shape = 's32[1]{0}', space=sflag, size = 0x4, scoped, tag = 'scoped memory for forward.1']
    %18 = vsyncpa [#allocation3], 0
    // Predicated region
    $region2: #{forward.1} parent=1 // pred_check
      _
    $region3: #{forward.1} parent=1 // pred_check_branch
      %20 = sbr.rel (0) target = $region5
    $region4: #{forward.1} parent=1 // pred_region
      _
    $region5: #{forward.1} parent=1 // pred_fallthru
      _
    // Predicated region
    $region6: #{forward.1} parent=1 // pred_check
      _
    $region7: #{forward.1} parent=1 // pred_check_branch
      %22 = sbr.rel (0) target = $region9
    $region8: #{forward.1} parent=1 // pred_region
      _
    $region9: #{forward.1} parent=1 // pred_fallthru
      _
    // Predicated region
    $region10: #{forward.1} parent=1 // pred_check
      _
    $region11: #{forward.1} parent=1 // pred_check_branch
      %24 = sbr.rel (0) target = $region13
    $region12: #{forward.1} parent=1 // pred_region
      _
    $region13: #{forward.1} parent=1 // pred_fallthru
      _
    // Predicated region
    $region14: #{forward.1} parent=1 // pred_check
      _
    $region15: #{forward.1} parent=1 // pred_check_branch
      %26 = sbr.rel (0) target = $region17
    $region16: #{forward.1} parent=1 // pred_region
      _
    $region17: #{forward.1} parent=1 // pred_fallthru
      _
    // Predicated region
    $region18: #{forward.1} parent=1 // pred_check
      _
    $region19: #{forward.1} parent=1 // pred_check_branch
      %28 = sbr.rel (0) target = $region21
    $region20: #{forward.1} parent=1 // pred_region
      _
    $region21: #{forward.1} parent=1 // pred_fallthru
      _
    // Predicated region
    $region22: #{forward.1} parent=1 // pred_check
      _
    $region23: #{forward.1} parent=1 // pred_check_branch
      %30 = sbr.rel (0) target = $region25
    $region24: #{forward.1} parent=1 // pred_region
      _
    $region25: #{forward.1} parent=1 // pred_fallthru
      _
    // Predicated region
    $region26: #{forward.1} parent=1 // pred_check
      _
    $region27: #{forward.1} parent=1 // pred_check_branch
      %32 = sbr.rel (0) target = $region29
    $region28: #{forward.1} parent=1 // pred_region
      _
    $region29: #{forward.1} parent=1 // pred_fallthru
      _
    // Predicated region
    $region30: #{forward.1} parent=1 // pred_check
      _
    $region31: #{forward.1} parent=1 // pred_check_branch
      %34 = sbr.rel (0) target = $region33
    $region32: #{forward.1} parent=1 // pred_region
      _
    $region33: #{forward.1} parent=1 // pred_fallthru
      _
    // Predicated region
    $region34: #{forward.1} parent=1 // pred_check
      _
    $region35: #{forward.1} parent=1 // pred_check_branch
      %36 = sbr.rel (0) target = $region37
    $region36: #{forward.1} parent=1 // pred_region
      _
    $region37: #{forward.1} parent=1 // pred_fallthru
      _
    // Predicated region
    $region38: #{forward.1} parent=1 // pred_check
      _
    $region39: #{forward.1} parent=1 // pred_check_branch
      %38 = sbr.rel (0) target = $region41
    $region40: #{forward.1} parent=1 // pred_region
      _
    $region41: #{forward.1} parent=1 // pred_fallthru
      _
    // Predicated region
    $region42: #{forward.1} parent=1 // pred_check
      _
    $region43: #{forward.1} parent=1 // pred_check_branch
      %40 = sbr.rel (0) target = $region45
    $region44: #{forward.1} parent=1 // pred_region
      _
    $region45: #{forward.1} parent=1 // pred_fallthru
      _
    // Predicated region
    $region46: #{forward.1} parent=1 // pred_check
      _
    $region47: #{forward.1} parent=1 // pred_check_branch
      %42 = sbr.rel (0) target = $region49
    $region48: #{forward.1} parent=1 // pred_region
      _
    $region49: #{forward.1} parent=1 // pred_fallthru
      _
    // Predicated region
    $region50: #{forward.1} parent=1 // pred_check
      _
    $region51: #{forward.1} parent=1 // pred_check_branch
      %44 = sbr.rel (0) target = $region53
    $region52: #{forward.1} parent=1 // pred_region
      _
    $region53: #{forward.1} parent=1 // pred_fallthru
      _
    %v45 = vld [vmem:[%s0] sm:$0xff]
    %v46 = vld [vmem:[%s0 + $0x8] sm:$0xff]
    %v47 = vld [vmem:[%s0 + $0x10] sm:$0xff]
    %v48 = vld [vmem:[%s0 + $0x18] sm:$0xff]
    %v49 = vld [vmem:[%s0 + $0x20] sm:$0xff]
    %v50 = vld [vmem:[%s0 + $0x28] sm:$0xff]
    %v51 = vld [vmem:[%s0 + $0x30] sm:$0xff]
    %v52 = vld [vmem:[%s0 + $0x38] sm:$0xff]
    %v53 = vld [vmem:[%s0 + $0x40] sm:$0xff]
    %v54 = vld [vmem:[%s0 + $0x48] sm:$0xff]
    %v55 = vld [vmem:[%s0 + $0x50] sm:$0xff]
    %v56 = vld [vmem:[%s0 + $0x58] sm:$0xff]
    %v57 = vld [vmem:[%s0 + $0x60] sm:$0xff]
    %v58 = vld [vmem:[%s0 + $0x68] sm:$0xff]
    %v59 = vld [vmem:[%s0 + $0x70] sm:$0xff]
    %v60 = vld [vmem:[%s0 + $0x78] sm:$0xff]
    %v61 = vld [vmem:[%s0 + $0x80] sm:$0xff]
    %v62 = vld [vmem:[%s0 + $0x88] sm:$0xff]
    %v63 = vld [vmem:[%s0 + $0x90] sm:$0xff]
    %v64 = vld [vmem:[%s0 + $0x98] sm:$0xff]
    %v65 = vld [vmem:[%s0 + $0xa0] sm:$0xff]
    %v66 = vld [vmem:[%s0 + $0xa8] sm:$0xff]
    %v67 = vld [vmem:[%s0 + $0xb0] sm:$0xff]
    %v68 = vld [vmem:[%s0 + $0xb8] sm:$0xff]
    %v69 = vld [vmem:[%s0 + $0xc0] sm:$0xff]
    %v70 = vld [vmem:[%s0 + $0xc8] sm:$0xff]
    %v71 = vld [vmem:[%s0 + $0xd0] sm:$0xff]
    %v72 = vld [vmem:[%s0 + $0xd8] sm:$0xff]
    %v73 = vld [vmem:[%s0 + $0xe0] sm:$0xff]
    %v74 = vld [vmem:[%s0 + $0xe8] sm:$0xff]
    %v75 = vld [vmem:[%s0 + $0xf0] sm:$0xff]
    %v76 = vld [vmem:[%s0 + $0xf8] sm:$0xff]
    %v77 = vld [vmem:[%s0 + $0x100] sm:$0xff]
    %v78 = vld [vmem:[%s0 + $0x108] sm:$0xff]
    %v79 = vld [vmem:[%s0 + $0x110] sm:$0xff]
    %v80 = vld [vmem:[%s0 + $0x118] sm:$0xff]
    %v81 = vld [vmem:[%s1] sm:$0xff]
    %v82 = vld [vmem:[%s1 + $0x8] sm:$0xff]
    %v83 = vld [vmem:[%s1 + $0x10] sm:$0xff]
    %v84 = vld [vmem:[%s1 + $0x18] sm:$0xff]
    %v85 = vld [vmem:[%s1 + $0x20] sm:$0xff]
    %v86 = vld [vmem:[%s1 + $0x28] sm:$0xff]
    %v87 = vld [vmem:[%s1 + $0x30] sm:$0xff]
    %v88 = vld [vmem:[%s1 + $0x38] sm:$0xff]
    %v89 = vld [vmem:[%s1 + $0x40] sm:$0xff]
    %v90 = vld [vmem:[%s1 + $0x48] sm:$0xff]
    %v91 = vld [vmem:[%s1 + $0x50] sm:$0xff]
    %v92 = vld [vmem:[%s1 + $0x58] sm:$0xff]
    %v93 = vld [vmem:[%s1 + $0x60] sm:$0xff]
    %v94 = vld [vmem:[%s1 + $0x68] sm:$0xff]
    %v95 = vld [vmem:[%s1 + $0x70] sm:$0xff]
    %v96 = vld [vmem:[%s1 + $0x78] sm:$0xff]
    %v97 = vld [vmem:[%s1 + $0x80] sm:$0xff]
    %v98 = vld [vmem:[%s1 + $0x88] sm:$0xff]
    %v99 = vld [vmem:[%s1 + $0x90] sm:$0xff]
    %v100 = vld [vmem:[%s1 + $0x98] sm:$0xff]
    %v101 = vld [vmem:[%s1 + $0xa0] sm:$0xff]
    %v102 = vld [vmem:[%s1 + $0xa8] sm:$0xff]
    %v103 = vld [vmem:[%s1 + $0xb0] sm:$0xff]
    %v104 = vld [vmem:[%s1 + $0xb8] sm:$0xff]
    %v105 = vld [vmem:[%s1 + $0xc0] sm:$0xff]
    %v106 = vld [vmem:[%s1 + $0xc8] sm:$0xff]
    %v107 = vld [vmem:[%s1 + $0xd0] sm:$0xff]
    %v108 = vld [vmem:[%s1 + $0xd8] sm:$0xff]
    %v109 = vld [vmem:[%s1 + $0xe0] sm:$0xff]
    %v110 = vld [vmem:[%s1 + $0xe8] sm:$0xff]
    %v111 = vld [vmem:[%s1 + $0xf0] sm:$0xff]
    %v112 = vld [vmem:[%s1 + $0xf8] sm:$0xff]
    %v113 = vld [vmem:[%s2] sm:$0x1]
    %v115 = vlaneseq
    %v116 = vshrl.u32 %v115, 7
    %v117 = vsub.s32 0, %v116
    %v118 = vrot.slane %v113, %v117
    %120 = vmatprep.subr.mxu0 0.0
    %121 = vmatpush1.msra.mxu0 %v81
    %122 = vmatprep.subr.mxu0 0.0
    %123 = vmatpush1.msra.mxu0 %v82
    %124 = vmatprep.subr.mxu0 0.0
    %125 = vmatpush1.msra.mxu0 %v83
    %126 = vmatprep.subr.mxu0 0.0
    %127 = vmatpush1.msra.mxu0 %v84
    %128 = vmatprep.subr.mxu0 0.0
    %129 = vmatpush1.msra.mxu0 %v85
    %130 = vmatprep.subr.mxu0 0.0
    %131 = vmatpush1.msra.mxu0 %v86
    %132 = vmatprep.subr.mxu0 0.0
    %133 = vmatpush1.msra.mxu0 %v87
    %134 = vmatprep.subr.mxu0 0.0
    %135 = vmatpush1.msra.mxu0 %v88
    %136 = vmatprep.subr.mxu0 0.0
    %137 = vmatpush1.msra.mxu0 %v89
    %138 = vmatprep.subr.mxu0 0.0
    %139 = vmatpush1.msra.mxu0 %v90
    %140 = vmatprep.subr.mxu0 0.0
    %141 = vmatpush1.msra.mxu0 %v91
    %142 = vmatprep.subr.mxu0 0.0
    %143 = vmatpush1.msra.mxu0 %v92
    %144 = vmatprep.subr.mxu0 0.0
    %145 = vmatpush1.msra.mxu0 %v93
    %146 = vmatprep.subr.mxu0 0.0
    %147 = vmatpush1.msra.mxu0 %v94
    %148 = vmatprep.subr.mxu0 0.0
    %149 = vmatpush1.msra.mxu0 %v95
    %150 = vmatprep.subr.mxu0 0.0
    %151 = vmatpush1.msra.mxu0 %v96
    %152 = vmatprep.subr.mxu0 0.0
    %153 = vmatpush1.msra.mxu0 %v97
    %154 = vmatprep.subr.mxu0 0.0
    %155 = vmatpush1.msra.mxu0 %v98
    %156 = vmatprep.subr.mxu0 0.0
    %157 = vmatpush1.msra.mxu0 %v99
    %158 = vmatprep.subr.mxu0 0.0
    %159 = vmatpush1.msra.mxu0 %v100
    %160 = vmatprep.subr.mxu0 0.0
    %161 = vmatpush1.msra.mxu0 %v101
    %162 = vmatprep.subr.mxu0 0.0
    %163 = vmatpush1.msra.mxu0 %v102
    %164 = vmatprep.subr.mxu0 0.0
    %165 = vmatpush1.msra.mxu0 %v103
    %166 = vmatprep.subr.mxu0 0.0
    %167 = vmatpush1.msra.mxu0 %v104
    %168 = vmatprep.subr.mxu0 0.0
    %169 = vmatpush1.msra.mxu0 %v105
    %170 = vmatprep.subr.mxu0 0.0
    %171 = vmatpush1.msra.mxu0 %v106
    %172 = vmatprep.subr.mxu0 0.0
    %173 = vmatpush1.msra.mxu0 %v107
    %174 = vmatprep.subr.mxu0 0.0
    %175 = vmatpush1.msra.mxu0 %v108
    %176 = vmatprep.subr.mxu0 0.0
    %177 = vmatpush1.msra.mxu0 %v109
    %178 = vmatprep.subr.mxu0 0.0
    %179 = vmatpush1.msra.mxu0 %v110
    %180 = vmatprep.subr.mxu0 0.0
    %181 = vmatpush1.msra.mxu0 %v111
    %182 = vmatprep.subr.mxu0 0.0
    %183 = vmatpush1.msra.mxu0 %v112
    %184 = vmatprep.mubr.f32.mxu0 %v46
    %185 = vmatmul.mubr.f32.gmra.mrb[0].mxu0 %v45
    %v186 = vpop.f32.mrb[0].mxu0
    %v187 = vadd.f32 %v118, %v186
    %v188 = vpop.f32.mrb[0].mxu0
    %189 = vmatprep.mubr.f32.mxu0 %v48
    %190 = vmatmul.mubr.f32.gmra.mrb[0].mxu0 %v47
    %v191 = vpop.f32.mrb[0].mxu0
    %v192 = vadd.f32 %v118, %v191
    %v193 = vpop.f32.mrb[0].mxu0
    %194 = vmatprep.mubr.f32.mxu0 %v50
    %195 = vmatmul.mubr.f32.gmra.mrb[0].mxu0 %v49
    %v196 = vpop.f32.mrb[0].mxu0
    %v197 = vadd.f32 %v118, %v196
    %v198 = vpop.f32.mrb[0].mxu0
    %199 = vmatprep.mubr.f32.mxu0 %v52
    %200 = vmatmul.mubr.f32.gmra.mrb[0].mxu0 %v51
    %v201 = vpop.f32.mrb[0].mxu0
    %v202 = vadd.f32 %v118, %v201
    %v203 = vpop.f32.mrb[0].mxu0
    %204 = vmatprep.mubr.f32.mxu0 %v54
    %205 = vmatmul.mubr.f32.gmra.mrb[0].mxu0 %v53
    %v206 = vpop.f32.mrb[0].mxu0
    %v207 = vadd.f32 %v118, %v206
    %v208 = vpop.f32.mrb[0].mxu0
    %209 = vmatprep.mubr.f32.mxu0 %v56
    %210 = vmatmul.mubr.f32.gmra.mrb[0].mxu0 %v55
    %v211 = vpop.f32.mrb[0].mxu0
    %v212 = vadd.f32 %v118, %v211
    %v213 = vpop.f32.mrb[0].mxu0
    %214 = vmatprep.mubr.f32.mxu0 %v58
    %215 = vmatmul.mubr.f32.gmra.mrb[0].mxu0 %v57
    %v216 = vpop.f32.mrb[0].mxu0
    %v217 = vadd.f32 %v118, %v216
    %v218 = vpop.f32.mrb[0].mxu0
    %219 = vmatprep.mubr.f32.mxu0 %v60
    %220 = vmatmul.mubr.f32.gmra.mrb[0].mxu0 %v59
    %v221 = vpop.f32.mrb[0].mxu0
    %v222 = vadd.f32 %v118, %v221
    %v223 = vpop.f32.mrb[0].mxu0
    %224 = vmatprep.mubr.f32.mxu0 %v62
    %225 = vmatmul.mubr.f32.gmra.mrb[0].mxu0 %v61
    %v226 = vpop.f32.mrb[0].mxu0
    %v227 = vadd.f32 %v118, %v226
    %v228 = vpop.f32.mrb[0].mxu0
    %229 = vmatprep.mubr.f32.mxu0 %v64
    %230 = vmatmul.mubr.f32.gmra.mrb[0].mxu0 %v63
    %v231 = vpop.f32.mrb[0].mxu0
    %v232 = vadd.f32 %v118, %v231
    %v233 = vpop.f32.mrb[0].mxu0
    %234 = vmatprep.mubr.f32.mxu0 %v66
    %235 = vmatmul.mubr.f32.gmra.mrb[0].mxu0 %v65
    %v236 = vpop.f32.mrb[0].mxu0
    %v237 = vadd.f32 %v118, %v236
    %v238 = vpop.f32.mrb[0].mxu0
    %239 = vmatprep.mubr.f32.mxu0 %v68
    %240 = vmatmul.mubr.f32.gmra.mrb[0].mxu0 %v67
    %v241 = vpop.f32.mrb[0].mxu0
    %v242 = vadd.f32 %v118, %v241
    %v243 = vpop.f32.mrb[0].mxu0
    %244 = vmatprep.mubr.f32.mxu0 %v70
    %245 = vmatmul.mubr.f32.gmra.mrb[0].mxu0 %v69
    %v246 = vpop.f32.mrb[0].mxu0
    %v247 = vadd.f32 %v118, %v246
    %v248 = vpop.f32.mrb[0].mxu0
    %249 = vmatprep.mubr.f32.mxu0 %v72
    %250 = vmatmul.mubr.f32.gmra.mrb[0].mxu0 %v71
    %v251 = vpop.f32.mrb[0].mxu0
    %v252 = vadd.f32 %v118, %v251
    %v253 = vpop.f32.mrb[0].mxu0
    %254 = vmatprep.mubr.f32.mxu0 %v74
    %255 = vmatmul.mubr.f32.gmra.mrb[0].mxu0 %v73
    %v256 = vpop.f32.mrb[0].mxu0
    %v257 = vadd.f32 %v118, %v256
    %v258 = vpop.f32.mrb[0].mxu0
    %259 = vmatprep.mubr.f32.mxu0 %v76
    %260 = vmatmul.mubr.f32.gmra.mrb[0].mxu0 %v75
    %v261 = vpop.f32.mrb[0].mxu0
    %v262 = vadd.f32 %v118, %v261
    %v263 = vpop.f32.mrb[0].mxu0
    %264 = vmatprep.mubr.f32.mxu0 %v78
    %265 = vmatmul.mubr.f32.gmra.mrb[0].mxu0 %v77
    %v266 = vpop.f32.mrb[0].mxu0
    %v267 = vadd.f32 %v118, %v266
    %v268 = vpop.f32.mrb[0].mxu0
    %269 = vmatprep.mubr.f32.mxu0 %v80
    %270 = vmatmul.mubr.f32.gmra.mrb[0].mxu0 %v79
    %v271 = vpop.f32.mrb[0].mxu0
    %v272 = vadd.f32 %v118, %v271
    %v273 = vpop.f32.mrb[0].mxu0
    %274 = vdwg.mxu0
    %v275 = vmax.f32 %v187, 0.0
    %v276 = vmax.f32 %v192, 0.0
    %v277 = vmax.f32 %v197, 0.0
    %v278 = vmax.f32 %v202, 0.0
    %v279 = vmax.f32 %v207, 0.0
    %v280 = vmax.f32 %v212, 0.0
    %v281 = vmax.f32 %v217, 0.0
    %v282 = vmax.f32 %v222, 0.0
    %v283 = vmax.f32 %v227, 0.0
    %v284 = vmax.f32 %v232, 0.0
    %v285 = vmax.f32 %v237, 0.0
    %v286 = vmax.f32 %v242, 0.0
    %v287 = vmax.f32 %v247, 0.0
    %v288 = vmax.f32 %v252, 0.0
    %v289 = vmax.f32 %v257, 0.0
    %v290 = vmax.f32 %v262, 0.0
    %v291 = vmax.f32 %v267, 0.0
    %v292 = vmax.f32 %v272, 0.0
    %v293 = vld [vmem:[%s3] sm:$0xff]
    %v294 = vld [vmem:[%s3 + $0x8] sm:$0xff]
    %v295 = vld [vmem:[%s3 + $0x10] sm:$0xff]
    %v296 = vld [vmem:[%s3 + $0x18] sm:$0xff]
    %v297 = vld [vmem:[%s3 + $0x20] sm:$0xff]
    %v298 = vld [vmem:[%s3 + $0x28] sm:$0xff]
    %v299 = vld [vmem:[%s3 + $0x30] sm:$0xff]
    %v300 = vld [vmem:[%s3 + $0x38] sm:$0xff]
    %v301 = vld [vmem:[%s3 + $0x40] sm:$0xff]
    %v302 = vld [vmem:[%s3 + $0x48] sm:$0xff]
    %v303 = vld [vmem:[%s3 + $0x50] sm:$0xff]
    %v304 = vld [vmem:[%s3 + $0x58] sm:$0xff]
    %v305 = vld [vmem:[%s3 + $0x60] sm:$0xff]
    %v306 = vld [vmem:[%s3 + $0x68] sm:$0xff]
    %v307 = vld [vmem:[%s3 + $0x70] sm:$0xff]
    %v308 = vld [vmem:[%s3 + $0x78] sm:$0xff]
    %v309 = vld [vmem:[%s3 + $0x80] sm:$0xff]
    %v310 = vld [vmem:[%s3 + $0x88] sm:$0xff]
    %v311 = vld [vmem:[%s3 + $0x90] sm:$0xff]
    %v312 = vld [vmem:[%s3 + $0x98] sm:$0xff]
    %v313 = vld [vmem:[%s3 + $0xa0] sm:$0xff]
    %v314 = vld [vmem:[%s3 + $0xa8] sm:$0xff]
    %v315 = vld [vmem:[%s3 + $0xb0] sm:$0xff]
    %v316 = vld [vmem:[%s3 + $0xb8] sm:$0xff]
    %v317 = vld [vmem:[%s3 + $0xc0] sm:$0xff]
    %v318 = vld [vmem:[%s3 + $0xc8] sm:$0xff]
    %v319 = vld [vmem:[%s3 + $0xd0] sm:$0xff]
    %v320 = vld [vmem:[%s3 + $0xd8] sm:$0xff]
    %v321 = vld [vmem:[%s3 + $0xe0] sm:$0xff]
    %v322 = vld [vmem:[%s3 + $0xe8] sm:$0xff]
    %v323 = vld [vmem:[%s3 + $0xf0] sm:$0xff]
    %v324 = vld [vmem:[%s3 + $0xf8] sm:$0xff]
    %v325 = vld [vmem:[%s3 + $0x100] sm:$0xff]
    %v326 = vld [vmem:[%s3 + $0x108] sm:$0xff]
    %v327 = vld [vmem:[%s3 + $0x110] sm:$0xff]
    %v328 = vld [vmem:[%s3 + $0x118] sm:$0xff]
    %v329 = vld [vmem:[%s3 + $0x120] sm:$0xff]
    %v330 = vld [vmem:[%s3 + $0x128] sm:$0xff]
    %v331 = vld [vmem:[%s3 + $0x130] sm:$0xff]
    %v332 = vld [vmem:[%s3 + $0x138] sm:$0xff]
    %v333 = vld [vmem:[%s3 + $0x140] sm:$0xff]
    %v334 = vld [vmem:[%s3 + $0x148] sm:$0xff]
    %v335 = vld [vmem:[%s3 + $0x150] sm:$0xff]
    %v336 = vld [vmem:[%s3 + $0x158] sm:$0xff]
    %v337 = vld [vmem:[%s3 + $0x160] sm:$0xff]
    %v338 = vld [vmem:[%s3 + $0x168] sm:$0xff]
    %v339 = vld [vmem:[%s3 + $0x170] sm:$0xff]
    %v340 = vld [vmem:[%s3 + $0x178] sm:$0xff]
    %v341 = vld [vmem:[%s3 + $0x180] sm:$0xff]
    %v342 = vld [vmem:[%s3 + $0x188] sm:$0xff]
    %v343 = vld [vmem:[%s3 + $0x190] sm:$0xff]
    %v344 = vld [vmem:[%s3 + $0x198] sm:$0xff]
    %v345 = vld [vmem:[%s3 + $0x1a0] sm:$0xff]
    %v346 = vld [vmem:[%s3 + $0x1a8] sm:$0xff]
    %v347 = vld [vmem:[%s3 + $0x1b0] sm:$0xff]
    %v348 = vld [vmem:[%s3 + $0x1b8] sm:$0xff]
    %v349 = vld [vmem:[%s3 + $0x1c0] sm:$0xff]
    %v350 = vld [vmem:[%s3 + $0x1c8] sm:$0xff]
    %v351 = vld [vmem:[%s3 + $0x1d0] sm:$0xff]
    %v352 = vld [vmem:[%s3 + $0x1d8] sm:$0xff]
    %v353 = vld [vmem:[%s3 + $0x1e0] sm:$0xff]
    %v354 = vld [vmem:[%s3 + $0x1e8] sm:$0xff]
    %v355 = vld [vmem:[%s3 + $0x1f0] sm:$0xff]
    %v356 = vld [vmem:[%s3 + $0x1f8] sm:$0xff]
    %v357 = vunpack.c.l.bf16 %v293
    %v358 = vunpack.c.h.bf16 %v293
    %v359 = vunpack.c.l.bf16 %v294
    %v360 = vunpack.c.h.bf16 %v294
    %v361 = vunpack.c.l.bf16 %v295
    %v362 = vunpack.c.h.bf16 %v295
    %v363 = vunpack.c.l.bf16 %v296
    %v364 = vunpack.c.h.bf16 %v296
    %v365 = vunpack.c.l.bf16 %v297
    %v366 = vunpack.c.h.bf16 %v297
    %v367 = vunpack.c.l.bf16 %v298
    %v368 = vunpack.c.h.bf16 %v298
    %v369 = vunpack.c.l.bf16 %v299
    %v370 = vunpack.c.h.bf16 %v299
    %v371 = vunpack.c.l.bf16 %v300
    %v372 = vunpack.c.h.bf16 %v300
    %v373 = vunpack.c.l.bf16 %v301
    %v374 = vunpack.c.h.bf16 %v301
    %v375 = vunpack.c.l.bf16 %v302
    %v376 = vunpack.c.h.bf16 %v302
    %v377 = vunpack.c.l.bf16 %v303
    %v378 = vunpack.c.h.bf16 %v303
    %v379 = vunpack.c.l.bf16 %v304
    %v380 = vunpack.c.h.bf16 %v304
    %v381 = vunpack.c.l.bf16 %v305
    %v382 = vunpack.c.h.bf16 %v305
    %v383 = vunpack.c.l.bf16 %v306
    %v384 = vunpack.c.h.bf16 %v306
    %v385 = vunpack.c.l.bf16 %v307
    %v386 = vunpack.c.h.bf16 %v307
    %v387 = vunpack.c.l.bf16 %v308
    %v388 = vunpack.c.h.bf16 %v308
    %v389 = vunpack.c.l.bf16 %v309
    %v390 = vunpack.c.h.bf16 %v309
    %v391 = vunpack.c.l.bf16 %v310
    %v392 = vunpack.c.h.bf16 %v310
    %v393 = vunpack.c.l.bf16 %v311
    %v394 = vunpack.c.h.bf16 %v311
    %v395 = vunpack.c.l.bf16 %v312
    %v396 = vunpack.c.h.bf16 %v312
    %v397 = vunpack.c.l.bf16 %v313
    %v398 = vunpack.c.h.bf16 %v313
    %v399 = vunpack.c.l.bf16 %v314
    %v400 = vunpack.c.h.bf16 %v314
    %v401 = vunpack.c.l.bf16 %v315
    %v402 = vunpack.c.h.bf16 %v315
    %v403 = vunpack.c.l.bf16 %v316
    %v404 = vunpack.c.h.bf16 %v316
    %v405 = vunpack.c.l.bf16 %v317
    %v406 = vunpack.c.h.bf16 %v317
    %v407 = vunpack.c.l.bf16 %v318
    %v408 = vunpack.c.h.bf16 %v318
    %v409 = vunpack.c.l.bf16 %v319
    %v410 = vunpack.c.h.bf16 %v319
    %v411 = vunpack.c.l.bf16 %v320
    %v412 = vunpack.c.h.bf16 %v320
    %v413 = vunpack.c.l.bf16 %v321
    %v414 = vunpack.c.h.bf16 %v321
    %v415 = vunpack.c.l.bf16 %v322
    %v416 = vunpack.c.h.bf16 %v322
    %v417 = vunpack.c.l.bf16 %v323
    %v418 = vunpack.c.h.bf16 %v323
    %v419 = vunpack.c.l.bf16 %v324
    %v420 = vunpack.c.h.bf16 %v324
    %v421 = vunpack.c.l.bf16 %v325
    %v422 = vunpack.c.h.bf16 %v325
    %v423 = vunpack.c.l.bf16 %v326
    %v424 = vunpack.c.h.bf16 %v326
    %v425 = vunpack.c.l.bf16 %v327
    %v426 = vunpack.c.h.bf16 %v327
    %v427 = vunpack.c.l.bf16 %v328
    %v428 = vunpack.c.h.bf16 %v328
    %v429 = vunpack.c.l.bf16 %v329
    %v430 = vunpack.c.h.bf16 %v329
    %v431 = vunpack.c.l.bf16 %v330
    %v432 = vunpack.c.h.bf16 %v330
    %v433 = vunpack.c.l.bf16 %v331
    %v434 = vunpack.c.h.bf16 %v331
    %v435 = vunpack.c.l.bf16 %v332
    %v436 = vunpack.c.h.bf16 %v332
    %v437 = vunpack.c.l.bf16 %v333
    %v438 = vunpack.c.h.bf16 %v333
    %v439 = vunpack.c.l.bf16 %v334
    %v440 = vunpack.c.h.bf16 %v334
    %v441 = vunpack.c.l.bf16 %v335
    %v442 = vunpack.c.h.bf16 %v335
    %v443 = vunpack.c.l.bf16 %v336
    %v444 = vunpack.c.h.bf16 %v336
    %v445 = vunpack.c.l.bf16 %v337
    %v446 = vunpack.c.h.bf16 %v337
    %v447 = vunpack.c.l.bf16 %v338
    %v448 = vunpack.c.h.bf16 %v338
    %v449 = vunpack.c.l.bf16 %v339
    %v450 = vunpack.c.h.bf16 %v339
    %v451 = vunpack.c.l.bf16 %v340
    %v452 = vunpack.c.h.bf16 %v340
    %v453 = vunpack.c.l.bf16 %v341
    %v454 = vunpack.c.h.bf16 %v341
    %v455 = vunpack.c.l.bf16 %v342
    %v456 = vunpack.c.h.bf16 %v342
    %v457 = vunpack.c.l.bf16 %v343
    %v458 = vunpack.c.h.bf16 %v343
    %v459 = vunpack.c.l.bf16 %v344
    %v460 = vunpack.c.h.bf16 %v344
    %v461 = vunpack.c.l.bf16 %v345
    %v462 = vunpack.c.h.bf16 %v345
    %v463 = vunpack.c.l.bf16 %v346
    %v464 = vunpack.c.h.bf16 %v346
    %v465 = vunpack.c.l.bf16 %v347
    %v466 = vunpack.c.h.bf16 %v347
    %v467 = vunpack.c.l.bf16 %v348
    %v468 = vunpack.c.h.bf16 %v348
    %v469 = vunpack.c.l.bf16 %v349
    %v470 = vunpack.c.h.bf16 %v349
    %v471 = vunpack.c.l.bf16 %v350
    %v472 = vunpack.c.h.bf16 %v350
    %v473 = vunpack.c.l.bf16 %v351
    %v474 = vunpack.c.h.bf16 %v351
    %v475 = vunpack.c.l.bf16 %v352
    %v476 = vunpack.c.h.bf16 %v352
    %v477 = vunpack.c.l.bf16 %v353
    %v478 = vunpack.c.h.bf16 %v353
    %v479 = vunpack.c.l.bf16 %v354
    %v480 = vunpack.c.h.bf16 %v354
    %v481 = vunpack.c.l.bf16 %v355
    %v482 = vunpack.c.h.bf16 %v355
    %v483 = vunpack.c.l.bf16 %v356
    %v484 = vunpack.c.h.bf16 %v356
    %vm485 = vcmask 130048
    %v487 = vsel %vm485, %v358, 0
    %v490 = vsel %vm485, %v360, 0
    %v493 = vsel %vm485, %v362, 0
    %v496 = vsel %vm485, %v364, 0
    %v499 = vsel %vm485, %v366, 0
    %v502 = vsel %vm485, %v368, 0
    %v505 = vsel %vm485, %v370, 0
    %v508 = vsel %vm485, %v372, 0
    %v511 = vsel %vm485, %v374, 0
    %v514 = vsel %vm485, %v376, 0
    %v517 = vsel %vm485, %v378, 0
    %v520 = vsel %vm485, %v380, 0
    %v523 = vsel %vm485, %v382, 0
    %v526 = vsel %vm485, %v384, 0
    %v529 = vsel %vm485, %v386, 0
    %v532 = vsel %vm485, %v388, 0
    %v535 = vsel %vm485, %v390, 0
    %v538 = vsel %vm485, %v392, 0
    %v541 = vsel %vm485, %v394, 0
    %v544 = vsel %vm485, %v396, 0
    %v547 = vsel %vm485, %v398, 0
    %v550 = vsel %vm485, %v400, 0
    %v553 = vsel %vm485, %v402, 0
    %v556 = vsel %vm485, %v404, 0
    %v559 = vsel %vm485, %v406, 0
    %v562 = vsel %vm485, %v408, 0
    %v565 = vsel %vm485, %v410, 0
    %v568 = vsel %vm485, %v412, 0
    %v571 = vsel %vm485, %v414, 0
    %v574 = vsel %vm485, %v416, 0
    %v577 = vsel %vm485, %v418, 0
    %v580 = vsel %vm485, %v420, 0
    %v583 = vsel %vm485, %v422, 0
    %v586 = vsel %vm485, %v424, 0
    %v589 = vsel %vm485, %v426, 0
    %v592 = vsel %vm485, %v428, 0
    %v595 = vsel %vm485, %v430, 0
    %v598 = vsel %vm485, %v432, 0
    %v601 = vsel %vm485, %v434, 0
    %v604 = vsel %vm485, %v436, 0
    %v607 = vsel %vm485, %v438, 0
    %v610 = vsel %vm485, %v440, 0
    %v613 = vsel %vm485, %v442, 0
    %v616 = vsel %vm485, %v444, 0
    %v619 = vsel %vm485, %v446, 0
    %v622 = vsel %vm485, %v448, 0
    %v625 = vsel %vm485, %v450, 0
    %v628 = vsel %vm485, %v452, 0
    %v631 = vsel %vm485, %v454, 0
    %v634 = vsel %vm485, %v456, 0
    %v637 = vsel %vm485, %v458, 0
    %v640 = vsel %vm485, %v460, 0
    %v643 = vsel %vm485, %v462, 0
    %v646 = vsel %vm485, %v464, 0
    %v649 = vsel %vm485, %v466, 0
    %v652 = vsel %vm485, %v468, 0
    %v655 = vsel %vm485, %v470, 0
    %v658 = vsel %vm485, %v472, 0
    %v661 = vsel %vm485, %v474, 0
    %v664 = vsel %vm485, %v476, 0
    %v667 = vsel %vm485, %v478, 0
    %v670 = vsel %vm485, %v480, 0
    %v673 = vsel %vm485, %v482, 0
    %v676 = vsel %vm485, %v484, 0
    %678 = vmatprep.subr.mxu0 0.0
    %679 = vmatpush1.msra.mxu0 %v275
    %680 = vmatprep.subr.mxu0 0.0
    %681 = vmatpush1.msra.mxu0 %v276
    %682 = vmatprep.subr.mxu0 0.0
    %683 = vmatpush1.msra.mxu0 %v277
    %684 = vmatprep.subr.mxu0 0.0
    %685 = vmatpush1.msra.mxu0 %v278
    %686 = vmatprep.subr.mxu0 0.0
    %687 = vmatpush1.msra.mxu0 %v279
    %688 = vmatprep.subr.mxu0 0.0
    %689 = vmatpush1.msra.mxu0 %v280
    %690 = vmatprep.subr.mxu0 0.0
    %691 = vmatpush1.msra.mxu0 %v281
    %692 = vmatprep.subr.mxu0 0.0
    %693 = vmatpush1.msra.mxu0 %v282
    %694 = vmatprep.subr.mxu0 0.0
    %695 = vmatpush1.msra.mxu0 %v283
    %696 = vmatprep.subr.mxu0 0.0
    %697 = vmatpush1.msra.mxu0 %v284
    %698 = vmatprep.subr.mxu0 0.0
    %699 = vmatpush1.msra.mxu0 %v285
    %700 = vmatprep.subr.mxu0 0.0
    %701 = vmatpush1.msra.mxu0 %v286
    %702 = vmatprep.subr.mxu0 0.0
    %703 = vmatpush1.msra.mxu0 %v287
    %704 = vmatprep.subr.mxu0 0.0
    %705 = vmatpush1.msra.mxu0 %v288
    %706 = vmatprep.subr.mxu0 0.0
    %707 = vmatpush1.msra.mxu0 %v289
    %708 = vmatprep.subr.mxu0 0.0
    %709 = vmatpush1.msra.mxu0 %v290
    %710 = vmatprep.subr.mxu0 0.0
    %711 = vmatpush1.msra.mxu0 %v291
    %712 = vmatprep.subr.mxu0 0.0
    %713 = vmatpush1.msra.mxu0 %v292
    %714 = vmatprep.subr.mxu0 0.0
    %715 = vmatpush1.msra.mxu0 0.0
    %716 = vmatprep.subr.mxu0 0.0
    %717 = vmatpush1.msra.mxu0 0.0
    %718 = vmatprep.subr.mxu0 0.0
    %719 = vmatpush1.msra.mxu0 0.0
    %720 = vmatprep.subr.mxu0 0.0
    %721 = vmatpush1.msra.mxu0 0.0
    %722 = vmatprep.subr.mxu0 0.0
    %723 = vmatpush1.msra.mxu0 0.0
    %724 = vmatprep.subr.mxu0 0.0
    %725 = vmatpush1.msra.mxu0 0.0
    %726 = vmatprep.subr.mxu0 0.0
    %727 = vmatpush1.msra.mxu0 0.0
    %728 = vmatprep.subr.mxu0 0.0
    %729 = vmatpush1.msra.mxu0 0.0
    %730 = vmatprep.subr.mxu0 0.0
    %731 = vmatpush1.msra.mxu0 0.0
    %732 = vmatprep.subr.mxu0 0.0
    %733 = vmatpush1.msra.mxu0 0.0
    %734 = vmatprep.subr.mxu0 0.0
    %735 = vmatpush1.msra.mxu0 0.0
    %736 = vmatprep.subr.mxu0 0.0
    %737 = vmatpush1.msra.mxu0 0.0
    %738 = vmatprep.subr.mxu0 0.0
    %739 = vmatpush1.msra.mxu0 0.0
    %740 = vmatprep.subr.mxu0 0.0
    %741 = vmatpush1.msra.mxu0 0.0
    %742 = vmatprep.mubr.f32.mxu0 %v487
    %743 = vmatmul.mubr.f32.gmra.mrb[0].mxu0 %v357
    %v744 = vpop.f32.mrb[0].mxu0
    %v745 = vadd.f32 0.0, %v744
    %v746 = vpop.f32.mrb[0].mxu0
    %747 = vmatprep.mubr.f32.mxu0 %v490
    %748 = vmatmul.mubr.f32.gmra.mrb[0].mxu0 %v359
    %v749 = vpop.f32.mrb[0].mxu0
    %v750 = vadd.f32 0.0, %v749
    %v751 = vpop.f32.mrb[0].mxu0
    %752 = vmatprep.mubr.f32.mxu0 %v493
    %753 = vmatmul.mubr.f32.gmra.mrb[0].mxu0 %v361
    %v754 = vpop.f32.mrb[0].mxu0
    %v755 = vadd.f32 0.0, %v754
    %v756 = vpop.f32.mrb[0].mxu0
    %757 = vmatprep.mubr.f32.mxu0 %v496
    %758 = vmatmul.mubr.f32.gmra.mrb[0].mxu0 %v363
    %v759 = vpop.f32.mrb[0].mxu0
    %v760 = vadd.f32 0.0, %v759
    %v761 = vpop.f32.mrb[0].mxu0
    %762 = vmatprep.mubr.f32.mxu0 %v499
    %763 = vmatmul.mubr.f32.gmra.mrb[0].mxu0 %v365
    %v764 = vpop.f32.mrb[0].mxu0
    %v765 = vadd.f32 0.0, %v764
    %v766 = vpop.f32.mrb[0].mxu0
    %767 = vmatprep.mubr.f32.mxu0 %v502
    %768 = vmatmul.mubr.f32.gmra.mrb[0].mxu0 %v367
    %v769 = vpop.f32.mrb[0].mxu0
    %v770 = vadd.f32 0.0, %v769
    %v771 = vpop.f32.mrb[0].mxu0
    %772 = vmatprep.mubr.f32.mxu0 %v505
    %773 = vmatmul.mubr.f32.gmra.mrb[0].mxu0 %v369
    %v774 = vpop.f32.mrb[0].mxu0
    %v775 = vadd.f32 0.0, %v774
    %v776 = vpop.f32.mrb[0].mxu0
    %777 = vmatprep.mubr.f32.mxu0 %v508
    %778 = vmatmul.mubr.f32.gmra.mrb[0].mxu0 %v371
    %v779 = vpop.f32.mrb[0].mxu0
    %v780 = vadd.f32 0.0, %v779
    %v781 = vpop.f32.mrb[0].mxu0
    %782 = vmatprep.mubr.f32.mxu0 %v511
    %783 = vmatmul.mubr.f32.gmra.mrb[0].mxu0 %v373
    %v784 = vpop.f32.mrb[0].mxu0
    %v785 = vadd.f32 0.0, %v784
    %v786 = vpop.f32.mrb[0].mxu0
    %787 = vmatprep.mubr.f32.mxu0 %v514
    %788 = vmatmul.mubr.f32.gmra.mrb[0].mxu0 %v375
    %v789 = vpop.f32.mrb[0].mxu0
    %v790 = vadd.f32 0.0, %v789
    %v791 = vpop.f32.mrb[0].mxu0
    %792 = vmatprep.mubr.f32.mxu0 %v517
    %793 = vmatmul.mubr.f32.gmra.mrb[0].mxu0 %v377
    %v794 = vpop.f32.mrb[0].mxu0
    %v795 = vadd.f32 0.0, %v794
    %v796 = vpop.f32.mrb[0].mxu0
    %797 = vmatprep.mubr.f32.mxu0 %v520
    %798 = vmatmul.mubr.f32.gmra.mrb[0].mxu0 %v379
    %v799 = vpop.f32.mrb[0].mxu0
    %v800 = vadd.f32 0.0, %v799
    %v801 = vpop.f32.mrb[0].mxu0
    %802 = vmatprep.mubr.f32.mxu0 %v523
    %803 = vmatmul.mubr.f32.gmra.mrb[0].mxu0 %v381
    %v804 = vpop.f32.mrb[0].mxu0
    %v805 = vadd.f32 0.0, %v804
    %v806 = vpop.f32.mrb[0].mxu0
    %807 = vmatprep.mubr.f32.mxu0 %v526
    %808 = vmatmul.mubr.f32.gmra.mrb[0].mxu0 %v383
    %v809 = vpop.f32.mrb[0].mxu0
    %v810 = vadd.f32 0.0, %v809
    %v811 = vpop.f32.mrb[0].mxu0
    %812 = vmatprep.mubr.f32.mxu0 %v529
    %813 = vmatmul.mubr.f32.gmra.mrb[0].mxu0 %v385
    %v814 = vpop.f32.mrb[0].mxu0
    %v815 = vadd.f32 0.0, %v814
    %v816 = vpop.f32.mrb[0].mxu0
    %817 = vmatprep.mubr.f32.mxu0 %v532
    %818 = vmatmul.mubr.f32.gmra.mrb[0].mxu0 %v387
    %v819 = vpop.f32.mrb[0].mxu0
    %v820 = vadd.f32 0.0, %v819
    %v821 = vpop.f32.mrb[0].mxu0
    %822 = vmatprep.mubr.f32.mxu0 %v535
    %823 = vmatmul.mubr.f32.gmra.mrb[0].mxu0 %v389
    %v824 = vpop.f32.mrb[0].mxu0
    %v825 = vadd.f32 0.0, %v824
    %v826 = vpop.f32.mrb[0].mxu0
    %827 = vmatprep.mubr.f32.mxu0 %v538
    %828 = vmatmul.mubr.f32.gmra.mrb[0].mxu0 %v391
    %v829 = vpop.f32.mrb[0].mxu0
    %v830 = vadd.f32 0.0, %v829
    %v831 = vpop.f32.mrb[0].mxu0
    %832 = vmatprep.mubr.f32.mxu0 %v541
    %833 = vmatmul.mubr.f32.gmra.mrb[0].mxu0 %v393
    %v834 = vpop.f32.mrb[0].mxu0
    %v835 = vadd.f32 0.0, %v834
    %v836 = vpop.f32.mrb[0].mxu0
    %837 = vmatprep.mubr.f32.mxu0 %v544
    %838 = vmatmul.mubr.f32.gmra.mrb[0].mxu0 %v395
    %v839 = vpop.f32.mrb[0].mxu0
    %v840 = vadd.f32 0.0, %v839
    %v841 = vpop.f32.mrb[0].mxu0
    %842 = vmatprep.mubr.f32.mxu0 %v547
    %843 = vmatmul.mubr.f32.gmra.mrb[0].mxu0 %v397
    %v844 = vpop.f32.mrb[0].mxu0
    %v845 = vadd.f32 0.0, %v844
    %v846 = vpop.f32.mrb[0].mxu0
    %847 = vmatprep.mubr.f32.mxu0 %v550
    %848 = vmatmul.mubr.f32.gmra.mrb[0].mxu0 %v399
    %v849 = vpop.f32.mrb[0].mxu0
    %v850 = vadd.f32 0.0, %v849
    %v851 = vpop.f32.mrb[0].mxu0
    %852 = vmatprep.mubr.f32.mxu0 %v553
    %853 = vmatmul.mubr.f32.gmra.mrb[0].mxu0 %v401
    %v854 = vpop.f32.mrb[0].mxu0
    %v855 = vadd.f32 0.0, %v854
    %v856 = vpop.f32.mrb[0].mxu0
    %857 = vmatprep.mubr.f32.mxu0 %v556
    %858 = vmatmul.mubr.f32.gmra.mrb[0].mxu0 %v403
    %v859 = vpop.f32.mrb[0].mxu0
    %v860 = vadd.f32 0.0, %v859
    %v861 = vpop.f32.mrb[0].mxu0
    %862 = vmatprep.mubr.f32.mxu0 %v559
    %863 = vmatmul.mubr.f32.gmra.mrb[0].mxu0 %v405
    %v864 = vpop.f32.mrb[0].mxu0
    %v865 = vadd.f32 0.0, %v864
    %v866 = vpop.f32.mrb[0].mxu0
    %867 = vmatprep.mubr.f32.mxu0 %v562
    %868 = vmatmul.mubr.f32.gmra.mrb[0].mxu0 %v407
    %v869 = vpop.f32.mrb[0].mxu0
    %v870 = vadd.f32 0.0, %v869
    %v871 = vpop.f32.mrb[0].mxu0
    %872 = vmatprep.mubr.f32.mxu0 %v565
    %873 = vmatmul.mubr.f32.gmra.mrb[0].mxu0 %v409
    %v874 = vpop.f32.mrb[0].mxu0
    %v875 = vadd.f32 0.0, %v874
    %v876 = vpop.f32.mrb[0].mxu0
    %877 = vmatprep.mubr.f32.mxu0 %v568
    %878 = vmatmul.mubr.f32.gmra.mrb[0].mxu0 %v411
    %v879 = vpop.f32.mrb[0].mxu0
    %v880 = vadd.f32 0.0, %v879
    %v881 = vpop.f32.mrb[0].mxu0
    %882 = vmatprep.mubr.f32.mxu0 %v571
    %883 = vmatmul.mubr.f32.gmra.mrb[0].mxu0 %v413
    %v884 = vpop.f32.mrb[0].mxu0
    %v885 = vadd.f32 0.0, %v884
    %v886 = vpop.f32.mrb[0].mxu0
    %887 = vmatprep.mubr.f32.mxu0 %v574
    %888 = vmatmul.mubr.f32.gmra.mrb[0].mxu0 %v415
    %v889 = vpop.f32.mrb[0].mxu0
    %v890 = vadd.f32 0.0, %v889
    %v891 = vpop.f32.mrb[0].mxu0
    %892 = vmatprep.mubr.f32.mxu0 %v577
    %893 = vmatmul.mubr.f32.gmra.mrb[0].mxu0 %v417
    %v894 = vpop.f32.mrb[0].mxu0
    %v895 = vadd.f32 0.0, %v894
    %v896 = vpop.f32.mrb[0].mxu0
    %897 = vmatprep.mubr.f32.mxu0 %v580
    %898 = vmatmul.mubr.f32.gmra.mrb[0].mxu0 %v419
    %v899 = vpop.f32.mrb[0].mxu0
    %v900 = vadd.f32 0.0, %v899
    %v901 = vpop.f32.mrb[0].mxu0
    %902 = vmatprep.mubr.f32.mxu0 %v583
    %903 = vmatmul.mubr.f32.gmra.mrb[0].mxu0 %v421
    %v904 = vpop.f32.mrb[0].mxu0
    %v905 = vadd.f32 0.0, %v904
    %v906 = vpop.f32.mrb[0].mxu0
    %907 = vmatprep.mubr.f32.mxu0 %v586
    %908 = vmatmul.mubr.f32.gmra.mrb[0].mxu0 %v423
    %v909 = vpop.f32.mrb[0].mxu0
    %v910 = vadd.f32 0.0, %v909
    %v911 = vpop.f32.mrb[0].mxu0
    %912 = vmatprep.mubr.f32.mxu0 %v589
    %913 = vmatmul.mubr.f32.gmra.mrb[0].mxu0 %v425
    %v914 = vpop.f32.mrb[0].mxu0
    %v915 = vadd.f32 0.0, %v914
    %v916 = vpop.f32.mrb[0].mxu0
    %917 = vmatprep.mubr.f32.mxu0 %v592
    %918 = vmatmul.mubr.f32.gmra.mrb[0].mxu0 %v427
    %v919 = vpop.f32.mrb[0].mxu0
    %v920 = vadd.f32 0.0, %v919
    %v921 = vpop.f32.mrb[0].mxu0
    %922 = vmatprep.mubr.f32.mxu0 %v595
    %923 = vmatmul.mubr.f32.gmra.mrb[0].mxu0 %v429
    %v924 = vpop.f32.mrb[0].mxu0
    %v925 = vadd.f32 0.0, %v924
    %v926 = vpop.f32.mrb[0].mxu0
    %927 = vmatprep.mubr.f32.mxu0 %v598
    %928 = vmatmul.mubr.f32.gmra.mrb[0].mxu0 %v431
    %v929 = vpop.f32.mrb[0].mxu0
    %v930 = vadd.f32 0.0, %v929
    %v931 = vpop.f32.mrb[0].mxu0
    %932 = vmatprep.mubr.f32.mxu0 %v601
    %933 = vmatmul.mubr.f32.gmra.mrb[0].mxu0 %v433
    %v934 = vpop.f32.mrb[0].mxu0
    %v935 = vadd.f32 0.0, %v934
    %v936 = vpop.f32.mrb[0].mxu0
    %937 = vmatprep.mubr.f32.mxu0 %v604
    %938 = vmatmul.mubr.f32.gmra.mrb[0].mxu0 %v435
    %v939 = vpop.f32.mrb[0].mxu0
    %v940 = vadd.f32 0.0, %v939
    %v941 = vpop.f32.mrb[0].mxu0
    %942 = vmatprep.mubr.f32.mxu0 %v607
    %943 = vmatmul.mubr.f32.gmra.mrb[0].mxu0 %v437
    %v944 = vpop.f32.mrb[0].mxu0
    %v945 = vadd.f32 0.0, %v944
    %v946 = vpop.f32.mrb[0].mxu0
    %947 = vmatprep.mubr.f32.mxu0 %v610
    %948 = vmatmul.mubr.f32.gmra.mrb[0].mxu0 %v439
    %v949 = vpop.f32.mrb[0].mxu0
    %v950 = vadd.f32 0.0, %v949
    %v951 = vpop.f32.mrb[0].mxu0
    %952 = vmatprep.mubr.f32.mxu0 %v613
    %953 = vmatmul.mubr.f32.gmra.mrb[0].mxu0 %v441
    %v954 = vpop.f32.mrb[0].mxu0
    %v955 = vadd.f32 0.0, %v954
    %v956 = vpop.f32.mrb[0].mxu0
    %957 = vmatprep.mubr.f32.mxu0 %v616
    %958 = vmatmul.mubr.f32.gmra.mrb[0].mxu0 %v443
    %v959 = vpop.f32.mrb[0].mxu0
    %v960 = vadd.f32 0.0, %v959
    %v961 = vpop.f32.mrb[0].mxu0
    %962 = vmatprep.mubr.f32.mxu0 %v619
    %963 = vmatmul.mubr.f32.gmra.mrb[0].mxu0 %v445
    %v964 = vpop.f32.mrb[0].mxu0
    %v965 = vadd.f32 0.0, %v964
    %v966 = vpop.f32.mrb[0].mxu0
    %967 = vmatprep.mubr.f32.mxu0 %v622
    %968 = vmatmul.mubr.f32.gmra.mrb[0].mxu0 %v447
    %v969 = vpop.f32.mrb[0].mxu0
    %v970 = vadd.f32 0.0, %v969
    %v971 = vpop.f32.mrb[0].mxu0
    %972 = vmatprep.mubr.f32.mxu0 %v625
    %973 = vmatmul.mubr.f32.gmra.mrb[0].mxu0 %v449
    %v974 = vpop.f32.mrb[0].mxu0
    %v975 = vadd.f32 0.0, %v974
    %v976 = vpop.f32.mrb[0].mxu0
    %977 = vmatprep.mubr.f32.mxu0 %v628
    %978 = vmatmul.mubr.f32.gmra.mrb[0].mxu0 %v451
    %v979 = vpop.f32.mrb[0].mxu0
    %v980 = vadd.f32 0.0, %v979
    %v981 = vpop.f32.mrb[0].mxu0
    %982 = vmatprep.mubr.f32.mxu0 %v631
    %983 = vmatmul.mubr.f32.gmra.mrb[0].mxu0 %v453
    %v984 = vpop.f32.mrb[0].mxu0
    %v985 = vadd.f32 0.0, %v984
    %v986 = vpop.f32.mrb[0].mxu0
    %987 = vmatprep.mubr.f32.mxu0 %v634
    %988 = vmatmul.mubr.f32.gmra.mrb[0].mxu0 %v455
    %v989 = vpop.f32.mrb[0].mxu0
    %v990 = vadd.f32 0.0, %v989
    %v991 = vpop.f32.mrb[0].mxu0
    %992 = vmatprep.mubr.f32.mxu0 %v637
    %993 = vmatmul.mubr.f32.gmra.mrb[0].mxu0 %v457
    %v994 = vpop.f32.mrb[0].mxu0
    %v995 = vadd.f32 0.0, %v994
    %v996 = vpop.f32.mrb[0].mxu0
    %997 = vmatprep.mubr.f32.mxu0 %v640
    %998 = vmatmul.mubr.f32.gmra.mrb[0].mxu0 %v459
    %v999 = vpop.f32.mrb[0].mxu0
    %v1000 = vadd.f32 0.0, %v999
    %v1001 = vpop.f32.mrb[0].mxu0
    %1002 = vmatprep.mubr.f32.mxu0 %v643
    %1003 = vmatmul.mubr.f32.gmra.mrb[0].mxu0 %v461
    %v1004 = vpop.f32.mrb[0].mxu0
    %v1005 = vadd.f32 0.0, %v1004
    %v1006 = vpop.f32.mrb[0].mxu0
    %1007 = vmatprep.mubr.f32.mxu0 %v646
    %1008 = vmatmul.mubr.f32.gmra.mrb[0].mxu0 %v463
    %v1009 = vpop.f32.mrb[0].mxu0
    %v1010 = vadd.f32 0.0, %v1009
    %v1011 = vpop.f32.mrb[0].mxu0
    %1012 = vmatprep.mubr.f32.mxu0 %v649
    %1013 = vmatmul.mubr.f32.gmra.mrb[0].mxu0 %v465
    %v1014 = vpop.f32.mrb[0].mxu0
    %v1015 = vadd.f32 0.0, %v1014
    %v1016 = vpop.f32.mrb[0].mxu0
    %1017 = vmatprep.mubr.f32.mxu0 %v652
    %1018 = vmatmul.mubr.f32.gmra.mrb[0].mxu0 %v467
    %v1019 = vpop.f32.mrb[0].mxu0
    %v1020 = vadd.f32 0.0, %v1019
    %v1021 = vpop.f32.mrb[0].mxu0
    %1022 = vmatprep.mubr.f32.mxu0 %v655
    %1023 = vmatmul.mubr.f32.gmra.mrb[0].mxu0 %v469
    %v1024 = vpop.f32.mrb[0].mxu0
    %v1025 = vadd.f32 0.0, %v1024
    %v1026 = vpop.f32.mrb[0].mxu0
    %1027 = vmatprep.mubr.f32.mxu0 %v658
    %1028 = vmatmul.mubr.f32.gmra.mrb[0].mxu0 %v471
    %v1029 = vpop.f32.mrb[0].mxu0
    %v1030 = vadd.f32 0.0, %v1029
    %v1031 = vpop.f32.mrb[0].mxu0
    %1032 = vmatprep.mubr.f32.mxu0 %v661
    %1033 = vmatmul.mubr.f32.gmra.mrb[0].mxu0 %v473
    %v1034 = vpop.f32.mrb[0].mxu0
    %v1035 = vadd.f32 0.0, %v1034
    %v1036 = vpop.f32.mrb[0].mxu0
    %1037 = vmatprep.mubr.f32.mxu0 %v664
    %1038 = vmatmul.mubr.f32.gmra.mrb[0].mxu0 %v475
    %v1039 = vpop.f32.mrb[0].mxu0
    %v1040 = vadd.f32 0.0, %v1039
    %v1041 = vpop.f32.mrb[0].mxu0
    %1042 = vmatprep.mubr.f32.mxu0 %v667
    %1043 = vmatmul.mubr.f32.gmra.mrb[0].mxu0 %v477
    %v1044 = vpop.f32.mrb[0].mxu0
    %v1045 = vadd.f32 0.0, %v1044
    %v1046 = vpop.f32.mrb[0].mxu0
    %1047 = vmatprep.mubr.f32.mxu0 %v670
    %1048 = vmatmul.mubr.f32.gmra.mrb[0].mxu0 %v479
    %v1049 = vpop.f32.mrb[0].mxu0
    %v1050 = vadd.f32 0.0, %v1049
    %v1051 = vpop.f32.mrb[0].mxu0
    %1052 = vmatprep.mubr.f32.mxu0 %v673
    %1053 = vmatmul.mubr.f32.gmra.mrb[0].mxu0 %v481
    %v1054 = vpop.f32.mrb[0].mxu0
    %v1055 = vadd.f32 0.0, %v1054
    %v1056 = vpop.f32.mrb[0].mxu0
    %1057 = vmatprep.mubr.f32.mxu0 %v676
    %1058 = vmatmul.mubr.f32.gmra.mrb[0].mxu0 %v483
    %v1059 = vpop.f32.mrb[0].mxu0
    %v1060 = vadd.f32 0.0, %v1059
    %v1061 = vpop.f32.mrb[0].mxu0
    %1062 = vdwg.mxu0
    %v1063 = vld [vmem:[%s4] sm:$0xff]
    %v1064 = vld [vmem:[%s4 + $0x8] sm:$0xff]
    %v1065 = vld [vmem:[%s4 + $0x10] sm:$0xff]
    %v1066 = vld [vmem:[%s4 + $0x18] sm:$0xff]
    %s1067 = scalar_lea.vmem %s4, 32
    %v1068 = vld [vmem:[%s1067] sm:$0xff]
    %v1069 = vld [vmem:[%s1067 + $0x8] sm:$0xff]
    %v1070 = vld [vmem:[%s1067 + $0x10] sm:$0xff]
    %v1071 = vld [vmem:[%s1067 + $0x18] sm:$0xff]
    %vm1072 = vcmask 261120
    %v1074 = vsel %vm1072, %v765, 0
    %v1077 = vsel %vm1072, %v770, 0
    %v1080 = vsel %vm1072, %v775, 0
    %v1083 = vsel %vm1072, %v780, 0
    %1085 = vmatprep.subr.mxu0 0.0
    %1086 = vmatpush1.msra.mxu0 %v1068
    %1087 = vmatprep.subr.mxu0 0.0
    %1088 = vmatpush1.msra.mxu0 %v1069
    %1089 = vmatprep.subr.mxu0 0.0
    %1090 = vmatpush1.msra.mxu0 %v1070
    %1091 = vmatprep.subr.mxu0 0.0
    %1092 = vmatpush1.msra.mxu0 %v1071
    %1093 = vmatprep.subr.mxu0 0.0
    %1094 = vmatpush1.msra.mxu0 0.0
    %1095 = vmatprep.subr.mxu0 0.0
    %1096 = vmatpush1.msra.mxu0 0.0
    %1097 = vmatprep.subr.mxu0 0.0
    %1098 = vmatpush1.msra.mxu0 0.0
    %1099 = vmatprep.subr.mxu0 0.0
    %1100 = vmatpush1.msra.mxu0 0.0
    %1101 = vmatprep.subr.mxu0 0.0
    %1102 = vmatpush1.msra.mxu0 0.0
    %1103 = vmatprep.subr.mxu0 0.0
    %1104 = vmatpush1.msra.mxu0 0.0
    %1105 = vmatprep.subr.mxu0 0.0
    %1106 = vmatpush1.msra.mxu0 0.0
    %1107 = vmatprep.subr.mxu0 0.0
    %1108 = vmatpush1.msra.mxu0 0.0
    %1109 = vmatprep.subr.mxu0 0.0
    %1110 = vmatpush1.msra.mxu0 0.0
    %1111 = vmatprep.subr.mxu0 0.0
    %1112 = vmatpush1.msra.mxu0 0.0
    %1113 = vmatprep.subr.mxu0 0.0
    %1114 = vmatpush1.msra.mxu0 0.0
    %1115 = vmatprep.subr.mxu0 0.0
    %1116 = vmatpush1.msra.mxu0 0.0
    %1117 = vmatprep.subr.mxu0 0.0
    %1118 = vmatpush1.msra.mxu0 0.0
    %1119 = vmatprep.subr.mxu0 0.0
    %1120 = vmatpush1.msra.mxu0 0.0
    %1121 = vmatprep.subr.mxu0 0.0
    %1122 = vmatpush1.msra.mxu0 0.0
    %1123 = vmatprep.subr.mxu0 0.0
    %1124 = vmatpush1.msra.mxu0 0.0
    %1125 = vmatprep.subr.mxu0 0.0
    %1126 = vmatpush1.msra.mxu0 0.0
    %1127 = vmatprep.subr.mxu0 0.0
    %1128 = vmatpush1.msra.mxu0 0.0
    %1129 = vmatprep.subr.mxu0 0.0
    %1130 = vmatpush1.msra.mxu0 0.0
    %1131 = vmatprep.subr.mxu0 0.0
    %1132 = vmatpush1.msra.mxu0 0.0
    %1133 = vmatprep.subr.mxu0 0.0
    %1134 = vmatpush1.msra.mxu0 0.0
    %1135 = vmatprep.subr.mxu0 0.0
    %1136 = vmatpush1.msra.mxu0 0.0
    %1137 = vmatprep.subr.mxu0 0.0
    %1138 = vmatpush1.msra.mxu0 0.0
    %1139 = vmatprep.subr.mxu0 0.0
    %1140 = vmatpush1.msra.mxu0 0.0
    %1141 = vmatprep.subr.mxu0 0.0
    %1142 = vmatpush1.msra.mxu0 0.0
    %1143 = vmatprep.subr.mxu0 0.0
    %1144 = vmatpush1.msra.mxu0 0.0
    %1145 = vmatprep.subr.mxu0 0.0
    %1146 = vmatpush1.msra.mxu0 0.0
    %1147 = vmatprep.subr.mxu0 0.0
    %1148 = vmatpush1.msra.mxu0 0.0
    %1149 = vmatprep.mubr.f32.mxu0 0.0
    %1150 = vmatmul.mubr.f32.gmra.mrb[0].mxu0 %v1074
    %v1151 = vpop.f32.mrb[0].mxu0
    %v1152 = vadd.f32 0.0, %v1151
    %v1153 = vpop.f32.mrb[0].mxu0
    %1154 = vmatprep.mubr.f32.mxu0 0.0
    %1155 = vmatmul.mubr.f32.gmra.mrb[0].mxu0 %v1077
    %v1156 = vpop.f32.mrb[0].mxu0
    %v1157 = vadd.f32 0.0, %v1156
    %v1158 = vpop.f32.mrb[0].mxu0
    %1159 = vmatprep.mubr.f32.mxu0 0.0
    %1160 = vmatmul.mubr.f32.gmra.mrb[0].mxu0 %v1080
    %v1161 = vpop.f32.mrb[0].mxu0
    %v1162 = vadd.f32 0.0, %v1161
    %v1163 = vpop.f32.mrb[0].mxu0
    %1164 = vmatprep.mubr.f32.mxu0 0.0
    %1165 = vmatmul.mubr.f32.gmra.mrb[0].mxu0 %v1083
    %v1166 = vpop.f32.mrb[0].mxu0
    %v1167 = vadd.f32 0.0, %v1166
    %v1168 = vpop.f32.mrb[0].mxu0
    %1169 = vdwg.mxu0
    %v1171 = vsel %vm1072, %v745, 0
    %v1174 = vsel %vm1072, %v750, 0
    %v1177 = vsel %vm1072, %v755, 0
    %v1180 = vsel %vm1072, %v760, 0
    %1182 = vmatprep.subr.mxu0 0.0
    %1183 = vmatpush1.msra.mxu0 %v1063
    %1184 = vmatprep.subr.mxu0 0.0
    %1185 = vmatpush1.msra.mxu0 %v1064
    %1186 = vmatprep.subr.mxu0 0.0
    %1187 = vmatpush1.msra.mxu0 %v1065
    %1188 = vmatprep.subr.mxu0 0.0
    %1189 = vmatpush1.msra.mxu0 %v1066
    %1190 = vmatprep.subr.mxu0 0.0
    %1191 = vmatpush1.msra.mxu0 0.0
    %1192 = vmatprep.subr.mxu0 0.0
    %1193 = vmatpush1.msra.mxu0 0.0
    %1194 = vmatprep.subr.mxu0 0.0
    %1195 = vmatpush1.msra.mxu0 0.0
    %1196 = vmatprep.subr.mxu0 0.0
    %1197 = vmatpush1.msra.mxu0 0.0
    %1198 = vmatprep.subr.mxu0 0.0
    %1199 = vmatpush1.msra.mxu0 0.0
    %1200 = vmatprep.subr.mxu0 0.0
    %1201 = vmatpush1.msra.mxu0 0.0
    %1202 = vmatprep.subr.mxu0 0.0
    %1203 = vmatpush1.msra.mxu0 0.0
    %1204 = vmatprep.subr.mxu0 0.0
    %1205 = vmatpush1.msra.mxu0 0.0
    %1206 = vmatprep.subr.mxu0 0.0
    %1207 = vmatpush1.msra.mxu0 0.0
    %1208 = vmatprep.subr.mxu0 0.0
    %1209 = vmatpush1.msra.mxu0 0.0
    %1210 = vmatprep.subr.mxu0 0.0
    %1211 = vmatpush1.msra.mxu0 0.0
    %1212 = vmatprep.subr.mxu0 0.0
    %1213 = vmatpush1.msra.mxu0 0.0
    %1214 = vmatprep.subr.mxu0 0.0
    %1215 = vmatpush1.msra.mxu0 0.0
    %1216 = vmatprep.subr.mxu0 0.0
    %1217 = vmatpush1.msra.mxu0 0.0
    %1218 = vmatprep.subr.mxu0 0.0
    %1219 = vmatpush1.msra.mxu0 0.0
    %1220 = vmatprep.subr.mxu0 0.0
    %1221 = vmatpush1.msra.mxu0 0.0
    %1222 = vmatprep.subr.mxu0 0.0
    %1223 = vmatpush1.msra.mxu0 0.0
    %1224 = vmatprep.subr.mxu0 0.0
    %1225 = vmatpush1.msra.mxu0 0.0
    %1226 = vmatprep.subr.mxu0 0.0
    %1227 = vmatpush1.msra.mxu0 0.0
    %1228 = vmatprep.subr.mxu0 0.0
    %1229 = vmatpush1.msra.mxu0 0.0
    %1230 = vmatprep.subr.mxu0 0.0
    %1231 = vmatpush1.msra.mxu0 0.0
    %1232 = vmatprep.subr.mxu0 0.0
    %1233 = vmatpush1.msra.mxu0 0.0
    %1234 = vmatprep.subr.mxu0 0.0
    %1235 = vmatpush1.msra.mxu0 0.0
    %1236 = vmatprep.subr.mxu0 0.0
    %1237 = vmatpush1.msra.mxu0 0.0
    %1238 = vmatprep.subr.mxu0 0.0
    %1239 = vmatpush1.msra.mxu0 0.0
    %1240 = vmatprep.subr.mxu0 0.0
    %1241 = vmatpush1.msra.mxu0 0.0
    %1242 = vmatprep.subr.mxu0 0.0
    %1243 = vmatpush1.msra.mxu0 0.0
    %1244 = vmatprep.subr.mxu0 0.0
    %1245 = vmatpush1.msra.mxu0 0.0
    %1246 = vmatprep.mubr.f32.mxu0 0.0
    %1247 = vmatmul.mubr.f32.gmra.mrb[0].mxu0 %v1171
    %v1248 = vpop.f32.mrb[0].mxu0
    %v1249 = vadd.f32 %v1152, %v1248
    %v1250 = vpop.f32.mrb[0].mxu0
    %1251 = vmatprep.mubr.f32.mxu0 0.0
    %1252 = vmatmul.mubr.f32.gmra.mrb[0].mxu0 %v1174
    %v1253 = vpop.f32.mrb[0].mxu0
    %v1254 = vadd.f32 %v1157, %v1253
    %v1255 = vpop.f32.mrb[0].mxu0
    %1256 = vmatprep.mubr.f32.mxu0 0.0
    %1257 = vmatmul.mubr.f32.gmra.mrb[0].mxu0 %v1177
    %v1258 = vpop.f32.mrb[0].mxu0
    %v1259 = vadd.f32 %v1162, %v1258
    %v1260 = vpop.f32.mrb[0].mxu0
    %1261 = vmatprep.mubr.f32.mxu0 0.0
    %1262 = vmatmul.mubr.f32.gmra.mrb[0].mxu0 %v1180
    %v1263 = vpop.f32.mrb[0].mxu0
    %v1264 = vadd.f32 %v1167, %v1263
    %v1265 = vpop.f32.mrb[0].mxu0
    %1266 = vdwg.mxu0
    %s1267 = scalar_lea.vmem %s4, 64
    %v1268 = vld [vmem:[%s1267] sm:$0xff]
    %v1269 = vld [vmem:[%s1267 + $0x8] sm:$0xff]
    %v1270 = vld [vmem:[%s1267 + $0x10] sm:$0xff]
    %v1271 = vld [vmem:[%s1267 + $0x18] sm:$0xff]
    %v1273 = vsel %vm1072, %v785, 0
    %v1276 = vsel %vm1072, %v790, 0
    %v1279 = vsel %vm1072, %v795, 0
    %v1282 = vsel %vm1072, %v800, 0
    %1284 = vmatprep.subr.mxu0 0.0
    %1285 = vmatpush1.msra.mxu0 %v1268
    %1286 = vmatprep.subr.mxu0 0.0
    %1287 = vmatpush1.msra.mxu0 %v1269
    %1288 = vmatprep.subr.mxu0 0.0
    %1289 = vmatpush1.msra.mxu0 %v1270
    %1290 = vmatprep.subr.mxu0 0.0
    %1291 = vmatpush1.msra.mxu0 %v1271
    %1292 = vmatprep.subr.mxu0 0.0
    %1293 = vmatpush1.msra.mxu0 0.0
    %1294 = vmatprep.subr.mxu0 0.0
    %1295 = vmatpush1.msra.mxu0 0.0
    %1296 = vmatprep.subr.mxu0 0.0
    %1297 = vmatpush1.msra.mxu0 0.0
    %1298 = vmatprep.subr.mxu0 0.0
    %1299 = vmatpush1.msra.mxu0 0.0
    %1300 = vmatprep.subr.mxu0 0.0
    %1301 = vmatpush1.msra.mxu0 0.0
    %1302 = vmatprep.subr.mxu0 0.0
    %1303 = vmatpush1.msra.mxu0 0.0
    %1304 = vmatprep.subr.mxu0 0.0
    %1305 = vmatpush1.msra.mxu0 0.0
    %1306 = vmatprep.subr.mxu0 0.0
    %1307 = vmatpush1.msra.mxu0 0.0
    %1308 = vmatprep.subr.mxu0 0.0
    %1309 = vmatpush1.msra.mxu0 0.0
    %1310 = vmatprep.subr.mxu0 0.0
    %1311 = vmatpush1.msra.mxu0 0.0
    %1312 = vmatprep.subr.mxu0 0.0
    %1313 = vmatpush1.msra.mxu0 0.0
    %1314 = vmatprep.subr.mxu0 0.0
    %1315 = vmatpush1.msra.mxu0 0.0
    %1316 = vmatprep.subr.mxu0 0.0
    %1317 = vmatpush1.msra.mxu0 0.0
    %1318 = vmatprep.subr.mxu0 0.0
    %1319 = vmatpush1.msra.mxu0 0.0
    %1320 = vmatprep.subr.mxu0 0.0
    %1321 = vmatpush1.msra.mxu0 0.0
    %1322 = vmatprep.subr.mxu0 0.0
    %1323 = vmatpush1.msra.mxu0 0.0
    %1324 = vmatprep.subr.mxu0 0.0
    %1325 = vmatpush1.msra.mxu0 0.0
    %1326 = vmatprep.subr.mxu0 0.0
    %1327 = vmatpush1.msra.mxu0 0.0
    %1328 = vmatprep.subr.mxu0 0.0
    %1329 = vmatpush1.msra.mxu0 0.0
    %1330 = vmatprep.subr.mxu0 0.0
    %1331 = vmatpush1.msra.mxu0 0.0
    %1332 = vmatprep.subr.mxu0 0.0
    %1333 = vmatpush1.msra.mxu0 0.0
    %1334 = vmatprep.subr.mxu0 0.0
    %1335 = vmatpush1.msra.mxu0 0.0
    %1336 = vmatprep.subr.mxu0 0.0
    %1337 = vmatpush1.msra.mxu0 0.0
    %1338 = vmatprep.subr.mxu0 0.0
    %1339 = vmatpush1.msra.mxu0 0.0
    %1340 = vmatprep.subr.mxu0 0.0
    %1341 = vmatpush1.msra.mxu0 0.0
    %1342 = vmatprep.subr.mxu0 0.0
    %1343 = vmatpush1.msra.mxu0 0.0
    %1344 = vmatprep.subr.mxu0 0.0
    %1345 = vmatpush1.msra.mxu0 0.0
    %1346 = vmatprep.subr.mxu0 0.0
    %1347 = vmatpush1.msra.mxu0 0.0
    %1348 = vmatprep.mubr.f32.mxu0 0.0
    %1349 = vmatmul.mubr.f32.gmra.mrb[0].mxu0 %v1273
    %v1350 = vpop.f32.mrb[0].mxu0
    %v1351 = vadd.f32 0.0, %v1350
    %v1352 = vpop.f32.mrb[0].mxu0
    %1353 = vmatprep.mubr.f32.mxu0 0.0
    %1354 = vmatmul.mubr.f32.gmra.mrb[0].mxu0 %v1276
    %v1355 = vpop.f32.mrb[0].mxu0
    %v1356 = vadd.f32 0.0, %v1355
    %v1357 = vpop.f32.mrb[0].mxu0
    %1358 = vmatprep.mubr.f32.mxu0 0.0
    %1359 = vmatmul.mubr.f32.gmra.mrb[0].mxu0 %v1279
    %v1360 = vpop.f32.mrb[0].mxu0
    %v1361 = vadd.f32 0.0, %v1360
    %v1362 = vpop.f32.mrb[0].mxu0
    %1363 = vmatprep.mubr.f32.mxu0 0.0
    %1364 = vmatmul.mubr.f32.gmra.mrb[0].mxu0 %v1282
    %v1365 = vpop.f32.mrb[0].mxu0
    %v1366 = vadd.f32 0.0, %v1365
    %v1367 = vpop.f32.mrb[0].mxu0
    %1368 = vdwg.mxu0
    %v1369 = vadd.f32 %v1249, %v1351
    %v1370 = vadd.f32 %v1254, %v1356
    %v1371 = vadd.f32 %v1259, %v1361
    %v1372 = vadd.f32 %v1264, %v1366
    %s1373 = scalar_lea.vmem %s4, 96
    %v1374 = vld [vmem:[%s1373] sm:$0xff]
    %v1375 = vld [vmem:[%s1373 + $0x8] sm:$0xff]
    %v1376 = vld [vmem:[%s1373 + $0x10] sm:$0xff]
    %v1377 = vld [vmem:[%s1373 + $0x18] sm:$0xff]
    %v1379 = vsel %vm1072, %v805, 0
    %v1382 = vsel %vm1072, %v810, 0
    %v1385 = vsel %vm1072, %v815, 0
    %v1388 = vsel %vm1072, %v820, 0
    %1390 = vmatprep.subr.mxu0 0.0
    %1391 = vmatpush1.msra.mxu0 %v1374
    %1392 = vmatprep.subr.mxu0 0.0
    %1393 = vmatpush1.msra.mxu0 %v1375
    %1394 = vmatprep.subr.mxu0 0.0
    %1395 = vmatpush1.msra.mxu0 %v1376
    %1396 = vmatprep.subr.mxu0 0.0
    %1397 = vmatpush1.msra.mxu0 %v1377
    %1398 = vmatprep.subr.mxu0 0.0
    %1399 = vmatpush1.msra.mxu0 0.0
    %1400 = vmatprep.subr.mxu0 0.0
    %1401 = vmatpush1.msra.mxu0 0.0
    %1402 = vmatprep.subr.mxu0 0.0
    %1403 = vmatpush1.msra.mxu0 0.0
    %1404 = vmatprep.subr.mxu0 0.0
    %1405 = vmatpush1.msra.mxu0 0.0
    %1406 = vmatprep.subr.mxu0 0.0
    %1407 = vmatpush1.msra.mxu0 0.0
    %1408 = vmatprep.subr.mxu0 0.0
    %1409 = vmatpush1.msra.mxu0 0.0
    %1410 = vmatprep.subr.mxu0 0.0
    %1411 = vmatpush1.msra.mxu0 0.0
    %1412 = vmatprep.subr.mxu0 0.0
    %1413 = vmatpush1.msra.mxu0 0.0
    %1414 = vmatprep.subr.mxu0 0.0
    %1415 = vmatpush1.msra.mxu0 0.0
    %1416 = vmatprep.subr.mxu0 0.0
    %1417 = vmatpush1.msra.mxu0 0.0
    %1418 = vmatprep.subr.mxu0 0.0
    %1419 = vmatpush1.msra.mxu0 0.0
    %1420 = vmatprep.subr.mxu0 0.0
    %1421 = vmatpush1.msra.mxu0 0.0
    %1422 = vmatprep.subr.mxu0 0.0
    %1423 = vmatpush1.msra.mxu0 0.0
    %1424 = vmatprep.subr.mxu0 0.0
    %1425 = vmatpush1.msra.mxu0 0.0
    %1426 = vmatprep.subr.mxu0 0.0
    %1427 = vmatpush1.msra.mxu0 0.0
    %1428 = vmatprep.subr.mxu0 0.0
    %1429 = vmatpush1.msra.mxu0 0.0
    %1430 = vmatprep.subr.mxu0 0.0
    %1431 = vmatpush1.msra.mxu0 0.0
    %1432 = vmatprep.subr.mxu0 0.0
    %1433 = vmatpush1.msra.mxu0 0.0
    %1434 = vmatprep.subr.mxu0 0.0
    %1435 = vmatpush1.msra.mxu0 0.0
    %1436 = vmatprep.subr.mxu0 0.0
    %1437 = vmatpush1.msra.mxu0 0.0
    %1438 = vmatprep.subr.mxu0 0.0
    %1439 = vmatpush1.msra.mxu0 0.0
    %1440 = vmatprep.subr.mxu0 0.0
    %1441 = vmatpush1.msra.mxu0 0.0
    %1442 = vmatprep.subr.mxu0 0.0
    %1443 = vmatpush1.msra.mxu0 0.0
    %1444 = vmatprep.subr.mxu0 0.0
    %1445 = vmatpush1.msra.mxu0 0.0
    %1446 = vmatprep.subr.mxu0 0.0
    %1447 = vmatpush1.msra.mxu0 0.0
    %1448 = vmatprep.subr.mxu0 0.0
    %1449 = vmatpush1.msra.mxu0 0.0
    %1450 = vmatprep.subr.mxu0 0.0
    %1451 = vmatpush1.msra.mxu0 0.0
    %1452 = vmatprep.subr.mxu0 0.0
    %1453 = vmatpush1.msra.mxu0 0.0
    %1454 = vmatprep.mubr.f32.mxu0 0.0
    %1455 = vmatmul.mubr.f32.gmra.mrb[0].mxu0 %v1379
    %v1456 = vpop.f32.mrb[0].mxu0
    %v1457 = vadd.f32 0.0, %v1456
    %v1458 = vpop.f32.mrb[0].mxu0
    %1459 = vmatprep.mubr.f32.mxu0 0.0
    %1460 = vmatmul.mubr.f32.gmra.mrb[0].mxu0 %v1382
    %v1461 = vpop.f32.mrb[0].mxu0
    %v1462 = vadd.f32 0.0, %v1461
    %v1463 = vpop.f32.mrb[0].mxu0
    %1464 = vmatprep.mubr.f32.mxu0 0.0
    %1465 = vmatmul.mubr.f32.gmra.mrb[0].mxu0 %v1385
    %v1466 = vpop.f32.mrb[0].mxu0
    %v1467 = vadd.f32 0.0, %v1466
    %v1468 = vpop.f32.mrb[0].mxu0
    %1469 = vmatprep.mubr.f32.mxu0 0.0
    %1470 = vmatmul.mubr.f32.gmra.mrb[0].mxu0 %v1388
    %v1471 = vpop.f32.mrb[0].mxu0
    %v1472 = vadd.f32 0.0, %v1471
    %v1473 = vpop.f32.mrb[0].mxu0
    %1474 = vdwg.mxu0
    %v1475 = vadd.f32 %v1369, %v1457
    %v1476 = vadd.f32 %v1370, %v1462
    %v1477 = vadd.f32 %v1371, %v1467
    %v1478 = vadd.f32 %v1372, %v1472
    %s1479 = scalar_lea.vmem %s4, 128
    %v1480 = vld [vmem:[%s1479] sm:$0xff]
    %v1481 = vld [vmem:[%s1479 + $0x8] sm:$0xff]
    %v1482 = vld [vmem:[%s1479 + $0x10] sm:$0xff]
    %v1483 = vld [vmem:[%s1479 + $0x18] sm:$0xff]
    %v1485 = vsel %vm1072, %v825, 0
    %v1488 = vsel %vm1072, %v830, 0
    %v1491 = vsel %vm1072, %v835, 0
    %v1494 = vsel %vm1072, %v840, 0
    %1496 = vmatprep.subr.mxu0 0.0
    %1497 = vmatpush1.msra.mxu0 %v1480
    %1498 = vmatprep.subr.mxu0 0.0
    %1499 = vmatpush1.msra.mxu0 %v1481
    %1500 = vmatprep.subr.mxu0 0.0
    %1501 = vmatpush1.msra.mxu0 %v1482
    %1502 = vmatprep.subr.mxu0 0.0
    %1503 = vmatpush1.msra.mxu0 %v1483
    %1504 = vmatprep.subr.mxu0 0.0
    %1505 = vmatpush1.msra.mxu0 0.0
    %1506 = vmatprep.subr.mxu0 0.0
    %1507 = vmatpush1.msra.mxu0 0.0
    %1508 = vmatprep.subr.mxu0 0.0
    %1509 = vmatpush1.msra.mxu0 0.0
    %1510 = vmatprep.subr.mxu0 0.0
    %1511 = vmatpush1.msra.mxu0 0.0
    %1512 = vmatprep.subr.mxu0 0.0
    %1513 = vmatpush1.msra.mxu0 0.0
    %1514 = vmatprep.subr.mxu0 0.0
    %1515 = vmatpush1.msra.mxu0 0.0
    %1516 = vmatprep.subr.mxu0 0.0
    %1517 = vmatpush1.msra.mxu0 0.0
    %1518 = vmatprep.subr.mxu0 0.0
    %1519 = vmatpush1.msra.mxu0 0.0
    %1520 = vmatprep.subr.mxu0 0.0
    %1521 = vmatpush1.msra.mxu0 0.0
    %1522 = vmatprep.subr.mxu0 0.0
    %1523 = vmatpush1.msra.mxu0 0.0
    %1524 = vmatprep.subr.mxu0 0.0
    %1525 = vmatpush1.msra.mxu0 0.0
    %1526 = vmatprep.subr.mxu0 0.0
    %1527 = vmatpush1.msra.mxu0 0.0
    %1528 = vmatprep.subr.mxu0 0.0
    %1529 = vmatpush1.msra.mxu0 0.0
    %1530 = vmatprep.subr.mxu0 0.0
    %1531 = vmatpush1.msra.mxu0 0.0
    %1532 = vmatprep.subr.mxu0 0.0
    %1533 = vmatpush1.msra.mxu0 0.0
    %1534 = vmatprep.subr.mxu0 0.0
    %1535 = vmatpush1.msra.mxu0 0.0
    %1536 = vmatprep.subr.mxu0 0.0
    %1537 = vmatpush1.msra.mxu0 0.0
    %1538 = vmatprep.subr.mxu0 0.0
    %1539 = vmatpush1.msra.mxu0 0.0
    %1540 = vmatprep.subr.mxu0 0.0
    %1541 = vmatpush1.msra.mxu0 0.0
    %1542 = vmatprep.subr.mxu0 0.0
    %1543 = vmatpush1.msra.mxu0 0.0
    %1544 = vmatprep.subr.mxu0 0.0
    %1545 = vmatpush1.msra.mxu0 0.0
    %1546 = vmatprep.subr.mxu0 0.0
    %1547 = vmatpush1.msra.mxu0 0.0
    %1548 = vmatprep.subr.mxu0 0.0
    %1549 = vmatpush1.msra.mxu0 0.0
    %1550 = vmatprep.subr.mxu0 0.0
    %1551 = vmatpush1.msra.mxu0 0.0
    %1552 = vmatprep.subr.mxu0 0.0
    %1553 = vmatpush1.msra.mxu0 0.0
    %1554 = vmatprep.subr.mxu0 0.0
    %1555 = vmatpush1.msra.mxu0 0.0
    %1556 = vmatprep.subr.mxu0 0.0
    %1557 = vmatpush1.msra.mxu0 0.0
    %1558 = vmatprep.subr.mxu0 0.0
    %1559 = vmatpush1.msra.mxu0 0.0
    %1560 = vmatprep.mubr.f32.mxu0 0.0
    %1561 = vmatmul.mubr.f32.gmra.mrb[0].mxu0 %v1485
    %v1562 = vpop.f32.mrb[0].mxu0
    %v1563 = vadd.f32 0.0, %v1562
    %v1564 = vpop.f32.mrb[0].mxu0
    %1565 = vmatprep.mubr.f32.mxu0 0.0
    %1566 = vmatmul.mubr.f32.gmra.mrb[0].mxu0 %v1488
    %v1567 = vpop.f32.mrb[0].mxu0
    %v1568 = vadd.f32 0.0, %v1567
    %v1569 = vpop.f32.mrb[0].mxu0
    %1570 = vmatprep.mubr.f32.mxu0 0.0
    %1571 = vmatmul.mubr.f32.gmra.mrb[0].mxu0 %v1491
    %v1572 = vpop.f32.mrb[0].mxu0
    %v1573 = vadd.f32 0.0, %v1572
    %v1574 = vpop.f32.mrb[0].mxu0
    %1575 = vmatprep.mubr.f32.mxu0 0.0
    %1576 = vmatmul.mubr.f32.gmra.mrb[0].mxu0 %v1494
    %v1577 = vpop.f32.mrb[0].mxu0
    %v1578 = vadd.f32 0.0, %v1577
    %v1579 = vpop.f32.mrb[0].mxu0
    %1580 = vdwg.mxu0
    %v1581 = vadd.f32 %v1475, %v1563
    %v1582 = vadd.f32 %v1476, %v1568
    %v1583 = vadd.f32 %v1477, %v1573
    %v1584 = vadd.f32 %v1478, %v1578
    %s1585 = scalar_lea.vmem %s4, 160
    %v1586 = vld [vmem:[%s1585] sm:$0xff]
    %v1587 = vld [vmem:[%s1585 + $0x8] sm:$0xff]
    %v1588 = vld [vmem:[%s1585 + $0x10] sm:$0xff]
    %v1589 = vld [vmem:[%s1585 + $0x18] sm:$0xff]
    %v1591 = vsel %vm1072, %v845, 0
    %v1594 = vsel %vm1072, %v850, 0
    %v1597 = vsel %vm1072, %v855, 0
    %v1600 = vsel %vm1072, %v860, 0
    %1602 = vmatprep.subr.mxu0 0.0
    %1603 = vmatpush1.msra.mxu0 %v1586
    %1604 = vmatprep.subr.mxu0 0.0
    %1605 = vmatpush1.msra.mxu0 %v1587
    %1606 = vmatprep.subr.mxu0 0.0
    %1607 = vmatpush1.msra.mxu0 %v1588
    %1608 = vmatprep.subr.mxu0 0.0
    %1609 = vmatpush1.msra.mxu0 %v1589
    %1610 = vmatprep.subr.mxu0 0.0
    %1611 = vmatpush1.msra.mxu0 0.0
    %1612 = vmatprep.subr.mxu0 0.0
    %1613 = vmatpush1.msra.mxu0 0.0
    %1614 = vmatprep.subr.mxu0 0.0
    %1615 = vmatpush1.msra.mxu0 0.0
    %1616 = vmatprep.subr.mxu0 0.0
    %1617 = vmatpush1.msra.mxu0 0.0
    %1618 = vmatprep.subr.mxu0 0.0
    %1619 = vmatpush1.msra.mxu0 0.0
    %1620 = vmatprep.subr.mxu0 0.0
    %1621 = vmatpush1.msra.mxu0 0.0
    %1622 = vmatprep.subr.mxu0 0.0
    %1623 = vmatpush1.msra.mxu0 0.0
    %1624 = vmatprep.subr.mxu0 0.0
    %1625 = vmatpush1.msra.mxu0 0.0
    %1626 = vmatprep.subr.mxu0 0.0
    %1627 = vmatpush1.msra.mxu0 0.0
    %1628 = vmatprep.subr.mxu0 0.0
    %1629 = vmatpush1.msra.mxu0 0.0
    %1630 = vmatprep.subr.mxu0 0.0
    %1631 = vmatpush1.msra.mxu0 0.0
    %1632 = vmatprep.subr.mxu0 0.0
    %1633 = vmatpush1.msra.mxu0 0.0
    %1634 = vmatprep.subr.mxu0 0.0
    %1635 = vmatpush1.msra.mxu0 0.0
    %1636 = vmatprep.subr.mxu0 0.0
    %1637 = vmatpush1.msra.mxu0 0.0
    %1638 = vmatprep.subr.mxu0 0.0
    %1639 = vmatpush1.msra.mxu0 0.0
    %1640 = vmatprep.subr.mxu0 0.0
    %1641 = vmatpush1.msra.mxu0 0.0
    %1642 = vmatprep.subr.mxu0 0.0
    %1643 = vmatpush1.msra.mxu0 0.0
    %1644 = vmatprep.subr.mxu0 0.0
    %1645 = vmatpush1.msra.mxu0 0.0
    %1646 = vmatprep.subr.mxu0 0.0
    %1647 = vmatpush1.msra.mxu0 0.0
    %1648 = vmatprep.subr.mxu0 0.0
    %1649 = vmatpush1.msra.mxu0 0.0
    %1650 = vmatprep.subr.mxu0 0.0
    %1651 = vmatpush1.msra.mxu0 0.0
    %1652 = vmatprep.subr.mxu0 0.0
    %1653 = vmatpush1.msra.mxu0 0.0
    %1654 = vmatprep.subr.mxu0 0.0
    %1655 = vmatpush1.msra.mxu0 0.0
    %1656 = vmatprep.subr.mxu0 0.0
    %1657 = vmatpush1.msra.mxu0 0.0
    %1658 = vmatprep.subr.mxu0 0.0
    %1659 = vmatpush1.msra.mxu0 0.0
    %1660 = vmatprep.subr.mxu0 0.0
    %1661 = vmatpush1.msra.mxu0 0.0
    %1662 = vmatprep.subr.mxu0 0.0
    %1663 = vmatpush1.msra.mxu0 0.0
    %1664 = vmatprep.subr.mxu0 0.0
    %1665 = vmatpush1.msra.mxu0 0.0
    %1666 = vmatprep.mubr.f32.mxu0 0.0
    %1667 = vmatmul.mubr.f32.gmra.mrb[0].mxu0 %v1591
    %v1668 = vpop.f32.mrb[0].mxu0
    %v1669 = vadd.f32 0.0, %v1668
    %v1670 = vpop.f32.mrb[0].mxu0
    %1671 = vmatprep.mubr.f32.mxu0 0.0
    %1672 = vmatmul.mubr.f32.gmra.mrb[0].mxu0 %v1594
    %v1673 = vpop.f32.mrb[0].mxu0
    %v1674 = vadd.f32 0.0, %v1673
    %v1675 = vpop.f32.mrb[0].mxu0
    %1676 = vmatprep.mubr.f32.mxu0 0.0
    %1677 = vmatmul.mubr.f32.gmra.mrb[0].mxu0 %v1597
    %v1678 = vpop.f32.mrb[0].mxu0
    %v1679 = vadd.f32 0.0, %v1678
    %v1680 = vpop.f32.mrb[0].mxu0
    %1681 = vmatprep.mubr.f32.mxu0 0.0
    %1682 = vmatmul.mubr.f32.gmra.mrb[0].mxu0 %v1600
    %v1683 = vpop.f32.mrb[0].mxu0
    %v1684 = vadd.f32 0.0, %v1683
    %v1685 = vpop.f32.mrb[0].mxu0
    %1686 = vdwg.mxu0
    %v1687 = vadd.f32 %v1581, %v1669
    %v1688 = vadd.f32 %v1582, %v1674
    %v1689 = vadd.f32 %v1583, %v1679
    %v1690 = vadd.f32 %v1584, %v1684
    %s1691 = scalar_lea.vmem %s4, 192
    %v1692 = vld [vmem:[%s1691] sm:$0xff]
    %v1693 = vld [vmem:[%s1691 + $0x8] sm:$0xff]
    %v1694 = vld [vmem:[%s1691 + $0x10] sm:$0xff]
    %v1695 = vld [vmem:[%s1691 + $0x18] sm:$0xff]
    %v1697 = vsel %vm1072, %v865, 0
    %v1700 = vsel %vm1072, %v870, 0
    %v1703 = vsel %vm1072, %v875, 0
    %v1706 = vsel %vm1072, %v880, 0
    %1708 = vmatprep.subr.mxu0 0.0
    %1709 = vmatpush1.msra.mxu0 %v1692
    %1710 = vmatprep.subr.mxu0 0.0
    %1711 = vmatpush1.msra.mxu0 %v1693
    %1712 = vmatprep.subr.mxu0 0.0
    %1713 = vmatpush1.msra.mxu0 %v1694
    %1714 = vmatprep.subr.mxu0 0.0
    %1715 = vmatpush1.msra.mxu0 %v1695
    %1716 = vmatprep.subr.mxu0 0.0
    %1717 = vmatpush1.msra.mxu0 0.0
    %1718 = vmatprep.subr.mxu0 0.0
    %1719 = vmatpush1.msra.mxu0 0.0
    %1720 = vmatprep.subr.mxu0 0.0
    %1721 = vmatpush1.msra.mxu0 0.0
    %1722 = vmatprep.subr.mxu0 0.0
    %1723 = vmatpush1.msra.mxu0 0.0
    %1724 = vmatprep.subr.mxu0 0.0
    %1725 = vmatpush1.msra.mxu0 0.0
    %1726 = vmatprep.subr.mxu0 0.0
    %1727 = vmatpush1.msra.mxu0 0.0
    %1728 = vmatprep.subr.mxu0 0.0
    %1729 = vmatpush1.msra.mxu0 0.0
    %1730 = vmatprep.subr.mxu0 0.0
    %1731 = vmatpush1.msra.mxu0 0.0
    %1732 = vmatprep.subr.mxu0 0.0
    %1733 = vmatpush1.msra.mxu0 0.0
    %1734 = vmatprep.subr.mxu0 0.0
    %1735 = vmatpush1.msra.mxu0 0.0
    %1736 = vmatprep.subr.mxu0 0.0
    %1737 = vmatpush1.msra.mxu0 0.0
    %1738 = vmatprep.subr.mxu0 0.0
    %1739 = vmatpush1.msra.mxu0 0.0
    %1740 = vmatprep.subr.mxu0 0.0
    %1741 = vmatpush1.msra.mxu0 0.0
    %1742 = vmatprep.subr.mxu0 0.0
    %1743 = vmatpush1.msra.mxu0 0.0
    %1744 = vmatprep.subr.mxu0 0.0
    %1745 = vmatpush1.msra.mxu0 0.0
    %1746 = vmatprep.subr.mxu0 0.0
    %1747 = vmatpush1.msra.mxu0 0.0
    %1748 = vmatprep.subr.mxu0 0.0
    %1749 = vmatpush1.msra.mxu0 0.0
    %1750 = vmatprep.subr.mxu0 0.0
    %1751 = vmatpush1.msra.mxu0 0.0
    %1752 = vmatprep.subr.mxu0 0.0
    %1753 = vmatpush1.msra.mxu0 0.0
    %1754 = vmatprep.subr.mxu0 0.0
    %1755 = vmatpush1.msra.mxu0 0.0
    %1756 = vmatprep.subr.mxu0 0.0
    %1757 = vmatpush1.msra.mxu0 0.0
    %1758 = vmatprep.subr.mxu0 0.0
    %1759 = vmatpush1.msra.mxu0 0.0
    %1760 = vmatprep.subr.mxu0 0.0
    %1761 = vmatpush1.msra.mxu0 0.0
    %1762 = vmatprep.subr.mxu0 0.0
    %1763 = vmatpush1.msra.mxu0 0.0
    %1764 = vmatprep.subr.mxu0 0.0
    %1765 = vmatpush1.msra.mxu0 0.0
    %1766 = vmatprep.subr.mxu0 0.0
    %1767 = vmatpush1.msra.mxu0 0.0
    %1768 = vmatprep.subr.mxu0 0.0
    %1769 = vmatpush1.msra.mxu0 0.0
    %1770 = vmatprep.subr.mxu0 0.0
    %1771 = vmatpush1.msra.mxu0 0.0
    %1772 = vmatprep.mubr.f32.mxu0 0.0
    %1773 = vmatmul.mubr.f32.gmra.mrb[0].mxu0 %v1697
    %v1774 = vpop.f32.mrb[0].mxu0
    %v1775 = vadd.f32 0.0, %v1774
    %v1776 = vpop.f32.mrb[0].mxu0
    %1777 = vmatprep.mubr.f32.mxu0 0.0
    %1778 = vmatmul.mubr.f32.gmra.mrb[0].mxu0 %v1700
    %v1779 = vpop.f32.mrb[0].mxu0
    %v1780 = vadd.f32 0.0, %v1779
    %v1781 = vpop.f32.mrb[0].mxu0
    %1782 = vmatprep.mubr.f32.mxu0 0.0
    %1783 = vmatmul.mubr.f32.gmra.mrb[0].mxu0 %v1703
    %v1784 = vpop.f32.mrb[0].mxu0
    %v1785 = vadd.f32 0.0, %v1784
    %v1786 = vpop.f32.mrb[0].mxu0
    %1787 = vmatprep.mubr.f32.mxu0 0.0
    %1788 = vmatmul.mubr.f32.gmra.mrb[0].mxu0 %v1706
    %v1789 = vpop.f32.mrb[0].mxu0
    %v1790 = vadd.f32 0.0, %v1789
    %v1791 = vpop.f32.mrb[0].mxu0
    %1792 = vdwg.mxu0
    %v1793 = vadd.f32 %v1687, %v1775
    %v1794 = vadd.f32 %v1688, %v1780
    %v1795 = vadd.f32 %v1689, %v1785
    %v1796 = vadd.f32 %v1690, %v1790
    %s1797 = scalar_lea.vmem %s4, 224
    %v1798 = vld [vmem:[%s1797] sm:$0xff]
    %v1799 = vld [vmem:[%s1797 + $0x8] sm:$0xff]
    %v1800 = vld [vmem:[%s1797 + $0x10] sm:$0xff]
    %v1801 = vld [vmem:[%s1797 + $0x18] sm:$0xff]
    %v1803 = vsel %vm1072, %v885, 0
    %v1806 = vsel %vm1072, %v890, 0
    %v1809 = vsel %vm1072, %v895, 0
    %v1812 = vsel %vm1072, %v900, 0
    %1814 = vmatprep.subr.mxu0 0.0
    %1815 = vmatpush1.msra.mxu0 %v1798
    %1816 = vmatprep.subr.mxu0 0.0
    %1817 = vmatpush1.msra.mxu0 %v1799
    %1818 = vmatprep.subr.mxu0 0.0
    %1819 = vmatpush1.msra.mxu0 %v1800
    %1820 = vmatprep.subr.mxu0 0.0
    %1821 = vmatpush1.msra.mxu0 %v1801
    %1822 = vmatprep.subr.mxu0 0.0
    %1823 = vmatpush1.msra.mxu0 0.0
    %1824 = vmatprep.subr.mxu0 0.0
    %1825 = vmatpush1.msra.mxu0 0.0
    %1826 = vmatprep.subr.mxu0 0.0
    %1827 = vmatpush1.msra.mxu0 0.0
    %1828 = vmatprep.subr.mxu0 0.0
    %1829 = vmatpush1.msra.mxu0 0.0
    %1830 = vmatprep.subr.mxu0 0.0
    %1831 = vmatpush1.msra.mxu0 0.0
    %1832 = vmatprep.subr.mxu0 0.0
    %1833 = vmatpush1.msra.mxu0 0.0
    %1834 = vmatprep.subr.mxu0 0.0
    %1835 = vmatpush1.msra.mxu0 0.0
    %1836 = vmatprep.subr.mxu0 0.0
    %1837 = vmatpush1.msra.mxu0 0.0
    %1838 = vmatprep.subr.mxu0 0.0
    %1839 = vmatpush1.msra.mxu0 0.0
    %1840 = vmatprep.subr.mxu0 0.0
    %1841 = vmatpush1.msra.mxu0 0.0
    %1842 = vmatprep.subr.mxu0 0.0
    %1843 = vmatpush1.msra.mxu0 0.0
    %1844 = vmatprep.subr.mxu0 0.0
    %1845 = vmatpush1.msra.mxu0 0.0
    %1846 = vmatprep.subr.mxu0 0.0
    %1847 = vmatpush1.msra.mxu0 0.0
    %1848 = vmatprep.subr.mxu0 0.0
    %1849 = vmatpush1.msra.mxu0 0.0
    %1850 = vmatprep.subr.mxu0 0.0
    %1851 = vmatpush1.msra.mxu0 0.0
    %1852 = vmatprep.subr.mxu0 0.0
    %1853 = vmatpush1.msra.mxu0 0.0
    %1854 = vmatprep.subr.mxu0 0.0
    %1855 = vmatpush1.msra.mxu0 0.0
    %1856 = vmatprep.subr.mxu0 0.0
    %1857 = vmatpush1.msra.mxu0 0.0
    %1858 = vmatprep.subr.mxu0 0.0
    %1859 = vmatpush1.msra.mxu0 0.0
    %1860 = vmatprep.subr.mxu0 0.0
    %1861 = vmatpush1.msra.mxu0 0.0
    %1862 = vmatprep.subr.mxu0 0.0
    %1863 = vmatpush1.msra.mxu0 0.0
    %1864 = vmatprep.subr.mxu0 0.0
    %1865 = vmatpush1.msra.mxu0 0.0
    %1866 = vmatprep.subr.mxu0 0.0
    %1867 = vmatpush1.msra.mxu0 0.0
    %1868 = vmatprep.subr.mxu0 0.0
    %1869 = vmatpush1.msra.mxu0 0.0
    %1870 = vmatprep.subr.mxu0 0.0
    %1871 = vmatpush1.msra.mxu0 0.0
    %1872 = vmatprep.subr.mxu0 0.0
    %1873 = vmatpush1.msra.mxu0 0.0
    %1874 = vmatprep.subr.mxu0 0.0
    %1875 = vmatpush1.msra.mxu0 0.0
    %1876 = vmatprep.subr.mxu0 0.0
    %1877 = vmatpush1.msra.mxu0 0.0
    %1878 = vmatprep.mubr.f32.mxu0 0.0
    %1879 = vmatmul.mubr.f32.gmra.mrb[0].mxu0 %v1803
    %v1880 = vpop.f32.mrb[0].mxu0
    %v1881 = vadd.f32 0.0, %v1880
    %v1882 = vpop.f32.mrb[0].mxu0
    %1883 = vmatprep.mubr.f32.mxu0 0.0
    %1884 = vmatmul.mubr.f32.gmra.mrb[0].mxu0 %v1806
    %v1885 = vpop.f32.mrb[0].mxu0
    %v1886 = vadd.f32 0.0, %v1885
    %v1887 = vpop.f32.mrb[0].mxu0
    %1888 = vmatprep.mubr.f32.mxu0 0.0
    %1889 = vmatmul.mubr.f32.gmra.mrb[0].mxu0 %v1809
    %v1890 = vpop.f32.mrb[0].mxu0
    %v1891 = vadd.f32 0.0, %v1890
    %v1892 = vpop.f32.mrb[0].mxu0
    %1893 = vmatprep.mubr.f32.mxu0 0.0
    %1894 = vmatmul.mubr.f32.gmra.mrb[0].mxu0 %v1812
    %v1895 = vpop.f32.mrb[0].mxu0
    %v1896 = vadd.f32 0.0, %v1895
    %v1897 = vpop.f32.mrb[0].mxu0
    %1898 = vdwg.mxu0
    %v1899 = vadd.f32 %v1793, %v1881
    %v1900 = vadd.f32 %v1794, %v1886
    %v1901 = vadd.f32 %v1795, %v1891
    %v1902 = vadd.f32 %v1796, %v1896
    %s1903 = scalar_lea.vmem %s4, 256
    %v1904 = vld [vmem:[%s1903] sm:$0xff]
    %v1905 = vld [vmem:[%s1903 + $0x8] sm:$0xff]
    %v1906 = vld [vmem:[%s1903 + $0x10] sm:$0xff]
    %v1907 = vld [vmem:[%s1903 + $0x18] sm:$0xff]
    %v1909 = vsel %vm1072, %v905, 0
    %v1912 = vsel %vm1072, %v910, 0
    %v1915 = vsel %vm1072, %v915, 0
    %v1918 = vsel %vm1072, %v920, 0
    %1920 = vmatprep.subr.mxu0 0.0
    %1921 = vmatpush1.msra.mxu0 %v1904
    %1922 = vmatprep.subr.mxu0 0.0
    %1923 = vmatpush1.msra.mxu0 %v1905
    %1924 = vmatprep.subr.mxu0 0.0
    %1925 = vmatpush1.msra.mxu0 %v1906
    %1926 = vmatprep.subr.mxu0 0.0
    %1927 = vmatpush1.msra.mxu0 %v1907
    %1928 = vmatprep.subr.mxu0 0.0
    %1929 = vmatpush1.msra.mxu0 0.0
    %1930 = vmatprep.subr.mxu0 0.0
    %1931 = vmatpush1.msra.mxu0 0.0
    %1932 = vmatprep.subr.mxu0 0.0
    %1933 = vmatpush1.msra.mxu0 0.0
    %1934 = vmatprep.subr.mxu0 0.0
    %1935 = vmatpush1.msra.mxu0 0.0
    %1936 = vmatprep.subr.mxu0 0.0
    %1937 = vmatpush1.msra.mxu0 0.0
    %1938 = vmatprep.subr.mxu0 0.0
    %1939 = vmatpush1.msra.mxu0 0.0
    %1940 = vmatprep.subr.mxu0 0.0
    %1941 = vmatpush1.msra.mxu0 0.0
    %1942 = vmatprep.subr.mxu0 0.0
    %1943 = vmatpush1.msra.mxu0 0.0
    %1944 = vmatprep.subr.mxu0 0.0
    %1945 = vmatpush1.msra.mxu0 0.0
    %1946 = vmatprep.subr.mxu0 0.0
    %1947 = vmatpush1.msra.mxu0 0.0
    %1948 = vmatprep.subr.mxu0 0.0
    %1949 = vmatpush1.msra.mxu0 0.0
    %1950 = vmatprep.subr.mxu0 0.0
    %1951 = vmatpush1.msra.mxu0 0.0
    %1952 = vmatprep.subr.mxu0 0.0
    %1953 = vmatpush1.msra.mxu0 0.0
    %1954 = vmatprep.subr.mxu0 0.0
    %1955 = vmatpush1.msra.mxu0 0.0
    %1956 = vmatprep.subr.mxu0 0.0
    %1957 = vmatpush1.msra.mxu0 0.0
    %1958 = vmatprep.subr.mxu0 0.0
    %1959 = vmatpush1.msra.mxu0 0.0
    %1960 = vmatprep.subr.mxu0 0.0
    %1961 = vmatpush1.msra.mxu0 0.0
    %1962 = vmatprep.subr.mxu0 0.0
    %1963 = vmatpush1.msra.mxu0 0.0
    %1964 = vmatprep.subr.mxu0 0.0
    %1965 = vmatpush1.msra.mxu0 0.0
    %1966 = vmatprep.subr.mxu0 0.0
    %1967 = vmatpush1.msra.mxu0 0.0
    %1968 = vmatprep.subr.mxu0 0.0
    %1969 = vmatpush1.msra.mxu0 0.0
    %1970 = vmatprep.subr.mxu0 0.0
    %1971 = vmatpush1.msra.mxu0 0.0
    %1972 = vmatprep.subr.mxu0 0.0
    %1973 = vmatpush1.msra.mxu0 0.0
    %1974 = vmatprep.subr.mxu0 0.0
    %1975 = vmatpush1.msra.mxu0 0.0
    %1976 = vmatprep.subr.mxu0 0.0
    %1977 = vmatpush1.msra.mxu0 0.0
    %1978 = vmatprep.subr.mxu0 0.0
    %1979 = vmatpush1.msra.mxu0 0.0
    %1980 = vmatprep.subr.mxu0 0.0
    %1981 = vmatpush1.msra.mxu0 0.0
    %1982 = vmatprep.subr.mxu0 0.0
    %1983 = vmatpush1.msra.mxu0 0.0
    %1984 = vmatprep.mubr.f32.mxu0 0.0
    %1985 = vmatmul.mubr.f32.gmra.mrb[0].mxu0 %v1909
    %v1986 = vpop.f32.mrb[0].mxu0
    %v1987 = vadd.f32 0.0, %v1986
    %v1988 = vpop.f32.mrb[0].mxu0
    %1989 = vmatprep.mubr.f32.mxu0 0.0
    %1990 = vmatmul.mubr.f32.gmra.mrb[0].mxu0 %v1912
    %v1991 = vpop.f32.mrb[0].mxu0
    %v1992 = vadd.f32 0.0, %v1991
    %v1993 = vpop.f32.mrb[0].mxu0
    %1994 = vmatprep.mubr.f32.mxu0 0.0
    %1995 = vmatmul.mubr.f32.gmra.mrb[0].mxu0 %v1915
    %v1996 = vpop.f32.mrb[0].mxu0
    %v1997 = vadd.f32 0.0, %v1996
    %v1998 = vpop.f32.mrb[0].mxu0
    %1999 = vmatprep.mubr.f32.mxu0 0.0
    %2000 = vmatmul.mubr.f32.gmra.mrb[0].mxu0 %v1918
    %v2001 = vpop.f32.mrb[0].mxu0
    %v2002 = vadd.f32 0.0, %v2001
    %v2003 = vpop.f32.mrb[0].mxu0
    %2004 = vdwg.mxu0
    %v2005 = vadd.f32 %v1899, %v1987
    %v2006 = vadd.f32 %v1900, %v1992
    %v2007 = vadd.f32 %v1901, %v1997
    %v2008 = vadd.f32 %v1902, %v2002
    %s2009 = scalar_lea.vmem %s4, 288
    %v2010 = vld [vmem:[%s2009] sm:$0xff]
    %v2011 = vld [vmem:[%s2009 + $0x8] sm:$0xff]
    %v2012 = vld [vmem:[%s2009 + $0x10] sm:$0xff]
    %v2013 = vld [vmem:[%s2009 + $0x18] sm:$0xff]
    %v2015 = vsel %vm1072, %v925, 0
    %v2018 = vsel %vm1072, %v930, 0
    %v2021 = vsel %vm1072, %v935, 0
    %v2024 = vsel %vm1072, %v940, 0
    %2026 = vmatprep.subr.mxu0 0.0
    %2027 = vmatpush1.msra.mxu0 %v2010
    %2028 = vmatprep.subr.mxu0 0.0
    %2029 = vmatpush1.msra.mxu0 %v2011
    %2030 = vmatprep.subr.mxu0 0.0
    %2031 = vmatpush1.msra.mxu0 %v2012
    %2032 = vmatprep.subr.mxu0 0.0
    %2033 = vmatpush1.msra.mxu0 %v2013
    %2034 = vmatprep.subr.mxu0 0.0
    %2035 = vmatpush1.msra.mxu0 0.0
    %2036 = vmatprep.subr.mxu0 0.0
    %2037 = vmatpush1.msra.mxu0 0.0
    %2038 = vmatprep.subr.mxu0 0.0
    %2039 = vmatpush1.msra.mxu0 0.0
    %2040 = vmatprep.subr.mxu0 0.0
    %2041 = vmatpush1.msra.mxu0 0.0
    %2042 = vmatprep.subr.mxu0 0.0
    %2043 = vmatpush1.msra.mxu0 0.0
    %2044 = vmatprep.subr.mxu0 0.0
    %2045 = vmatpush1.msra.mxu0 0.0
    %2046 = vmatprep.subr.mxu0 0.0
    %2047 = vmatpush1.msra.mxu0 0.0
    %2048 = vmatprep.subr.mxu0 0.0
    %2049 = vmatpush1.msra.mxu0 0.0
    %2050 = vmatprep.subr.mxu0 0.0
    %2051 = vmatpush1.msra.mxu0 0.0
    %2052 = vmatprep.subr.mxu0 0.0
    %2053 = vmatpush1.msra.mxu0 0.0
    %2054 = vmatprep.subr.mxu0 0.0
    %2055 = vmatpush1.msra.mxu0 0.0
    %2056 = vmatprep.subr.mxu0 0.0
    %2057 = vmatpush1.msra.mxu0 0.0
    %2058 = vmatprep.subr.mxu0 0.0
    %2059 = vmatpush1.msra.mxu0 0.0
    %2060 = vmatprep.subr.mxu0 0.0
    %2061 = vmatpush1.msra.mxu0 0.0
    %2062 = vmatprep.subr.mxu0 0.0
    %2063 = vmatpush1.msra.mxu0 0.0
    %2064 = vmatprep.subr.mxu0 0.0
    %2065 = vmatpush1.msra.mxu0 0.0
    %2066 = vmatprep.subr.mxu0 0.0
    %2067 = vmatpush1.msra.mxu0 0.0
    %2068 = vmatprep.subr.mxu0 0.0
    %2069 = vmatpush1.msra.mxu0 0.0
    %2070 = vmatprep.subr.mxu0 0.0
    %2071 = vmatpush1.msra.mxu0 0.0
    %2072 = vmatprep.subr.mxu0 0.0
    %2073 = vmatpush1.msra.mxu0 0.0
    %2074 = vmatprep.subr.mxu0 0.0
    %2075 = vmatpush1.msra.mxu0 0.0
    %2076 = vmatprep.subr.mxu0 0.0
    %2077 = vmatpush1.msra.mxu0 0.0
    %2078 = vmatprep.subr.mxu0 0.0
    %2079 = vmatpush1.msra.mxu0 0.0
    %2080 = vmatprep.subr.mxu0 0.0
    %2081 = vmatpush1.msra.mxu0 0.0
    %2082 = vmatprep.subr.mxu0 0.0
    %2083 = vmatpush1.msra.mxu0 0.0
    %2084 = vmatprep.subr.mxu0 0.0
    %2085 = vmatpush1.msra.mxu0 0.0
    %2086 = vmatprep.subr.mxu0 0.0
    %2087 = vmatpush1.msra.mxu0 0.0
    %2088 = vmatprep.subr.mxu0 0.0
    %2089 = vmatpush1.msra.mxu0 0.0
    %2090 = vmatprep.mubr.f32.mxu0 0.0
    %2091 = vmatmul.mubr.f32.gmra.mrb[0].mxu0 %v2015
    %v2092 = vpop.f32.mrb[0].mxu0
    %v2093 = vadd.f32 0.0, %v2092
    %v2094 = vpop.f32.mrb[0].mxu0
    %2095 = vmatprep.mubr.f32.mxu0 0.0
    %2096 = vmatmul.mubr.f32.gmra.mrb[0].mxu0 %v2018
    %v2097 = vpop.f32.mrb[0].mxu0
    %v2098 = vadd.f32 0.0, %v2097
    %v2099 = vpop.f32.mrb[0].mxu0
    %2100 = vmatprep.mubr.f32.mxu0 0.0
    %2101 = vmatmul.mubr.f32.gmra.mrb[0].mxu0 %v2021
    %v2102 = vpop.f32.mrb[0].mxu0
    %v2103 = vadd.f32 0.0, %v2102
    %v2104 = vpop.f32.mrb[0].mxu0
    %2105 = vmatprep.mubr.f32.mxu0 0.0
    %2106 = vmatmul.mubr.f32.gmra.mrb[0].mxu0 %v2024
    %v2107 = vpop.f32.mrb[0].mxu0
    %v2108 = vadd.f32 0.0, %v2107
    %v2109 = vpop.f32.mrb[0].mxu0
    %2110 = vdwg.mxu0
    %v2111 = vadd.f32 %v2005, %v2093
    %v2112 = vadd.f32 %v2006, %v2098
    %v2113 = vadd.f32 %v2007, %v2103
    %v2114 = vadd.f32 %v2008, %v2108
    %s2115 = scalar_lea.vmem %s4, 320
    %v2116 = vld [vmem:[%s2115] sm:$0xff]
    %v2117 = vld [vmem:[%s2115 + $0x8] sm:$0xff]
    %v2118 = vld [vmem:[%s2115 + $0x10] sm:$0xff]
    %v2119 = vld [vmem:[%s2115 + $0x18] sm:$0xff]
    %v2121 = vsel %vm1072, %v945, 0
    %v2124 = vsel %vm1072, %v950, 0
    %v2127 = vsel %vm1072, %v955, 0
    %v2130 = vsel %vm1072, %v960, 0
    %2132 = vmatprep.subr.mxu0 0.0
    %2133 = vmatpush1.msra.mxu0 %v2116
    %2134 = vmatprep.subr.mxu0 0.0
    %2135 = vmatpush1.msra.mxu0 %v2117
    %2136 = vmatprep.subr.mxu0 0.0
    %2137 = vmatpush1.msra.mxu0 %v2118
    %2138 = vmatprep.subr.mxu0 0.0
    %2139 = vmatpush1.msra.mxu0 %v2119
    %2140 = vmatprep.subr.mxu0 0.0
    %2141 = vmatpush1.msra.mxu0 0.0
    %2142 = vmatprep.subr.mxu0 0.0
    %2143 = vmatpush1.msra.mxu0 0.0
    %2144 = vmatprep.subr.mxu0 0.0
    %2145 = vmatpush1.msra.mxu0 0.0
    %2146 = vmatprep.subr.mxu0 0.0
    %2147 = vmatpush1.msra.mxu0 0.0
    %2148 = vmatprep.subr.mxu0 0.0
    %2149 = vmatpush1.msra.mxu0 0.0
    %2150 = vmatprep.subr.mxu0 0.0
    %2151 = vmatpush1.msra.mxu0 0.0
    %2152 = vmatprep.subr.mxu0 0.0
    %2153 = vmatpush1.msra.mxu0 0.0
    %2154 = vmatprep.subr.mxu0 0.0
    %2155 = vmatpush1.msra.mxu0 0.0
    %2156 = vmatprep.subr.mxu0 0.0
    %2157 = vmatpush1.msra.mxu0 0.0
    %2158 = vmatprep.subr.mxu0 0.0
    %2159 = vmatpush1.msra.mxu0 0.0
    %2160 = vmatprep.subr.mxu0 0.0
    %2161 = vmatpush1.msra.mxu0 0.0
    %2162 = vmatprep.subr.mxu0 0.0
    %2163 = vmatpush1.msra.mxu0 0.0
    %2164 = vmatprep.subr.mxu0 0.0
    %2165 = vmatpush1.msra.mxu0 0.0
    %2166 = vmatprep.subr.mxu0 0.0
    %2167 = vmatpush1.msra.mxu0 0.0
    %2168 = vmatprep.subr.mxu0 0.0
    %2169 = vmatpush1.msra.mxu0 0.0
    %2170 = vmatprep.subr.mxu0 0.0
    %2171 = vmatpush1.msra.mxu0 0.0
    %2172 = vmatprep.subr.mxu0 0.0
    %2173 = vmatpush1.msra.mxu0 0.0
    %2174 = vmatprep.subr.mxu0 0.0
    %2175 = vmatpush1.msra.mxu0 0.0
    %2176 = vmatprep.subr.mxu0 0.0
    %2177 = vmatpush1.msra.mxu0 0.0
    %2178 = vmatprep.subr.mxu0 0.0
    %2179 = vmatpush1.msra.mxu0 0.0
    %2180 = vmatprep.subr.mxu0 0.0
    %2181 = vmatpush1.msra.mxu0 0.0
    %2182 = vmatprep.subr.mxu0 0.0
    %2183 = vmatpush1.msra.mxu0 0.0
    %2184 = vmatprep.subr.mxu0 0.0
    %2185 = vmatpush1.msra.mxu0 0.0
    %2186 = vmatprep.subr.mxu0 0.0
    %2187 = vmatpush1.msra.mxu0 0.0
    %2188 = vmatprep.subr.mxu0 0.0
    %2189 = vmatpush1.msra.mxu0 0.0
    %2190 = vmatprep.subr.mxu0 0.0
    %2191 = vmatpush1.msra.mxu0 0.0
    %2192 = vmatprep.subr.mxu0 0.0
    %2193 = vmatpush1.msra.mxu0 0.0
    %2194 = vmatprep.subr.mxu0 0.0
    %2195 = vmatpush1.msra.mxu0 0.0
    %2196 = vmatprep.mubr.f32.mxu0 0.0
    %2197 = vmatmul.mubr.f32.gmra.mrb[0].mxu0 %v2121
    %v2198 = vpop.f32.mrb[0].mxu0
    %v2199 = vadd.f32 0.0, %v2198
    %v2200 = vpop.f32.mrb[0].mxu0
    %2201 = vmatprep.mubr.f32.mxu0 0.0
    %2202 = vmatmul.mubr.f32.gmra.mrb[0].mxu0 %v2124
    %v2203 = vpop.f32.mrb[0].mxu0
    %v2204 = vadd.f32 0.0, %v2203
    %v2205 = vpop.f32.mrb[0].mxu0
    %2206 = vmatprep.mubr.f32.mxu0 0.0
    %2207 = vmatmul.mubr.f32.gmra.mrb[0].mxu0 %v2127
    %v2208 = vpop.f32.mrb[0].mxu0
    %v2209 = vadd.f32 0.0, %v2208
    %v2210 = vpop.f32.mrb[0].mxu0
    %2211 = vmatprep.mubr.f32.mxu0 0.0
    %2212 = vmatmul.mubr.f32.gmra.mrb[0].mxu0 %v2130
    %v2213 = vpop.f32.mrb[0].mxu0
    %v2214 = vadd.f32 0.0, %v2213
    %v2215 = vpop.f32.mrb[0].mxu0
    %2216 = vdwg.mxu0
    %v2217 = vadd.f32 %v2111, %v2199
    %v2218 = vadd.f32 %v2112, %v2204
    %v2219 = vadd.f32 %v2113, %v2209
    %v2220 = vadd.f32 %v2114, %v2214
    %s2221 = scalar_lea.vmem %s4, 352
    %v2222 = vld [vmem:[%s2221] sm:$0xff]
    %v2223 = vld [vmem:[%s2221 + $0x8] sm:$0xff]
    %v2224 = vld [vmem:[%s2221 + $0x10] sm:$0xff]
    %v2225 = vld [vmem:[%s2221 + $0x18] sm:$0xff]
    %v2227 = vsel %vm1072, %v965, 0
    %v2230 = vsel %vm1072, %v970, 0
    %v2233 = vsel %vm1072, %v975, 0
    %v2236 = vsel %vm1072, %v980, 0
    %2238 = vmatprep.subr.mxu0 0.0
    %2239 = vmatpush1.msra.mxu0 %v2222
    %2240 = vmatprep.subr.mxu0 0.0
    %2241 = vmatpush1.msra.mxu0 %v2223
    %2242 = vmatprep.subr.mxu0 0.0
    %2243 = vmatpush1.msra.mxu0 %v2224
    %2244 = vmatprep.subr.mxu0 0.0
    %2245 = vmatpush1.msra.mxu0 %v2225
    %2246 = vmatprep.subr.mxu0 0.0
    %2247 = vmatpush1.msra.mxu0 0.0
    %2248 = vmatprep.subr.mxu0 0.0
    %2249 = vmatpush1.msra.mxu0 0.0
    %2250 = vmatprep.subr.mxu0 0.0
    %2251 = vmatpush1.msra.mxu0 0.0
    %2252 = vmatprep.subr.mxu0 0.0
    %2253 = vmatpush1.msra.mxu0 0.0
    %2254 = vmatprep.subr.mxu0 0.0
    %2255 = vmatpush1.msra.mxu0 0.0
    %2256 = vmatprep.subr.mxu0 0.0
    %2257 = vmatpush1.msra.mxu0 0.0
    %2258 = vmatprep.subr.mxu0 0.0
    %2259 = vmatpush1.msra.mxu0 0.0
    %2260 = vmatprep.subr.mxu0 0.0
    %2261 = vmatpush1.msra.mxu0 0.0
    %2262 = vmatprep.subr.mxu0 0.0
    %2263 = vmatpush1.msra.mxu0 0.0
    %2264 = vmatprep.subr.mxu0 0.0
    %2265 = vmatpush1.msra.mxu0 0.0
    %2266 = vmatprep.subr.mxu0 0.0
    %2267 = vmatpush1.msra.mxu0 0.0
    %2268 = vmatprep.subr.mxu0 0.0
    %2269 = vmatpush1.msra.mxu0 0.0
    %2270 = vmatprep.subr.mxu0 0.0
    %2271 = vmatpush1.msra.mxu0 0.0
    %2272 = vmatprep.subr.mxu0 0.0
    %2273 = vmatpush1.msra.mxu0 0.0
    %2274 = vmatprep.subr.mxu0 0.0
    %2275 = vmatpush1.msra.mxu0 0.0
    %2276 = vmatprep.subr.mxu0 0.0
    %2277 = vmatpush1.msra.mxu0 0.0
    %2278 = vmatprep.subr.mxu0 0.0
    %2279 = vmatpush1.msra.mxu0 0.0
    %2280 = vmatprep.subr.mxu0 0.0
    %2281 = vmatpush1.msra.mxu0 0.0
    %2282 = vmatprep.subr.mxu0 0.0
    %2283 = vmatpush1.msra.mxu0 0.0
    %2284 = vmatprep.subr.mxu0 0.0
    %2285 = vmatpush1.msra.mxu0 0.0
    %2286 = vmatprep.subr.mxu0 0.0
    %2287 = vmatpush1.msra.mxu0 0.0
    %2288 = vmatprep.subr.mxu0 0.0
    %2289 = vmatpush1.msra.mxu0 0.0
    %2290 = vmatprep.subr.mxu0 0.0
    %2291 = vmatpush1.msra.mxu0 0.0
    %2292 = vmatprep.subr.mxu0 0.0
    %2293 = vmatpush1.msra.mxu0 0.0
    %2294 = vmatprep.subr.mxu0 0.0
    %2295 = vmatpush1.msra.mxu0 0.0
    %2296 = vmatprep.subr.mxu0 0.0
    %2297 = vmatpush1.msra.mxu0 0.0
    %2298 = vmatprep.subr.mxu0 0.0
    %2299 = vmatpush1.msra.mxu0 0.0
    %2300 = vmatprep.subr.mxu0 0.0
    %2301 = vmatpush1.msra.mxu0 0.0
    %2302 = vmatprep.mubr.f32.mxu0 0.0
    %2303 = vmatmul.mubr.f32.gmra.mrb[0].mxu0 %v2227
    %v2304 = vpop.f32.mrb[0].mxu0
    %v2305 = vadd.f32 0.0, %v2304
    %v2306 = vpop.f32.mrb[0].mxu0
    %2307 = vmatprep.mubr.f32.mxu0 0.0
    %2308 = vmatmul.mubr.f32.gmra.mrb[0].mxu0 %v2230
    %v2309 = vpop.f32.mrb[0].mxu0
    %v2310 = vadd.f32 0.0, %v2309
    %v2311 = vpop.f32.mrb[0].mxu0
    %2312 = vmatprep.mubr.f32.mxu0 0.0
    %2313 = vmatmul.mubr.f32.gmra.mrb[0].mxu0 %v2233
    %v2314 = vpop.f32.mrb[0].mxu0
    %v2315 = vadd.f32 0.0, %v2314
    %v2316 = vpop.f32.mrb[0].mxu0
    %2317 = vmatprep.mubr.f32.mxu0 0.0
    %2318 = vmatmul.mubr.f32.gmra.mrb[0].mxu0 %v2236
    %v2319 = vpop.f32.mrb[0].mxu0
    %v2320 = vadd.f32 0.0, %v2319
    %v2321 = vpop.f32.mrb[0].mxu0
    %2322 = vdwg.mxu0
    %v2323 = vadd.f32 %v2217, %v2305
    %v2324 = vadd.f32 %v2218, %v2310
    %v2325 = vadd.f32 %v2219, %v2315
    %v2326 = vadd.f32 %v2220, %v2320
    %s2327 = scalar_lea.vmem %s4, 384
    %v2328 = vld [vmem:[%s2327] sm:$0xff]
    %v2329 = vld [vmem:[%s2327 + $0x8] sm:$0xff]
    %v2330 = vld [vmem:[%s2327 + $0x10] sm:$0xff]
    %v2331 = vld [vmem:[%s2327 + $0x18] sm:$0xff]
    %v2333 = vsel %vm1072, %v985, 0
    %v2336 = vsel %vm1072, %v990, 0
    %v2339 = vsel %vm1072, %v995, 0
    %v2342 = vsel %vm1072, %v1000, 0
    %2344 = vmatprep.subr.mxu0 0.0
    %2345 = vmatpush1.msra.mxu0 %v2328
    %2346 = vmatprep.subr.mxu0 0.0
    %2347 = vmatpush1.msra.mxu0 %v2329
    %2348 = vmatprep.subr.mxu0 0.0
    %2349 = vmatpush1.msra.mxu0 %v2330
    %2350 = vmatprep.subr.mxu0 0.0
    %2351 = vmatpush1.msra.mxu0 %v2331
    %2352 = vmatprep.subr.mxu0 0.0
    %2353 = vmatpush1.msra.mxu0 0.0
    %2354 = vmatprep.subr.mxu0 0.0
    %2355 = vmatpush1.msra.mxu0 0.0
    %2356 = vmatprep.subr.mxu0 0.0
    %2357 = vmatpush1.msra.mxu0 0.0
    %2358 = vmatprep.subr.mxu0 0.0
    %2359 = vmatpush1.msra.mxu0 0.0
    %2360 = vmatprep.subr.mxu0 0.0
    %2361 = vmatpush1.msra.mxu0 0.0
    %2362 = vmatprep.subr.mxu0 0.0
    %2363 = vmatpush1.msra.mxu0 0.0
    %2364 = vmatprep.subr.mxu0 0.0
    %2365 = vmatpush1.msra.mxu0 0.0
    %2366 = vmatprep.subr.mxu0 0.0
    %2367 = vmatpush1.msra.mxu0 0.0
    %2368 = vmatprep.subr.mxu0 0.0
    %2369 = vmatpush1.msra.mxu0 0.0
    %2370 = vmatprep.subr.mxu0 0.0
    %2371 = vmatpush1.msra.mxu0 0.0
    %2372 = vmatprep.subr.mxu0 0.0
    %2373 = vmatpush1.msra.mxu0 0.0
    %2374 = vmatprep.subr.mxu0 0.0
    %2375 = vmatpush1.msra.mxu0 0.0
    %2376 = vmatprep.subr.mxu0 0.0
    %2377 = vmatpush1.msra.mxu0 0.0
    %2378 = vmatprep.subr.mxu0 0.0
    %2379 = vmatpush1.msra.mxu0 0.0
    %2380 = vmatprep.subr.mxu0 0.0
    %2381 = vmatpush1.msra.mxu0 0.0
    %2382 = vmatprep.subr.mxu0 0.0
    %2383 = vmatpush1.msra.mxu0 0.0
    %2384 = vmatprep.subr.mxu0 0.0
    %2385 = vmatpush1.msra.mxu0 0.0
    %2386 = vmatprep.subr.mxu0 0.0
    %2387 = vmatpush1.msra.mxu0 0.0
    %2388 = vmatprep.subr.mxu0 0.0
    %2389 = vmatpush1.msra.mxu0 0.0
    %2390 = vmatprep.subr.mxu0 0.0
    %2391 = vmatpush1.msra.mxu0 0.0
    %2392 = vmatprep.subr.mxu0 0.0
    %2393 = vmatpush1.msra.mxu0 0.0
    %2394 = vmatprep.subr.mxu0 0.0
    %2395 = vmatpush1.msra.mxu0 0.0
    %2396 = vmatprep.subr.mxu0 0.0
    %2397 = vmatpush1.msra.mxu0 0.0
    %2398 = vmatprep.subr.mxu0 0.0
    %2399 = vmatpush1.msra.mxu0 0.0
    %2400 = vmatprep.subr.mxu0 0.0
    %2401 = vmatpush1.msra.mxu0 0.0
    %2402 = vmatprep.subr.mxu0 0.0
    %2403 = vmatpush1.msra.mxu0 0.0
    %2404 = vmatprep.subr.mxu0 0.0
    %2405 = vmatpush1.msra.mxu0 0.0
    %2406 = vmatprep.subr.mxu0 0.0
    %2407 = vmatpush1.msra.mxu0 0.0
    %2408 = vmatprep.mubr.f32.mxu0 0.0
    %2409 = vmatmul.mubr.f32.gmra.mrb[0].mxu0 %v2333
    %v2410 = vpop.f32.mrb[0].mxu0
    %v2411 = vadd.f32 0.0, %v2410
    %v2412 = vpop.f32.mrb[0].mxu0
    %2413 = vmatprep.mubr.f32.mxu0 0.0
    %2414 = vmatmul.mubr.f32.gmra.mrb[0].mxu0 %v2336
    %v2415 = vpop.f32.mrb[0].mxu0
    %v2416 = vadd.f32 0.0, %v2415
    %v2417 = vpop.f32.mrb[0].mxu0
    %2418 = vmatprep.mubr.f32.mxu0 0.0
    %2419 = vmatmul.mubr.f32.gmra.mrb[0].mxu0 %v2339
    %v2420 = vpop.f32.mrb[0].mxu0
    %v2421 = vadd.f32 0.0, %v2420
    %v2422 = vpop.f32.mrb[0].mxu0
    %2423 = vmatprep.mubr.f32.mxu0 0.0
    %2424 = vmatmul.mubr.f32.gmra.mrb[0].mxu0 %v2342
    %v2425 = vpop.f32.mrb[0].mxu0
    %v2426 = vadd.f32 0.0, %v2425
    %v2427 = vpop.f32.mrb[0].mxu0
    %2428 = vdwg.mxu0
    %v2429 = vadd.f32 %v2323, %v2411
    %v2430 = vadd.f32 %v2324, %v2416
    %v2431 = vadd.f32 %v2325, %v2421
    %v2432 = vadd.f32 %v2326, %v2426
    %s2433 = scalar_lea.vmem %s4, 416
    %v2434 = vld [vmem:[%s2433] sm:$0xff]
    %v2435 = vld [vmem:[%s2433 + $0x8] sm:$0xff]
    %v2436 = vld [vmem:[%s2433 + $0x10] sm:$0xff]
    %v2437 = vld [vmem:[%s2433 + $0x18] sm:$0xff]
    %v2439 = vsel %vm1072, %v1005, 0
    %v2442 = vsel %vm1072, %v1010, 0
    %v2445 = vsel %vm1072, %v1015, 0
    %v2448 = vsel %vm1072, %v1020, 0
    %2450 = vmatprep.subr.mxu0 0.0
    %2451 = vmatpush1.msra.mxu0 %v2434
    %2452 = vmatprep.subr.mxu0 0.0
    %2453 = vmatpush1.msra.mxu0 %v2435
    %2454 = vmatprep.subr.mxu0 0.0
    %2455 = vmatpush1.msra.mxu0 %v2436
    %2456 = vmatprep.subr.mxu0 0.0
    %2457 = vmatpush1.msra.mxu0 %v2437
    %2458 = vmatprep.subr.mxu0 0.0
    %2459 = vmatpush1.msra.mxu0 0.0
    %2460 = vmatprep.subr.mxu0 0.0
    %2461 = vmatpush1.msra.mxu0 0.0
    %2462 = vmatprep.subr.mxu0 0.0
    %2463 = vmatpush1.msra.mxu0 0.0
    %2464 = vmatprep.subr.mxu0 0.0
    %2465 = vmatpush1.msra.mxu0 0.0
    %2466 = vmatprep.subr.mxu0 0.0
    %2467 = vmatpush1.msra.mxu0 0.0
    %2468 = vmatprep.subr.mxu0 0.0
    %2469 = vmatpush1.msra.mxu0 0.0
    %2470 = vmatprep.subr.mxu0 0.0
    %2471 = vmatpush1.msra.mxu0 0.0
    %2472 = vmatprep.subr.mxu0 0.0
    %2473 = vmatpush1.msra.mxu0 0.0
    %2474 = vmatprep.subr.mxu0 0.0
    %2475 = vmatpush1.msra.mxu0 0.0
    %2476 = vmatprep.subr.mxu0 0.0
    %2477 = vmatpush1.msra.mxu0 0.0
    %2478 = vmatprep.subr.mxu0 0.0
    %2479 = vmatpush1.msra.mxu0 0.0
    %2480 = vmatprep.subr.mxu0 0.0
    %2481 = vmatpush1.msra.mxu0 0.0
    %2482 = vmatprep.subr.mxu0 0.0
    %2483 = vmatpush1.msra.mxu0 0.0
    %2484 = vmatprep.subr.mxu0 0.0
    %2485 = vmatpush1.msra.mxu0 0.0
    %2486 = vmatprep.subr.mxu0 0.0
    %2487 = vmatpush1.msra.mxu0 0.0
    %2488 = vmatprep.subr.mxu0 0.0
    %2489 = vmatpush1.msra.mxu0 0.0
    %2490 = vmatprep.subr.mxu0 0.0
    %2491 = vmatpush1.msra.mxu0 0.0
    %2492 = vmatprep.subr.mxu0 0.0
    %2493 = vmatpush1.msra.mxu0 0.0
    %2494 = vmatprep.subr.mxu0 0.0
    %2495 = vmatpush1.msra.mxu0 0.0
    %2496 = vmatprep.subr.mxu0 0.0
    %2497 = vmatpush1.msra.mxu0 0.0
    %2498 = vmatprep.subr.mxu0 0.0
    %2499 = vmatpush1.msra.mxu0 0.0
    %2500 = vmatprep.subr.mxu0 0.0
    %2501 = vmatpush1.msra.mxu0 0.0
    %2502 = vmatprep.subr.mxu0 0.0
    %2503 = vmatpush1.msra.mxu0 0.0
    %2504 = vmatprep.subr.mxu0 0.0
    %2505 = vmatpush1.msra.mxu0 0.0
    %2506 = vmatprep.subr.mxu0 0.0
    %2507 = vmatpush1.msra.mxu0 0.0
    %2508 = vmatprep.subr.mxu0 0.0
    %2509 = vmatpush1.msra.mxu0 0.0
    %2510 = vmatprep.subr.mxu0 0.0
    %2511 = vmatpush1.msra.mxu0 0.0
    %2512 = vmatprep.subr.mxu0 0.0
    %2513 = vmatpush1.msra.mxu0 0.0
    %2514 = vmatprep.mubr.f32.mxu0 0.0
    %2515 = vmatmul.mubr.f32.gmra.mrb[0].mxu0 %v2439
    %v2516 = vpop.f32.mrb[0].mxu0
    %v2517 = vadd.f32 0.0, %v2516
    %v2518 = vpop.f32.mrb[0].mxu0
    %2519 = vmatprep.mubr.f32.mxu0 0.0
    %2520 = vmatmul.mubr.f32.gmra.mrb[0].mxu0 %v2442
    %v2521 = vpop.f32.mrb[0].mxu0
    %v2522 = vadd.f32 0.0, %v2521
    %v2523 = vpop.f32.mrb[0].mxu0
    %2524 = vmatprep.mubr.f32.mxu0 0.0
    %2525 = vmatmul.mubr.f32.gmra.mrb[0].mxu0 %v2445
    %v2526 = vpop.f32.mrb[0].mxu0
    %v2527 = vadd.f32 0.0, %v2526
    %v2528 = vpop.f32.mrb[0].mxu0
    %2529 = vmatprep.mubr.f32.mxu0 0.0
    %2530 = vmatmul.mubr.f32.gmra.mrb[0].mxu0 %v2448
    %v2531 = vpop.f32.mrb[0].mxu0
    %v2532 = vadd.f32 0.0, %v2531
    %v2533 = vpop.f32.mrb[0].mxu0
    %2534 = vdwg.mxu0
    %v2535 = vadd.f32 %v2429, %v2517
    %v2536 = vadd.f32 %v2430, %v2522
    %v2537 = vadd.f32 %v2431, %v2527
    %v2538 = vadd.f32 %v2432, %v2532
    %s2539 = scalar_lea.vmem %s4, 448
    %v2540 = vld [vmem:[%s2539] sm:$0xff]
    %v2541 = vld [vmem:[%s2539 + $0x8] sm:$0xff]
    %v2542 = vld [vmem:[%s2539 + $0x10] sm:$0xff]
    %v2543 = vld [vmem:[%s2539 + $0x18] sm:$0xff]
    %v2545 = vsel %vm1072, %v1025, 0
    %v2548 = vsel %vm1072, %v1030, 0
    %v2551 = vsel %vm1072, %v1035, 0
    %v2554 = vsel %vm1072, %v1040, 0
    %2556 = vmatprep.subr.mxu0 0.0
    %2557 = vmatpush1.msra.mxu0 %v2540
    %2558 = vmatprep.subr.mxu0 0.0
    %2559 = vmatpush1.msra.mxu0 %v2541
    %2560 = vmatprep.subr.mxu0 0.0
    %2561 = vmatpush1.msra.mxu0 %v2542
    %2562 = vmatprep.subr.mxu0 0.0
    %2563 = vmatpush1.msra.mxu0 %v2543
    %2564 = vmatprep.subr.mxu0 0.0
    %2565 = vmatpush1.msra.mxu0 0.0
    %2566 = vmatprep.subr.mxu0 0.0
    %2567 = vmatpush1.msra.mxu0 0.0
    %2568 = vmatprep.subr.mxu0 0.0
    %2569 = vmatpush1.msra.mxu0 0.0
    %2570 = vmatprep.subr.mxu0 0.0
    %2571 = vmatpush1.msra.mxu0 0.0
    %2572 = vmatprep.subr.mxu0 0.0
    %2573 = vmatpush1.msra.mxu0 0.0
    %2574 = vmatprep.subr.mxu0 0.0
    %2575 = vmatpush1.msra.mxu0 0.0
    %2576 = vmatprep.subr.mxu0 0.0
    %2577 = vmatpush1.msra.mxu0 0.0
    %2578 = vmatprep.subr.mxu0 0.0
    %2579 = vmatpush1.msra.mxu0 0.0
    %2580 = vmatprep.subr.mxu0 0.0
    %2581 = vmatpush1.msra.mxu0 0.0
    %2582 = vmatprep.subr.mxu0 0.0
    %2583 = vmatpush1.msra.mxu0 0.0
    %2584 = vmatprep.subr.mxu0 0.0
    %2585 = vmatpush1.msra.mxu0 0.0
    %2586 = vmatprep.subr.mxu0 0.0
    %2587 = vmatpush1.msra.mxu0 0.0
    %2588 = vmatprep.subr.mxu0 0.0
    %2589 = vmatpush1.msra.mxu0 0.0
    %2590 = vmatprep.subr.mxu0 0.0
    %2591 = vmatpush1.msra.mxu0 0.0
    %2592 = vmatprep.subr.mxu0 0.0
    %2593 = vmatpush1.msra.mxu0 0.0
    %2594 = vmatprep.subr.mxu0 0.0
    %2595 = vmatpush1.msra.mxu0 0.0
    %2596 = vmatprep.subr.mxu0 0.0
    %2597 = vmatpush1.msra.mxu0 0.0
    %2598 = vmatprep.subr.mxu0 0.0
    %2599 = vmatpush1.msra.mxu0 0.0
    %2600 = vmatprep.subr.mxu0 0.0
    %2601 = vmatpush1.msra.mxu0 0.0
    %2602 = vmatprep.subr.mxu0 0.0
    %2603 = vmatpush1.msra.mxu0 0.0
    %2604 = vmatprep.subr.mxu0 0.0
    %2605 = vmatpush1.msra.mxu0 0.0
    %2606 = vmatprep.subr.mxu0 0.0
    %2607 = vmatpush1.msra.mxu0 0.0
    %2608 = vmatprep.subr.mxu0 0.0
    %2609 = vmatpush1.msra.mxu0 0.0
    %2610 = vmatprep.subr.mxu0 0.0
    %2611 = vmatpush1.msra.mxu0 0.0
    %2612 = vmatprep.subr.mxu0 0.0
    %2613 = vmatpush1.msra.mxu0 0.0
    %2614 = vmatprep.subr.mxu0 0.0
    %2615 = vmatpush1.msra.mxu0 0.0
    %2616 = vmatprep.subr.mxu0 0.0
    %2617 = vmatpush1.msra.mxu0 0.0
    %2618 = vmatprep.subr.mxu0 0.0
    %2619 = vmatpush1.msra.mxu0 0.0
    %2620 = vmatprep.mubr.f32.mxu0 0.0
    %2621 = vmatmul.mubr.f32.gmra.mrb[0].mxu0 %v2545
    %v2622 = vpop.f32.mrb[0].mxu0
    %v2623 = vadd.f32 0.0, %v2622
    %v2624 = vpop.f32.mrb[0].mxu0
    %2625 = vmatprep.mubr.f32.mxu0 0.0
    %2626 = vmatmul.mubr.f32.gmra.mrb[0].mxu0 %v2548
    %v2627 = vpop.f32.mrb[0].mxu0
    %v2628 = vadd.f32 0.0, %v2627
    %v2629 = vpop.f32.mrb[0].mxu0
    %2630 = vmatprep.mubr.f32.mxu0 0.0
    %2631 = vmatmul.mubr.f32.gmra.mrb[0].mxu0 %v2551
    %v2632 = vpop.f32.mrb[0].mxu0
    %v2633 = vadd.f32 0.0, %v2632
    %v2634 = vpop.f32.mrb[0].mxu0
    %2635 = vmatprep.mubr.f32.mxu0 0.0
    %2636 = vmatmul.mubr.f32.gmra.mrb[0].mxu0 %v2554
    %v2637 = vpop.f32.mrb[0].mxu0
    %v2638 = vadd.f32 0.0, %v2637
    %v2639 = vpop.f32.mrb[0].mxu0
    %2640 = vdwg.mxu0
    %v2641 = vadd.f32 %v2535, %v2623
    %v2642 = vadd.f32 %v2536, %v2628
    %v2643 = vadd.f32 %v2537, %v2633
    %v2644 = vadd.f32 %v2538, %v2638
    %s2645 = scalar_lea.vmem %s4, 480
    %v2646 = vld [vmem:[%s2645] sm:$0xff]
    %v2647 = vld [vmem:[%s2645 + $0x8] sm:$0xff]
    %v2648 = vld [vmem:[%s2645 + $0x10] sm:$0xff]
    %v2649 = vld [vmem:[%s2645 + $0x18] sm:$0xff]
    %v2651 = vsel %vm1072, %v1045, 0
    %v2654 = vsel %vm1072, %v1050, 0
    %v2657 = vsel %vm1072, %v1055, 0
    %v2660 = vsel %vm1072, %v1060, 0
    %2662 = vmatprep.subr.mxu0 0.0
    %2663 = vmatpush1.msra.mxu0 %v2646
    %2664 = vmatprep.subr.mxu0 0.0
    %2665 = vmatpush1.msra.mxu0 %v2647
    %2666 = vmatprep.subr.mxu0 0.0
    %2667 = vmatpush1.msra.mxu0 %v2648
    %2668 = vmatprep.subr.mxu0 0.0
    %2669 = vmatpush1.msra.mxu0 %v2649
    %2670 = vmatprep.subr.mxu0 0.0
    %2671 = vmatpush1.msra.mxu0 0.0
    %2672 = vmatprep.subr.mxu0 0.0
    %2673 = vmatpush1.msra.mxu0 0.0
    %2674 = vmatprep.subr.mxu0 0.0
    %2675 = vmatpush1.msra.mxu0 0.0
    %2676 = vmatprep.subr.mxu0 0.0
    %2677 = vmatpush1.msra.mxu0 0.0
    %2678 = vmatprep.subr.mxu0 0.0
    %2679 = vmatpush1.msra.mxu0 0.0
    %2680 = vmatprep.subr.mxu0 0.0
    %2681 = vmatpush1.msra.mxu0 0.0
    %2682 = vmatprep.subr.mxu0 0.0
    %2683 = vmatpush1.msra.mxu0 0.0
    %2684 = vmatprep.subr.mxu0 0.0
    %2685 = vmatpush1.msra.mxu0 0.0
    %2686 = vmatprep.subr.mxu0 0.0
    %2687 = vmatpush1.msra.mxu0 0.0
    %2688 = vmatprep.subr.mxu0 0.0
    %2689 = vmatpush1.msra.mxu0 0.0
    %2690 = vmatprep.subr.mxu0 0.0
    %2691 = vmatpush1.msra.mxu0 0.0
    %2692 = vmatprep.subr.mxu0 0.0
    %2693 = vmatpush1.msra.mxu0 0.0
    %2694 = vmatprep.subr.mxu0 0.0
    %2695 = vmatpush1.msra.mxu0 0.0
    %2696 = vmatprep.subr.mxu0 0.0
    %2697 = vmatpush1.msra.mxu0 0.0
    %2698 = vmatprep.subr.mxu0 0.0
    %2699 = vmatpush1.msra.mxu0 0.0
    %2700 = vmatprep.subr.mxu0 0.0
    %2701 = vmatpush1.msra.mxu0 0.0
    %2702 = vmatprep.subr.mxu0 0.0
    %2703 = vmatpush1.msra.mxu0 0.0
    %2704 = vmatprep.subr.mxu0 0.0
    %2705 = vmatpush1.msra.mxu0 0.0
    %2706 = vmatprep.subr.mxu0 0.0
    %2707 = vmatpush1.msra.mxu0 0.0
    %2708 = vmatprep.subr.mxu0 0.0
    %2709 = vmatpush1.msra.mxu0 0.0
    %2710 = vmatprep.subr.mxu0 0.0
    %2711 = vmatpush1.msra.mxu0 0.0
    %2712 = vmatprep.subr.mxu0 0.0
    %2713 = vmatpush1.msra.mxu0 0.0
    %2714 = vmatprep.subr.mxu0 0.0
    %2715 = vmatpush1.msra.mxu0 0.0
    %2716 = vmatprep.subr.mxu0 0.0
    %2717 = vmatpush1.msra.mxu0 0.0
    %2718 = vmatprep.subr.mxu0 0.0
    %2719 = vmatpush1.msra.mxu0 0.0
    %2720 = vmatprep.subr.mxu0 0.0
    %2721 = vmatpush1.msra.mxu0 0.0
    %2722 = vmatprep.subr.mxu0 0.0
    %2723 = vmatpush1.msra.mxu0 0.0
    %2724 = vmatprep.subr.mxu0 0.0
    %2725 = vmatpush1.msra.mxu0 0.0
    %2726 = vmatprep.mubr.f32.mxu0 0.0
    %2727 = vmatmul.mubr.f32.gmra.mrb[0].mxu0 %v2651
    %v2728 = vpop.f32.mrb[0].mxu0
    %v2729 = vadd.f32 0.0, %v2728
    %v2730 = vpop.f32.mrb[0].mxu0
    %2731 = vmatprep.mubr.f32.mxu0 0.0
    %2732 = vmatmul.mubr.f32.gmra.mrb[0].mxu0 %v2654
    %v2733 = vpop.f32.mrb[0].mxu0
    %v2734 = vadd.f32 0.0, %v2733
    %v2735 = vpop.f32.mrb[0].mxu0
    %2736 = vmatprep.mubr.f32.mxu0 0.0
    %2737 = vmatmul.mubr.f32.gmra.mrb[0].mxu0 %v2657
    %v2738 = vpop.f32.mrb[0].mxu0
    %v2739 = vadd.f32 0.0, %v2738
    %v2740 = vpop.f32.mrb[0].mxu0
    %2741 = vmatprep.mubr.f32.mxu0 0.0
    %2742 = vmatmul.mubr.f32.gmra.mrb[0].mxu0 %v2660
    %v2743 = vpop.f32.mrb[0].mxu0
    %v2744 = vadd.f32 0.0, %v2743
    %v2745 = vpop.f32.mrb[0].mxu0
    %2746 = vdwg.mxu0
    %v2747 = vadd.f32 %v2641, %v2729
    %v2748 = vadd.f32 %v2642, %v2734
    %v2749 = vadd.f32 %v2643, %v2739
    %v2750 = vadd.f32 %v2644, %v2744
    %v2751 = vld [vmem:[%s5] sm:$0x1]
    %v2753 = vlaneseq
    %v2754 = vshrl.u32 %v2753, 7
    %v2755 = vsub.s32 0, %v2754
    %v2756 = vrot.slane %v2751, %v2755
    %v2758 = vadd.f32 %v2747, %v2756
    %v2759 = vadd.f32 %v2748, %v2756
    %v2760 = vadd.f32 %v2749, %v2756
    %v2761 = vadd.f32 %v2750, %v2756
    %v2762 = vmax.f32 %v2758, 0.0
    %v2763 = vmax.f32 %v2759, 0.0
    %v2764 = vmax.f32 %v2760, 0.0
    %v2765 = vmax.f32 %v2761, 0.0
    %v2766 = vld [vmem:[%s6] sm:$0xf]
    %v2767 = vld [vmem:[%s6 + $0x4] sm:$0xf]
    %v2768 = vld [vmem:[%s6 + $0x8] sm:$0xf]
    %v2769 = vld [vmem:[%s6 + $0xc] sm:$0xf]
    %v2770 = vld [vmem:[%s6 + $0x10] sm:$0xf]
    %v2771 = vld [vmem:[%s6 + $0x14] sm:$0xf]
    %v2772 = vld [vmem:[%s6 + $0x18] sm:$0xf]
    %v2773 = vld [vmem:[%s6 + $0x1c] sm:$0xf]
    %v2774 = vunpack.c.l.bf16 %v2766
    %v2775 = vunpack.c.l.bf16 %v2767
    %v2776 = vunpack.c.l.bf16 %v2768
    %v2777 = vunpack.c.l.bf16 %v2769
    %v2778 = vunpack.c.l.bf16 %v2770
    %v2779 = vunpack.c.l.bf16 %v2771
    %v2780 = vunpack.c.l.bf16 %v2772
    %v2781 = vunpack.c.l.bf16 %v2773
    %v2783 = vsel %vm1072, %v2774, 0
    %v2786 = vsel %vm1072, %v2775, 0
    %v2789 = vsel %vm1072, %v2776, 0
    %v2792 = vsel %vm1072, %v2777, 0
    %v2795 = vsel %vm1072, %v2778, 0
    %v2798 = vsel %vm1072, %v2779, 0
    %v2801 = vsel %vm1072, %v2780, 0
    %v2804 = vsel %vm1072, %v2781, 0
    %2806 = vmatprep.subr.mxu0 0.0
    %2807 = vmatpush1.msra.mxu0 %v2762
    %2808 = vmatprep.subr.mxu0 0.0
    %2809 = vmatpush1.msra.mxu0 %v2763
    %2810 = vmatprep.subr.mxu0 0.0
    %2811 = vmatpush1.msra.mxu0 %v2764
    %2812 = vmatprep.subr.mxu0 0.0
    %2813 = vmatpush1.msra.mxu0 %v2765
    %2814 = vmatprep.subr.mxu0 0.0
    %2815 = vmatpush1.msra.mxu0 0.0
    %2816 = vmatprep.subr.mxu0 0.0
    %2817 = vmatpush1.msra.mxu0 0.0
    %2818 = vmatprep.subr.mxu0 0.0
    %2819 = vmatpush1.msra.mxu0 0.0
    %2820 = vmatprep.subr.mxu0 0.0
    %2821 = vmatpush1.msra.mxu0 0.0
    %2822 = vmatprep.subr.mxu0 0.0
    %2823 = vmatpush1.msra.mxu0 0.0
    %2824 = vmatprep.subr.mxu0 0.0
    %2825 = vmatpush1.msra.mxu0 0.0
    %2826 = vmatprep.subr.mxu0 0.0
    %2827 = vmatpush1.msra.mxu0 0.0
    %2828 = vmatprep.subr.mxu0 0.0
    %2829 = vmatpush1.msra.mxu0 0.0
    %2830 = vmatprep.subr.mxu0 0.0
    %2831 = vmatpush1.msra.mxu0 0.0
    %2832 = vmatprep.subr.mxu0 0.0
    %2833 = vmatpush1.msra.mxu0 0.0
    %2834 = vmatprep.subr.mxu0 0.0
    %2835 = vmatpush1.msra.mxu0 0.0
    %2836 = vmatprep.subr.mxu0 0.0
    %2837 = vmatpush1.msra.mxu0 0.0
    %2838 = vmatprep.subr.mxu0 0.0
    %2839 = vmatpush1.msra.mxu0 0.0
    %2840 = vmatprep.subr.mxu0 0.0
    %2841 = vmatpush1.msra.mxu0 0.0
    %2842 = vmatprep.subr.mxu0 0.0
    %2843 = vmatpush1.msra.mxu0 0.0
    %2844 = vmatprep.subr.mxu0 0.0
    %2845 = vmatpush1.msra.mxu0 0.0
    %2846 = vmatprep.subr.mxu0 0.0
    %2847 = vmatpush1.msra.mxu0 0.0
    %2848 = vmatprep.subr.mxu0 0.0
    %2849 = vmatpush1.msra.mxu0 0.0
    %2850 = vmatprep.subr.mxu0 0.0
    %2851 = vmatpush1.msra.mxu0 0.0
    %2852 = vmatprep.subr.mxu0 0.0
    %2853 = vmatpush1.msra.mxu0 0.0
    %2854 = vmatprep.subr.mxu0 0.0
    %2855 = vmatpush1.msra.mxu0 0.0
    %2856 = vmatprep.subr.mxu0 0.0
    %2857 = vmatpush1.msra.mxu0 0.0
    %2858 = vmatprep.subr.mxu0 0.0
    %2859 = vmatpush1.msra.mxu0 0.0
    %2860 = vmatprep.subr.mxu0 0.0
    %2861 = vmatpush1.msra.mxu0 0.0
    %2862 = vmatprep.subr.mxu0 0.0
    %2863 = vmatpush1.msra.mxu0 0.0
    %2864 = vmatprep.subr.mxu0 0.0
    %2865 = vmatpush1.msra.mxu0 0.0
    %2866 = vmatprep.subr.mxu0 0.0
    %2867 = vmatpush1.msra.mxu0 0.0
    %2868 = vmatprep.subr.mxu0 0.0
    %2869 = vmatpush1.msra.mxu0 0.0
    %2870 = vmatprep.mubr.f32.mxu0 0.0
    %2871 = vmatmul.mubr.f32.gmra.mrb[0].mxu0 %v2783
    %v2872 = vpop.f32.mrb[0].mxu0
    %v2873 = vadd.f32 0.0, %v2872
    %v2874 = vpop.f32.mrb[0].mxu0
    %2875 = vmatprep.mubr.f32.mxu0 0.0
    %2876 = vmatmul.mubr.f32.gmra.mrb[0].mxu0 %v2786
    %v2877 = vpop.f32.mrb[0].mxu0
    %v2878 = vadd.f32 0.0, %v2877
    %v2879 = vpop.f32.mrb[0].mxu0
    %2880 = vmatprep.mubr.f32.mxu0 0.0
    %2881 = vmatmul.mubr.f32.gmra.mrb[0].mxu0 %v2789
    %v2882 = vpop.f32.mrb[0].mxu0
    %v2883 = vadd.f32 0.0, %v2882
    %v2884 = vpop.f32.mrb[0].mxu0
    %2885 = vmatprep.mubr.f32.mxu0 0.0
    %2886 = vmatmul.mubr.f32.gmra.mrb[0].mxu0 %v2792
    %v2887 = vpop.f32.mrb[0].mxu0
    %v2888 = vadd.f32 0.0, %v2887
    %v2889 = vpop.f32.mrb[0].mxu0
    %2890 = vmatprep.mubr.f32.mxu0 0.0
    %2891 = vmatmul.mubr.f32.gmra.mrb[0].mxu0 %v2795
    %v2892 = vpop.f32.mrb[0].mxu0
    %v2893 = vadd.f32 0.0, %v2892
    %v2894 = vpop.f32.mrb[0].mxu0
    %2895 = vmatprep.mubr.f32.mxu0 0.0
    %2896 = vmatmul.mubr.f32.gmra.mrb[0].mxu0 %v2798
    %v2897 = vpop.f32.mrb[0].mxu0
    %v2898 = vadd.f32 0.0, %v2897
    %v2899 = vpop.f32.mrb[0].mxu0
    %2900 = vmatprep.mubr.f32.mxu0 0.0
    %2901 = vmatmul.mubr.f32.gmra.mrb[0].mxu0 %v2801
    %v2902 = vpop.f32.mrb[0].mxu0
    %v2903 = vadd.f32 0.0, %v2902
    %v2904 = vpop.f32.mrb[0].mxu0
    %2905 = vmatprep.mubr.f32.mxu0 0.0
    %2906 = vmatmul.mubr.f32.gmra.mrb[0].mxu0 %v2804
    %v2907 = vpop.f32.mrb[0].mxu0
    %v2908 = vadd.f32 0.0, %v2907
    %v2909 = vpop.f32.mrb[0].mxu0
    %2910 = vdwg.mxu0
    %v2911 = vld [vmem:[%s7] sm:$0xff]
    %v2912 = vld [vmem:[%s7 + $0x8] sm:$0xff]
    %v2913 = vld [vmem:[%s7 + $0x10] sm:$0xff]
    %v2914 = vld [vmem:[%s7 + $0x18] sm:$0xff]
    %v2915 = vld [vmem:[%s7 + $0x20] sm:$0xff]
    %v2916 = vld [vmem:[%s7 + $0x28] sm:$0xff]
    %v2917 = vld [vmem:[%s7 + $0x30] sm:$0xff]
    %v2918 = vld [vmem:[%s7 + $0x38] sm:$0xff]
    %s2919 = scalar_lea.vmem %s7, 64
    %v2920 = vld [vmem:[%s2919] sm:$0xff]
    %v2921 = vld [vmem:[%s2919 + $0x8] sm:$0xff]
    %v2922 = vld [vmem:[%s2919 + $0x10] sm:$0xff]
    %v2923 = vld [vmem:[%s2919 + $0x18] sm:$0xff]
    %v2924 = vld [vmem:[%s2919 + $0x20] sm:$0xff]
    %v2925 = vld [vmem:[%s2919 + $0x28] sm:$0xff]
    %v2926 = vld [vmem:[%s2919 + $0x30] sm:$0xff]
    %v2927 = vld [vmem:[%s2919 + $0x38] sm:$0xff]
    %vm2928 = vcmask 523264
    %v2930 = vsel %vm2928, %v2883, 0
    %v2933 = vsel %vm2928, %v2888, 0
    %2935 = vmatprep.subr.mxu0 0.0
    %2936 = vmatpush1.msra.mxu0 %v2920
    %2937 = vmatprep.subr.mxu0 0.0
    %2938 = vmatpush1.msra.mxu0 %v2921
    %2939 = vmatprep.subr.mxu0 0.0
    %2940 = vmatpush1.msra.mxu0 %v2922
    %2941 = vmatprep.subr.mxu0 0.0
    %2942 = vmatpush1.msra.mxu0 %v2923
    %2943 = vmatprep.subr.mxu0 0.0
    %2944 = vmatpush1.msra.mxu0 %v2924
    %2945 = vmatprep.subr.mxu0 0.0
    %2946 = vmatpush1.msra.mxu0 %v2925
    %2947 = vmatprep.subr.mxu0 0.0
    %2948 = vmatpush1.msra.mxu0 %v2926
    %2949 = vmatprep.subr.mxu0 0.0
    %2950 = vmatpush1.msra.mxu0 %v2927
    %2951 = vmatprep.subr.mxu0 0.0
    %2952 = vmatpush1.msra.mxu0 0.0
    %2953 = vmatprep.subr.mxu0 0.0
    %2954 = vmatpush1.msra.mxu0 0.0
    %2955 = vmatprep.subr.mxu0 0.0
    %2956 = vmatpush1.msra.mxu0 0.0
    %2957 = vmatprep.subr.mxu0 0.0
    %2958 = vmatpush1.msra.mxu0 0.0
    %2959 = vmatprep.subr.mxu0 0.0
    %2960 = vmatpush1.msra.mxu0 0.0
    %2961 = vmatprep.subr.mxu0 0.0
    %2962 = vmatpush1.msra.mxu0 0.0
    %2963 = vmatprep.subr.mxu0 0.0
    %2964 = vmatpush1.msra.mxu0 0.0
    %2965 = vmatprep.subr.mxu0 0.0
    %2966 = vmatpush1.msra.mxu0 0.0
    %2967 = vmatprep.subr.mxu0 0.0
    %2968 = vmatpush1.msra.mxu0 0.0
    %2969 = vmatprep.subr.mxu0 0.0
    %2970 = vmatpush1.msra.mxu0 0.0
    %2971 = vmatprep.subr.mxu0 0.0
    %2972 = vmatpush1.msra.mxu0 0.0
    %2973 = vmatprep.subr.mxu0 0.0
    %2974 = vmatpush1.msra.mxu0 0.0
    %2975 = vmatprep.subr.mxu0 0.0
    %2976 = vmatpush1.msra.mxu0 0.0
    %2977 = vmatprep.subr.mxu0 0.0
    %2978 = vmatpush1.msra.mxu0 0.0
    %2979 = vmatprep.subr.mxu0 0.0
    %2980 = vmatpush1.msra.mxu0 0.0
    %2981 = vmatprep.subr.mxu0 0.0
    %2982 = vmatpush1.msra.mxu0 0.0
    %2983 = vmatprep.subr.mxu0 0.0
    %2984 = vmatpush1.msra.mxu0 0.0
    %2985 = vmatprep.subr.mxu0 0.0
    %2986 = vmatpush1.msra.mxu0 0.0
    %2987 = vmatprep.subr.mxu0 0.0
    %2988 = vmatpush1.msra.mxu0 0.0
    %2989 = vmatprep.subr.mxu0 0.0
    %2990 = vmatpush1.msra.mxu0 0.0
    %2991 = vmatprep.subr.mxu0 0.0
    %2992 = vmatpush1.msra.mxu0 0.0
    %2993 = vmatprep.subr.mxu0 0.0
    %2994 = vmatpush1.msra.mxu0 0.0
    %2995 = vmatprep.subr.mxu0 0.0
    %2996 = vmatpush1.msra.mxu0 0.0
    %2997 = vmatprep.subr.mxu0 0.0
    %2998 = vmatpush1.msra.mxu0 0.0
    %2999 = vmatprep.mubr.f32.mxu0 0.0
    %3000 = vmatmul.mubr.f32.gmra.mrb[0].mxu0 %v2930
    %v3001 = vpop.f32.mrb[0].mxu0
    %v3002 = vadd.f32 0.0, %v3001
    %v3003 = vpop.f32.mrb[0].mxu0
    %3004 = vmatprep.mubr.f32.mxu0 0.0
    %3005 = vmatmul.mubr.f32.gmra.mrb[0].mxu0 %v2933
    %v3006 = vpop.f32.mrb[0].mxu0
    %v3007 = vadd.f32 0.0, %v3006
    %v3008 = vpop.f32.mrb[0].mxu0
    %3009 = vdwg.mxu0
    %v3011 = vsel %vm2928, %v2873, 0
    %v3014 = vsel %vm2928, %v2878, 0
    %3016 = vmatprep.subr.mxu0 0.0
    %3017 = vmatpush1.msra.mxu0 %v2911
    %3018 = vmatprep.subr.mxu0 0.0
    %3019 = vmatpush1.msra.mxu0 %v2912
    %3020 = vmatprep.subr.mxu0 0.0
    %3021 = vmatpush1.msra.mxu0 %v2913
    %3022 = vmatprep.subr.mxu0 0.0
    %3023 = vmatpush1.msra.mxu0 %v2914
    %3024 = vmatprep.subr.mxu0 0.0
    %3025 = vmatpush1.msra.mxu0 %v2915
    %3026 = vmatprep.subr.mxu0 0.0
    %3027 = vmatpush1.msra.mxu0 %v2916
    %3028 = vmatprep.subr.mxu0 0.0
    %3029 = vmatpush1.msra.mxu0 %v2917
    %3030 = vmatprep.subr.mxu0 0.0
    %3031 = vmatpush1.msra.mxu0 %v2918
    %3032 = vmatprep.subr.mxu0 0.0
    %3033 = vmatpush1.msra.mxu0 0.0
    %3034 = vmatprep.subr.mxu0 0.0
    %3035 = vmatpush1.msra.mxu0 0.0
    %3036 = vmatprep.subr.mxu0 0.0
    %3037 = vmatpush1.msra.mxu0 0.0
    %3038 = vmatprep.subr.mxu0 0.0
    %3039 = vmatpush1.msra.mxu0 0.0
    %3040 = vmatprep.subr.mxu0 0.0
    %3041 = vmatpush1.msra.mxu0 0.0
    %3042 = vmatprep.subr.mxu0 0.0
    %3043 = vmatpush1.msra.mxu0 0.0
    %3044 = vmatprep.subr.mxu0 0.0
    %3045 = vmatpush1.msra.mxu0 0.0
    %3046 = vmatprep.subr.mxu0 0.0
    %3047 = vmatpush1.msra.mxu0 0.0
    %3048 = vmatprep.subr.mxu0 0.0
    %3049 = vmatpush1.msra.mxu0 0.0
    %3050 = vmatprep.subr.mxu0 0.0
    %3051 = vmatpush1.msra.mxu0 0.0
    %3052 = vmatprep.subr.mxu0 0.0
    %3053 = vmatpush1.msra.mxu0 0.0
    %3054 = vmatprep.subr.mxu0 0.0
    %3055 = vmatpush1.msra.mxu0 0.0
    %3056 = vmatprep.subr.mxu0 0.0
    %3057 = vmatpush1.msra.mxu0 0.0
    %3058 = vmatprep.subr.mxu0 0.0
    %3059 = vmatpush1.msra.mxu0 0.0
    %3060 = vmatprep.subr.mxu0 0.0
    %3061 = vmatpush1.msra.mxu0 0.0
    %3062 = vmatprep.subr.mxu0 0.0
    %3063 = vmatpush1.msra.mxu0 0.0
    %3064 = vmatprep.subr.mxu0 0.0
    %3065 = vmatpush1.msra.mxu0 0.0
    %3066 = vmatprep.subr.mxu0 0.0
    %3067 = vmatpush1.msra.mxu0 0.0
    %3068 = vmatprep.subr.mxu0 0.0
    %3069 = vmatpush1.msra.mxu0 0.0
    %3070 = vmatprep.subr.mxu0 0.0
    %3071 = vmatpush1.msra.mxu0 0.0
    %3072 = vmatprep.subr.mxu0 0.0
    %3073 = vmatpush1.msra.mxu0 0.0
    %3074 = vmatprep.subr.mxu0 0.0
    %3075 = vmatpush1.msra.mxu0 0.0
    %3076 = vmatprep.subr.mxu0 0.0
    %3077 = vmatpush1.msra.mxu0 0.0
    %3078 = vmatprep.subr.mxu0 0.0
    %3079 = vmatpush1.msra.mxu0 0.0
    %3080 = vmatprep.mubr.f32.mxu0 0.0
    %3081 = vmatmul.mubr.f32.gmra.mrb[0].mxu0 %v3011
    %v3082 = vpop.f32.mrb[0].mxu0
    %v3083 = vadd.f32 %v3002, %v3082
    %v3084 = vpop.f32.mrb[0].mxu0
    %3085 = vmatprep.mubr.f32.mxu0 0.0
    %3086 = vmatmul.mubr.f32.gmra.mrb[0].mxu0 %v3014
    %v3087 = vpop.f32.mrb[0].mxu0
    %v3088 = vadd.f32 %v3007, %v3087
    %v3089 = vpop.f32.mrb[0].mxu0
    %3090 = vdwg.mxu0
    %s3091 = scalar_lea.vmem %s7, 128
    %v3092 = vld [vmem:[%s3091] sm:$0xff]
    %v3093 = vld [vmem:[%s3091 + $0x8] sm:$0xff]
    %v3094 = vld [vmem:[%s3091 + $0x10] sm:$0xff]
    %v3095 = vld [vmem:[%s3091 + $0x18] sm:$0xff]
    %v3096 = vld [vmem:[%s3091 + $0x20] sm:$0xff]
    %v3097 = vld [vmem:[%s3091 + $0x28] sm:$0xff]
    %v3098 = vld [vmem:[%s3091 + $0x30] sm:$0xff]
    %v3099 = vld [vmem:[%s3091 + $0x38] sm:$0xff]
    %v3101 = vsel %vm2928, %v2893, 0
    %v3104 = vsel %vm2928, %v2898, 0
    %3106 = vmatprep.subr.mxu0 0.0
    %3107 = vmatpush1.msra.mxu0 %v3092
    %3108 = vmatprep.subr.mxu0 0.0
    %3109 = vmatpush1.msra.mxu0 %v3093
    %3110 = vmatprep.subr.mxu0 0.0
    %3111 = vmatpush1.msra.mxu0 %v3094
    %3112 = vmatprep.subr.mxu0 0.0
    %3113 = vmatpush1.msra.mxu0 %v3095
    %3114 = vmatprep.subr.mxu0 0.0
    %3115 = vmatpush1.msra.mxu0 %v3096
    %3116 = vmatprep.subr.mxu0 0.0
    %3117 = vmatpush1.msra.mxu0 %v3097
    %3118 = vmatprep.subr.mxu0 0.0
    %3119 = vmatpush1.msra.mxu0 %v3098
    %3120 = vmatprep.subr.mxu0 0.0
    %3121 = vmatpush1.msra.mxu0 %v3099
    %3122 = vmatprep.subr.mxu0 0.0
    %3123 = vmatpush1.msra.mxu0 0.0
    %3124 = vmatprep.subr.mxu0 0.0
    %3125 = vmatpush1.msra.mxu0 0.0
    %3126 = vmatprep.subr.mxu0 0.0
    %3127 = vmatpush1.msra.mxu0 0.0
    %3128 = vmatprep.subr.mxu0 0.0
    %3129 = vmatpush1.msra.mxu0 0.0
    %3130 = vmatprep.subr.mxu0 0.0
    %3131 = vmatpush1.msra.mxu0 0.0
    %3132 = vmatprep.subr.mxu0 0.0
    %3133 = vmatpush1.msra.mxu0 0.0
    %3134 = vmatprep.subr.mxu0 0.0
    %3135 = vmatpush1.msra.mxu0 0.0
    %3136 = vmatprep.subr.mxu0 0.0
    %3137 = vmatpush1.msra.mxu0 0.0
    %3138 = vmatprep.subr.mxu0 0.0
    %3139 = vmatpush1.msra.mxu0 0.0
    %3140 = vmatprep.subr.mxu0 0.0
    %3141 = vmatpush1.msra.mxu0 0.0
    %3142 = vmatprep.subr.mxu0 0.0
    %3143 = vmatpush1.msra.mxu0 0.0
    %3144 = vmatprep.subr.mxu0 0.0
    %3145 = vmatpush1.msra.mxu0 0.0
    %3146 = vmatprep.subr.mxu0 0.0
    %3147 = vmatpush1.msra.mxu0 0.0
    %3148 = vmatprep.subr.mxu0 0.0
    %3149 = vmatpush1.msra.mxu0 0.0
    %3150 = vmatprep.subr.mxu0 0.0
    %3151 = vmatpush1.msra.mxu0 0.0
    %3152 = vmatprep.subr.mxu0 0.0
    %3153 = vmatpush1.msra.mxu0 0.0
    %3154 = vmatprep.subr.mxu0 0.0
    %3155 = vmatpush1.msra.mxu0 0.0
    %3156 = vmatprep.subr.mxu0 0.0
    %3157 = vmatpush1.msra.mxu0 0.0
    %3158 = vmatprep.subr.mxu0 0.0
    %3159 = vmatpush1.msra.mxu0 0.0
    %3160 = vmatprep.subr.mxu0 0.0
    %3161 = vmatpush1.msra.mxu0 0.0
    %3162 = vmatprep.subr.mxu0 0.0
    %3163 = vmatpush1.msra.mxu0 0.0
    %3164 = vmatprep.subr.mxu0 0.0
    %3165 = vmatpush1.msra.mxu0 0.0
    %3166 = vmatprep.subr.mxu0 0.0
    %3167 = vmatpush1.msra.mxu0 0.0
    %3168 = vmatprep.subr.mxu0 0.0
    %3169 = vmatpush1.msra.mxu0 0.0
    %3170 = vmatprep.mubr.f32.mxu0 0.0
    %3171 = vmatmul.mubr.f32.gmra.mrb[0].mxu0 %v3101
    %v3172 = vpop.f32.mrb[0].mxu0
    %v3173 = vadd.f32 0.0, %v3172
    %v3174 = vpop.f32.mrb[0].mxu0
    %3175 = vmatprep.mubr.f32.mxu0 0.0
    %3176 = vmatmul.mubr.f32.gmra.mrb[0].mxu0 %v3104
    %v3177 = vpop.f32.mrb[0].mxu0
    %v3178 = vadd.f32 0.0, %v3177
    %v3179 = vpop.f32.mrb[0].mxu0
    %3180 = vdwg.mxu0
    %v3181 = vadd.f32 %v3083, %v3173
    %v3182 = vadd.f32 %v3088, %v3178
    %s3183 = scalar_lea.vmem %s7, 192
    %v3184 = vld [vmem:[%s3183] sm:$0xff]
    %v3185 = vld [vmem:[%s3183 + $0x8] sm:$0xff]
    %v3186 = vld [vmem:[%s3183 + $0x10] sm:$0xff]
    %v3187 = vld [vmem:[%s3183 + $0x18] sm:$0xff]
    %v3188 = vld [vmem:[%s3183 + $0x20] sm:$0xff]
    %v3189 = vld [vmem:[%s3183 + $0x28] sm:$0xff]
    %v3190 = vld [vmem:[%s3183 + $0x30] sm:$0xff]
    %v3191 = vld [vmem:[%s3183 + $0x38] sm:$0xff]
    %v3193 = vsel %vm2928, %v2903, 0
    %v3196 = vsel %vm2928, %v2908, 0
    %3198 = vmatprep.subr.mxu0 0.0
    %3199 = vmatpush1.msra.mxu0 %v3184
    %3200 = vmatprep.subr.mxu0 0.0
    %3201 = vmatpush1.msra.mxu0 %v3185
    %3202 = vmatprep.subr.mxu0 0.0
    %3203 = vmatpush1.msra.mxu0 %v3186
    %3204 = vmatprep.subr.mxu0 0.0
    %3205 = vmatpush1.msra.mxu0 %v3187
    %3206 = vmatprep.subr.mxu0 0.0
    %3207 = vmatpush1.msra.mxu0 %v3188
    %3208 = vmatprep.subr.mxu0 0.0
    %3209 = vmatpush1.msra.mxu0 %v3189
    %3210 = vmatprep.subr.mxu0 0.0
    %3211 = vmatpush1.msra.mxu0 %v3190
    %3212 = vmatprep.subr.mxu0 0.0
    %3213 = vmatpush1.msra.mxu0 %v3191
    %3214 = vmatprep.subr.mxu0 0.0
    %3215 = vmatpush1.msra.mxu0 0.0
    %3216 = vmatprep.subr.mxu0 0.0
    %3217 = vmatpush1.msra.mxu0 0.0
    %3218 = vmatprep.subr.mxu0 0.0
    %3219 = vmatpush1.msra.mxu0 0.0
    %3220 = vmatprep.subr.mxu0 0.0
    %3221 = vmatpush1.msra.mxu0 0.0
    %3222 = vmatprep.subr.mxu0 0.0
    %3223 = vmatpush1.msra.mxu0 0.0
    %3224 = vmatprep.subr.mxu0 0.0
    %3225 = vmatpush1.msra.mxu0 0.0
    %3226 = vmatprep.subr.mxu0 0.0
    %3227 = vmatpush1.msra.mxu0 0.0
    %3228 = vmatprep.subr.mxu0 0.0
    %3229 = vmatpush1.msra.mxu0 0.0
    %3230 = vmatprep.subr.mxu0 0.0
    %3231 = vmatpush1.msra.mxu0 0.0
    %3232 = vmatprep.subr.mxu0 0.0
    %3233 = vmatpush1.msra.mxu0 0.0
    %3234 = vmatprep.subr.mxu0 0.0
    %3235 = vmatpush1.msra.mxu0 0.0
    %3236 = vmatprep.subr.mxu0 0.0
    %3237 = vmatpush1.msra.mxu0 0.0
    %3238 = vmatprep.subr.mxu0 0.0
    %3239 = vmatpush1.msra.mxu0 0.0
    %3240 = vmatprep.subr.mxu0 0.0
    %3241 = vmatpush1.msra.mxu0 0.0
    %3242 = vmatprep.subr.mxu0 0.0
    %3243 = vmatpush1.msra.mxu0 0.0
    %3244 = vmatprep.subr.mxu0 0.0
    %3245 = vmatpush1.msra.mxu0 0.0
    %3246 = vmatprep.subr.mxu0 0.0
    %3247 = vmatpush1.msra.mxu0 0.0
    %3248 = vmatprep.subr.mxu0 0.0
    %3249 = vmatpush1.msra.mxu0 0.0
    %3250 = vmatprep.subr.mxu0 0.0
    %3251 = vmatpush1.msra.mxu0 0.0
    %3252 = vmatprep.subr.mxu0 0.0
    %3253 = vmatpush1.msra.mxu0 0.0
    %3254 = vmatprep.subr.mxu0 0.0
    %3255 = vmatpush1.msra.mxu0 0.0
    %3256 = vmatprep.subr.mxu0 0.0
    %3257 = vmatpush1.msra.mxu0 0.0
    %3258 = vmatprep.subr.mxu0 0.0
    %3259 = vmatpush1.msra.mxu0 0.0
    %3260 = vmatprep.subr.mxu0 0.0
    %3261 = vmatpush1.msra.mxu0 0.0
    %3262 = vmatprep.mubr.f32.mxu0 0.0
    %3263 = vmatmul.mubr.f32.gmra.mrb[0].mxu0 %v3193
    %v3264 = vpop.f32.mrb[0].mxu0
    %v3265 = vadd.f32 0.0, %v3264
    %v3266 = vpop.f32.mrb[0].mxu0
    %3267 = vmatprep.mubr.f32.mxu0 0.0
    %3268 = vmatmul.mubr.f32.gmra.mrb[0].mxu0 %v3196
    %v3269 = vpop.f32.mrb[0].mxu0
    %v3270 = vadd.f32 0.0, %v3269
    %v3271 = vpop.f32.mrb[0].mxu0
    %3272 = vdwg.mxu0
    %v3273 = vadd.f32 %v3181, %v3265
    %v3274 = vadd.f32 %v3182, %v3270
    %v3275 = vld [vmem:[%s8] sm:$0x1]
    %v3277 = vlaneseq
    %v3278 = vshrl.u32 %v3277, 7
    %v3279 = vsub.s32 0, %v3278
    %v3280 = vrot.slane %v3275, %v3279
    %v3282 = vadd.f32 %v3273, %v3280
    %v3283 = vadd.f32 %v3274, %v3280
    %v3284 = vmax.f32 %v3282, 0.0
    %v3285 = vmax.f32 %v3283, 0.0
    %v3286 = vld [vmem:[%s9] sm:$0xff]
    %v3287 = vld [vmem:[%s9 + $0x8] sm:$0xff]
    %v3288 = vld [vmem:[%s9 + $0x10] sm:$0xff]
    %v3289 = vld [vmem:[%s9 + $0x18] sm:$0xff]
    %v3290 = vld [vmem:[%s9 + $0x20] sm:$0xff]
    %v3291 = vld [vmem:[%s9 + $0x28] sm:$0xff]
    %v3292 = vld [vmem:[%s9 + $0x30] sm:$0xff]
    %v3293 = vld [vmem:[%s9 + $0x38] sm:$0xff]
    %s3294 = scalar_lea.vmem %s9, 64
    %v3295 = vld [vmem:[%s3294] sm:$0xff]
    %v3296 = vld [vmem:[%s3294 + $0x8] sm:$0xff]
    %v3297 = vld [vmem:[%s3294 + $0x10] sm:$0xff]
    %v3298 = vld [vmem:[%s3294 + $0x18] sm:$0xff]
    %v3299 = vld [vmem:[%s3294 + $0x20] sm:$0xff]
    %v3300 = vld [vmem:[%s3294 + $0x28] sm:$0xff]
    %v3301 = vld [vmem:[%s3294 + $0x30] sm:$0xff]
    %v3302 = vld [vmem:[%s3294 + $0x38] sm:$0xff]
    %v3304 = vrot.slane %v3284, 1
    %v3305 = vsel %vm2928, %v3304, 0
    %3307 = vmatprep.subr.mxu0 0.0
    %3308 = vmatpush1.msra.mxu0 %v3295
    %3309 = vmatprep.subr.mxu0 0.0
    %3310 = vmatpush1.msra.mxu0 %v3296
    %3311 = vmatprep.subr.mxu0 0.0
    %3312 = vmatpush1.msra.mxu0 %v3297
    %3313 = vmatprep.subr.mxu0 0.0
    %3314 = vmatpush1.msra.mxu0 %v3298
    %3315 = vmatprep.subr.mxu0 0.0
    %3316 = vmatpush1.msra.mxu0 %v3299
    %3317 = vmatprep.subr.mxu0 0.0
    %3318 = vmatpush1.msra.mxu0 %v3300
    %3319 = vmatprep.subr.mxu0 0.0
    %3320 = vmatpush1.msra.mxu0 %v3301
    %3321 = vmatprep.subr.mxu0 0.0
    %3322 = vmatpush1.msra.mxu0 %v3302
    %3323 = vmatprep.subr.mxu0 0.0
    %3324 = vmatpush1.msra.mxu0 0.0
    %3325 = vmatprep.subr.mxu0 0.0
    %3326 = vmatpush1.msra.mxu0 0.0
    %3327 = vmatprep.subr.mxu0 0.0
    %3328 = vmatpush1.msra.mxu0 0.0
    %3329 = vmatprep.subr.mxu0 0.0
    %3330 = vmatpush1.msra.mxu0 0.0
    %3331 = vmatprep.subr.mxu0 0.0
    %3332 = vmatpush1.msra.mxu0 0.0
    %3333 = vmatprep.subr.mxu0 0.0
    %3334 = vmatpush1.msra.mxu0 0.0
    %3335 = vmatprep.subr.mxu0 0.0
    %3336 = vmatpush1.msra.mxu0 0.0
    %3337 = vmatprep.subr.mxu0 0.0
    %3338 = vmatpush1.msra.mxu0 0.0
    %3339 = vmatprep.subr.mxu0 0.0
    %3340 = vmatpush1.msra.mxu0 0.0
    %3341 = vmatprep.subr.mxu0 0.0
    %3342 = vmatpush1.msra.mxu0 0.0
    %3343 = vmatprep.subr.mxu0 0.0
    %3344 = vmatpush1.msra.mxu0 0.0
    %3345 = vmatprep.subr.mxu0 0.0
    %3346 = vmatpush1.msra.mxu0 0.0
    %3347 = vmatprep.subr.mxu0 0.0
    %3348 = vmatpush1.msra.mxu0 0.0
    %3349 = vmatprep.subr.mxu0 0.0
    %3350 = vmatpush1.msra.mxu0 0.0
    %3351 = vmatprep.subr.mxu0 0.0
    %3352 = vmatpush1.msra.mxu0 0.0
    %3353 = vmatprep.subr.mxu0 0.0
    %3354 = vmatpush1.msra.mxu0 0.0
    %3355 = vmatprep.subr.mxu0 0.0
    %3356 = vmatpush1.msra.mxu0 0.0
    %3357 = vmatprep.subr.mxu0 0.0
    %3358 = vmatpush1.msra.mxu0 0.0
    %3359 = vmatprep.subr.mxu0 0.0
    %3360 = vmatpush1.msra.mxu0 0.0
    %3361 = vmatprep.subr.mxu0 0.0
    %3362 = vmatpush1.msra.mxu0 0.0
    %3363 = vmatprep.subr.mxu0 0.0
    %3364 = vmatpush1.msra.mxu0 0.0
    %3365 = vmatprep.subr.mxu0 0.0
    %3366 = vmatpush1.msra.mxu0 0.0
    %3367 = vmatprep.subr.mxu0 0.0
    %3368 = vmatpush1.msra.mxu0 0.0
    %3369 = vmatprep.subr.mxu0 0.0
    %3370 = vmatpush1.msra.mxu0 0.0
    %3371 = vmatprep.mubr.f32.mxu0 0.0
    %3372 = vmatmul.mubr.f32.gmra.mrb[0].mxu0 %v3305
    %v3373 = vpop.f32.mrb[0].mxu0
    %v3374 = vadd.f32 0.0, %v3373
    %v3375 = vpop.f32.mrb[0].mxu0
    %3376 = vdwg.mxu0
    %v3377 = vsel %vm2928, %v3284, 0
    %3379 = vmatprep.subr.mxu0 0.0
    %3380 = vmatpush1.msra.mxu0 %v3286
    %3381 = vmatprep.subr.mxu0 0.0
    %3382 = vmatpush1.msra.mxu0 %v3287
    %3383 = vmatprep.subr.mxu0 0.0
    %3384 = vmatpush1.msra.mxu0 %v3288
    %3385 = vmatprep.subr.mxu0 0.0
    %3386 = vmatpush1.msra.mxu0 %v3289
    %3387 = vmatprep.subr.mxu0 0.0
    %3388 = vmatpush1.msra.mxu0 %v3290
    %3389 = vmatprep.subr.mxu0 0.0
    %3390 = vmatpush1.msra.mxu0 %v3291
    %3391 = vmatprep.subr.mxu0 0.0
    %3392 = vmatpush1.msra.mxu0 %v3292
    %3393 = vmatprep.subr.mxu0 0.0
    %3394 = vmatpush1.msra.mxu0 %v3293
    %3395 = vmatprep.subr.mxu0 0.0
    %3396 = vmatpush1.msra.mxu0 0.0
    %3397 = vmatprep.subr.mxu0 0.0
    %3398 = vmatpush1.msra.mxu0 0.0
    %3399 = vmatprep.subr.mxu0 0.0
    %3400 = vmatpush1.msra.mxu0 0.0
    %3401 = vmatprep.subr.mxu0 0.0
    %3402 = vmatpush1.msra.mxu0 0.0
    %3403 = vmatprep.subr.mxu0 0.0
    %3404 = vmatpush1.msra.mxu0 0.0
    %3405 = vmatprep.subr.mxu0 0.0
    %3406 = vmatpush1.msra.mxu0 0.0
    %3407 = vmatprep.subr.mxu0 0.0
    %3408 = vmatpush1.msra.mxu0 0.0
    %3409 = vmatprep.subr.mxu0 0.0
    %3410 = vmatpush1.msra.mxu0 0.0
    %3411 = vmatprep.subr.mxu0 0.0
    %3412 = vmatpush1.msra.mxu0 0.0
    %3413 = vmatprep.subr.mxu0 0.0
    %3414 = vmatpush1.msra.mxu0 0.0
    %3415 = vmatprep.subr.mxu0 0.0
    %3416 = vmatpush1.msra.mxu0 0.0
    %3417 = vmatprep.subr.mxu0 0.0
    %3418 = vmatpush1.msra.mxu0 0.0
    %3419 = vmatprep.subr.mxu0 0.0
    %3420 = vmatpush1.msra.mxu0 0.0
    %3421 = vmatprep.subr.mxu0 0.0
    %3422 = vmatpush1.msra.mxu0 0.0
    %3423 = vmatprep.subr.mxu0 0.0
    %3424 = vmatpush1.msra.mxu0 0.0
    %3425 = vmatprep.subr.mxu0 0.0
    %3426 = vmatpush1.msra.mxu0 0.0
    %3427 = vmatprep.subr.mxu0 0.0
    %3428 = vmatpush1.msra.mxu0 0.0
    %3429 = vmatprep.subr.mxu0 0.0
    %3430 = vmatpush1.msra.mxu0 0.0
    %3431 = vmatprep.subr.mxu0 0.0
    %3432 = vmatpush1.msra.mxu0 0.0
    %3433 = vmatprep.subr.mxu0 0.0
    %3434 = vmatpush1.msra.mxu0 0.0
    %3435 = vmatprep.subr.mxu0 0.0
    %3436 = vmatpush1.msra.mxu0 0.0
    %3437 = vmatprep.subr.mxu0 0.0
    %3438 = vmatpush1.msra.mxu0 0.0
    %3439 = vmatprep.subr.mxu0 0.0
    %3440 = vmatpush1.msra.mxu0 0.0
    %3441 = vmatprep.subr.mxu0 0.0
    %3442 = vmatpush1.msra.mxu0 0.0
    %3443 = vmatprep.mubr.f32.mxu0 0.0
    %3444 = vmatmul.mubr.f32.gmra.mrb[0].mxu0 %v3377
    %v3445 = vpop.f32.mrb[0].mxu0
    %v3446 = vadd.f32 %v3374, %v3445
    %v3447 = vpop.f32.mrb[0].mxu0
    %3448 = vdwg.mxu0
    %s3449 = scalar_lea.vmem %s9, 128
    %v3450 = vld [vmem:[%s3449] sm:$0xff]
    %v3451 = vld [vmem:[%s3449 + $0x8] sm:$0xff]
    %v3452 = vld [vmem:[%s3449 + $0x10] sm:$0xff]
    %v3453 = vld [vmem:[%s3449 + $0x18] sm:$0xff]
    %v3454 = vld [vmem:[%s3449 + $0x20] sm:$0xff]
    %v3455 = vld [vmem:[%s3449 + $0x28] sm:$0xff]
    %v3456 = vld [vmem:[%s3449 + $0x30] sm:$0xff]
    %v3457 = vld [vmem:[%s3449 + $0x38] sm:$0xff]
    %v3458 = vrot.slane %v3284, 2
    %v3459 = vsel %vm2928, %v3458, 0
    %3461 = vmatprep.subr.mxu0 0.0
    %3462 = vmatpush1.msra.mxu0 %v3450
    %3463 = vmatprep.subr.mxu0 0.0
    %3464 = vmatpush1.msra.mxu0 %v3451
    %3465 = vmatprep.subr.mxu0 0.0
    %3466 = vmatpush1.msra.mxu0 %v3452
    %3467 = vmatprep.subr.mxu0 0.0
    %3468 = vmatpush1.msra.mxu0 %v3453
    %3469 = vmatprep.subr.mxu0 0.0
    %3470 = vmatpush1.msra.mxu0 %v3454
    %3471 = vmatprep.subr.mxu0 0.0
    %3472 = vmatpush1.msra.mxu0 %v3455
    %3473 = vmatprep.subr.mxu0 0.0
    %3474 = vmatpush1.msra.mxu0 %v3456
    %3475 = vmatprep.subr.mxu0 0.0
    %3476 = vmatpush1.msra.mxu0 %v3457
    %3477 = vmatprep.subr.mxu0 0.0
    %3478 = vmatpush1.msra.mxu0 0.0
    %3479 = vmatprep.subr.mxu0 0.0
    %3480 = vmatpush1.msra.mxu0 0.0
    %3481 = vmatprep.subr.mxu0 0.0
    %3482 = vmatpush1.msra.mxu0 0.0
    %3483 = vmatprep.subr.mxu0 0.0
    %3484 = vmatpush1.msra.mxu0 0.0
    %3485 = vmatprep.subr.mxu0 0.0
    %3486 = vmatpush1.msra.mxu0 0.0
    %3487 = vmatprep.subr.mxu0 0.0
    %3488 = vmatpush1.msra.mxu0 0.0
    %3489 = vmatprep.subr.mxu0 0.0
    %3490 = vmatpush1.msra.mxu0 0.0
    %3491 = vmatprep.subr.mxu0 0.0
    %3492 = vmatpush1.msra.mxu0 0.0
    %3493 = vmatprep.subr.mxu0 0.0
    %3494 = vmatpush1.msra.mxu0 0.0
    %3495 = vmatprep.subr.mxu0 0.0
    %3496 = vmatpush1.msra.mxu0 0.0
    %3497 = vmatprep.subr.mxu0 0.0
    %3498 = vmatpush1.msra.mxu0 0.0
    %3499 = vmatprep.subr.mxu0 0.0
    %3500 = vmatpush1.msra.mxu0 0.0
    %3501 = vmatprep.subr.mxu0 0.0
    %3502 = vmatpush1.msra.mxu0 0.0
    %3503 = vmatprep.subr.mxu0 0.0
    %3504 = vmatpush1.msra.mxu0 0.0
    %3505 = vmatprep.subr.mxu0 0.0
    %3506 = vmatpush1.msra.mxu0 0.0
    %3507 = vmatprep.subr.mxu0 0.0
    %3508 = vmatpush1.msra.mxu0 0.0
    %3509 = vmatprep.subr.mxu0 0.0
    %3510 = vmatpush1.msra.mxu0 0.0
    %3511 = vmatprep.subr.mxu0 0.0
    %3512 = vmatpush1.msra.mxu0 0.0
    %3513 = vmatprep.subr.mxu0 0.0
    %3514 = vmatpush1.msra.mxu0 0.0
    %3515 = vmatprep.subr.mxu0 0.0
    %3516 = vmatpush1.msra.mxu0 0.0
    %3517 = vmatprep.subr.mxu0 0.0
    %3518 = vmatpush1.msra.mxu0 0.0
    %3519 = vmatprep.subr.mxu0 0.0
    %3520 = vmatpush1.msra.mxu0 0.0
    %3521 = vmatprep.subr.mxu0 0.0
    %3522 = vmatpush1.msra.mxu0 0.0
    %3523 = vmatprep.subr.mxu0 0.0
    %3524 = vmatpush1.msra.mxu0 0.0
    %3525 = vmatprep.mubr.f32.mxu0 0.0
    %3526 = vmatmul.mubr.f32.gmra.mrb[0].mxu0 %v3459
    %v3527 = vpop.f32.mrb[0].mxu0
    %v3528 = vadd.f32 0.0, %v3527
    %v3529 = vpop.f32.mrb[0].mxu0
    %3530 = vdwg.mxu0
    %v3531 = vadd.f32 %v3446, %v3528
    %s3532 = scalar_lea.vmem %s9, 192
    %v3533 = vld [vmem:[%s3532] sm:$0xff]
    %v3534 = vld [vmem:[%s3532 + $0x8] sm:$0xff]
    %v3535 = vld [vmem:[%s3532 + $0x10] sm:$0xff]
    %v3536 = vld [vmem:[%s3532 + $0x18] sm:$0xff]
    %v3537 = vld [vmem:[%s3532 + $0x20] sm:$0xff]
    %v3538 = vld [vmem:[%s3532 + $0x28] sm:$0xff]
    %v3539 = vld [vmem:[%s3532 + $0x30] sm:$0xff]
    %v3540 = vld [vmem:[%s3532 + $0x38] sm:$0xff]
    %v3541 = vrot.slane %v3284, 3
    %v3542 = vsel %vm2928, %v3541, 0
    %3544 = vmatprep.subr.mxu0 0.0
    %3545 = vmatpush1.msra.mxu0 %v3533
    %3546 = vmatprep.subr.mxu0 0.0
    %3547 = vmatpush1.msra.mxu0 %v3534
    %3548 = vmatprep.subr.mxu0 0.0
    %3549 = vmatpush1.msra.mxu0 %v3535
    %3550 = vmatprep.subr.mxu0 0.0
    %3551 = vmatpush1.msra.mxu0 %v3536
    %3552 = vmatprep.subr.mxu0 0.0
    %3553 = vmatpush1.msra.mxu0 %v3537
    %3554 = vmatprep.subr.mxu0 0.0
    %3555 = vmatpush1.msra.mxu0 %v3538
    %3556 = vmatprep.subr.mxu0 0.0
    %3557 = vmatpush1.msra.mxu0 %v3539
    %3558 = vmatprep.subr.mxu0 0.0
    %3559 = vmatpush1.msra.mxu0 %v3540
    %3560 = vmatprep.subr.mxu0 0.0
    %3561 = vmatpush1.msra.mxu0 0.0
    %3562 = vmatprep.subr.mxu0 0.0
    %3563 = vmatpush1.msra.mxu0 0.0
    %3564 = vmatprep.subr.mxu0 0.0
    %3565 = vmatpush1.msra.mxu0 0.0
    %3566 = vmatprep.subr.mxu0 0.0
    %3567 = vmatpush1.msra.mxu0 0.0
    %3568 = vmatprep.subr.mxu0 0.0
    %3569 = vmatpush1.msra.mxu0 0.0
    %3570 = vmatprep.subr.mxu0 0.0
    %3571 = vmatpush1.msra.mxu0 0.0
    %3572 = vmatprep.subr.mxu0 0.0
    %3573 = vmatpush1.msra.mxu0 0.0
    %3574 = vmatprep.subr.mxu0 0.0
    %3575 = vmatpush1.msra.mxu0 0.0
    %3576 = vmatprep.subr.mxu0 0.0
    %3577 = vmatpush1.msra.mxu0 0.0
    %3578 = vmatprep.subr.mxu0 0.0
    %3579 = vmatpush1.msra.mxu0 0.0
    %3580 = vmatprep.subr.mxu0 0.0
    %3581 = vmatpush1.msra.mxu0 0.0
    %3582 = vmatprep.subr.mxu0 0.0
    %3583 = vmatpush1.msra.mxu0 0.0
    %3584 = vmatprep.subr.mxu0 0.0
    %3585 = vmatpush1.msra.mxu0 0.0
    %3586 = vmatprep.subr.mxu0 0.0
    %3587 = vmatpush1.msra.mxu0 0.0
    %3588 = vmatprep.subr.mxu0 0.0
    %3589 = vmatpush1.msra.mxu0 0.0
    %3590 = vmatprep.subr.mxu0 0.0
    %3591 = vmatpush1.msra.mxu0 0.0
    %3592 = vmatprep.subr.mxu0 0.0
    %3593 = vmatpush1.msra.mxu0 0.0
    %3594 = vmatprep.subr.mxu0 0.0
    %3595 = vmatpush1.msra.mxu0 0.0
    %3596 = vmatprep.subr.mxu0 0.0
    %3597 = vmatpush1.msra.mxu0 0.0
    %3598 = vmatprep.subr.mxu0 0.0
    %3599 = vmatpush1.msra.mxu0 0.0
    %3600 = vmatprep.subr.mxu0 0.0
    %3601 = vmatpush1.msra.mxu0 0.0
    %3602 = vmatprep.subr.mxu0 0.0
    %3603 = vmatpush1.msra.mxu0 0.0
    %3604 = vmatprep.subr.mxu0 0.0
    %3605 = vmatpush1.msra.mxu0 0.0
    %3606 = vmatprep.subr.mxu0 0.0
    %3607 = vmatpush1.msra.mxu0 0.0
    %3608 = vmatprep.mubr.f32.mxu0 0.0
    %3609 = vmatmul.mubr.f32.gmra.mrb[0].mxu0 %v3542
    %v3610 = vpop.f32.mrb[0].mxu0
    %v3611 = vadd.f32 0.0, %v3610
    %v3612 = vpop.f32.mrb[0].mxu0
    %3613 = vdwg.mxu0
    %v3614 = vadd.f32 %v3531, %v3611
    %s3615 = scalar_lea.vmem %s9, 256
    %v3616 = vld [vmem:[%s3615] sm:$0xff]
    %v3617 = vld [vmem:[%s3615 + $0x8] sm:$0xff]
    %v3618 = vld [vmem:[%s3615 + $0x10] sm:$0xff]
    %v3619 = vld [vmem:[%s3615 + $0x18] sm:$0xff]
    %v3620 = vld [vmem:[%s3615 + $0x20] sm:$0xff]
    %v3621 = vld [vmem:[%s3615 + $0x28] sm:$0xff]
    %v3622 = vld [vmem:[%s3615 + $0x30] sm:$0xff]
    %v3623 = vld [vmem:[%s3615 + $0x38] sm:$0xff]
    %v3624 = vrot.slane %v3284, 4
    %v3625 = vsel %vm2928, %v3624, 0
    %3627 = vmatprep.subr.mxu0 0.0
    %3628 = vmatpush1.msra.mxu0 %v3616
    %3629 = vmatprep.subr.mxu0 0.0
    %3630 = vmatpush1.msra.mxu0 %v3617
    %3631 = vmatprep.subr.mxu0 0.0
    %3632 = vmatpush1.msra.mxu0 %v3618
    %3633 = vmatprep.subr.mxu0 0.0
    %3634 = vmatpush1.msra.mxu0 %v3619
    %3635 = vmatprep.subr.mxu0 0.0
    %3636 = vmatpush1.msra.mxu0 %v3620
    %3637 = vmatprep.subr.mxu0 0.0
    %3638 = vmatpush1.msra.mxu0 %v3621
    %3639 = vmatprep.subr.mxu0 0.0
    %3640 = vmatpush1.msra.mxu0 %v3622
    %3641 = vmatprep.subr.mxu0 0.0
    %3642 = vmatpush1.msra.mxu0 %v3623
    %3643 = vmatprep.subr.mxu0 0.0
    %3644 = vmatpush1.msra.mxu0 0.0
    %3645 = vmatprep.subr.mxu0 0.0
    %3646 = vmatpush1.msra.mxu0 0.0
    %3647 = vmatprep.subr.mxu0 0.0
    %3648 = vmatpush1.msra.mxu0 0.0
    %3649 = vmatprep.subr.mxu0 0.0
    %3650 = vmatpush1.msra.mxu0 0.0
    %3651 = vmatprep.subr.mxu0 0.0
    %3652 = vmatpush1.msra.mxu0 0.0
    %3653 = vmatprep.subr.mxu0 0.0
    %3654 = vmatpush1.msra.mxu0 0.0
    %3655 = vmatprep.subr.mxu0 0.0
    %3656 = vmatpush1.msra.mxu0 0.0
    %3657 = vmatprep.subr.mxu0 0.0
    %3658 = vmatpush1.msra.mxu0 0.0
    %3659 = vmatprep.subr.mxu0 0.0
    %3660 = vmatpush1.msra.mxu0 0.0
    %3661 = vmatprep.subr.mxu0 0.0
    %3662 = vmatpush1.msra.mxu0 0.0
    %3663 = vmatprep.subr.mxu0 0.0
    %3664 = vmatpush1.msra.mxu0 0.0
    %3665 = vmatprep.subr.mxu0 0.0
    %3666 = vmatpush1.msra.mxu0 0.0
    %3667 = vmatprep.subr.mxu0 0.0
    %3668 = vmatpush1.msra.mxu0 0.0
    %3669 = vmatprep.subr.mxu0 0.0
    %3670 = vmatpush1.msra.mxu0 0.0
    %3671 = vmatprep.subr.mxu0 0.0
    %3672 = vmatpush1.msra.mxu0 0.0
    %3673 = vmatprep.subr.mxu0 0.0
    %3674 = vmatpush1.msra.mxu0 0.0
    %3675 = vmatprep.subr.mxu0 0.0
    %3676 = vmatpush1.msra.mxu0 0.0
    %3677 = vmatprep.subr.mxu0 0.0
    %3678 = vmatpush1.msra.mxu0 0.0
    %3679 = vmatprep.subr.mxu0 0.0
    %3680 = vmatpush1.msra.mxu0 0.0
    %3681 = vmatprep.subr.mxu0 0.0
    %3682 = vmatpush1.msra.mxu0 0.0
    %3683 = vmatprep.subr.mxu0 0.0
    %3684 = vmatpush1.msra.mxu0 0.0
    %3685 = vmatprep.subr.mxu0 0.0
    %3686 = vmatpush1.msra.mxu0 0.0
    %3687 = vmatprep.subr.mxu0 0.0
    %3688 = vmatpush1.msra.mxu0 0.0
    %3689 = vmatprep.subr.mxu0 0.0
    %3690 = vmatpush1.msra.mxu0 0.0
    %3691 = vmatprep.mubr.f32.mxu0 0.0
    %3692 = vmatmul.mubr.f32.gmra.mrb[0].mxu0 %v3625
    %v3693 = vpop.f32.mrb[0].mxu0
    %v3694 = vadd.f32 0.0, %v3693
    %v3695 = vpop.f32.mrb[0].mxu0
    %3696 = vdwg.mxu0
    %v3697 = vadd.f32 %v3614, %v3694
    %s3698 = scalar_lea.vmem %s9, 320
    %v3699 = vld [vmem:[%s3698] sm:$0xff]
    %v3700 = vld [vmem:[%s3698 + $0x8] sm:$0xff]
    %v3701 = vld [vmem:[%s3698 + $0x10] sm:$0xff]
    %v3702 = vld [vmem:[%s3698 + $0x18] sm:$0xff]
    %v3703 = vld [vmem:[%s3698 + $0x20] sm:$0xff]
    %v3704 = vld [vmem:[%s3698 + $0x28] sm:$0xff]
    %v3705 = vld [vmem:[%s3698 + $0x30] sm:$0xff]
    %v3706 = vld [vmem:[%s3698 + $0x38] sm:$0xff]
    %v3707 = vrot.slane %v3284, 5
    %v3708 = vsel %vm2928, %v3707, 0
    %3710 = vmatprep.subr.mxu0 0.0
    %3711 = vmatpush1.msra.mxu0 %v3699
    %3712 = vmatprep.subr.mxu0 0.0
    %3713 = vmatpush1.msra.mxu0 %v3700
    %3714 = vmatprep.subr.mxu0 0.0
    %3715 = vmatpush1.msra.mxu0 %v3701
    %3716 = vmatprep.subr.mxu0 0.0
    %3717 = vmatpush1.msra.mxu0 %v3702
    %3718 = vmatprep.subr.mxu0 0.0
    %3719 = vmatpush1.msra.mxu0 %v3703
    %3720 = vmatprep.subr.mxu0 0.0
    %3721 = vmatpush1.msra.mxu0 %v3704
    %3722 = vmatprep.subr.mxu0 0.0
    %3723 = vmatpush1.msra.mxu0 %v3705
    %3724 = vmatprep.subr.mxu0 0.0
    %3725 = vmatpush1.msra.mxu0 %v3706
    %3726 = vmatprep.subr.mxu0 0.0
    %3727 = vmatpush1.msra.mxu0 0.0
    %3728 = vmatprep.subr.mxu0 0.0
    %3729 = vmatpush1.msra.mxu0 0.0
    %3730 = vmatprep.subr.mxu0 0.0
    %3731 = vmatpush1.msra.mxu0 0.0
    %3732 = vmatprep.subr.mxu0 0.0
    %3733 = vmatpush1.msra.mxu0 0.0
    %3734 = vmatprep.subr.mxu0 0.0
    %3735 = vmatpush1.msra.mxu0 0.0
    %3736 = vmatprep.subr.mxu0 0.0
    %3737 = vmatpush1.msra.mxu0 0.0
    %3738 = vmatprep.subr.mxu0 0.0
    %3739 = vmatpush1.msra.mxu0 0.0
    %3740 = vmatprep.subr.mxu0 0.0
    %3741 = vmatpush1.msra.mxu0 0.0
    %3742 = vmatprep.subr.mxu0 0.0
    %3743 = vmatpush1.msra.mxu0 0.0
    %3744 = vmatprep.subr.mxu0 0.0
    %3745 = vmatpush1.msra.mxu0 0.0
    %3746 = vmatprep.subr.mxu0 0.0
    %3747 = vmatpush1.msra.mxu0 0.0
    %3748 = vmatprep.subr.mxu0 0.0
    %3749 = vmatpush1.msra.mxu0 0.0
    %3750 = vmatprep.subr.mxu0 0.0
    %3751 = vmatpush1.msra.mxu0 0.0
    %3752 = vmatprep.subr.mxu0 0.0
    %3753 = vmatpush1.msra.mxu0 0.0
    %3754 = vmatprep.subr.mxu0 0.0
    %3755 = vmatpush1.msra.mxu0 0.0
    %3756 = vmatprep.subr.mxu0 0.0
    %3757 = vmatpush1.msra.mxu0 0.0
    %3758 = vmatprep.subr.mxu0 0.0
    %3759 = vmatpush1.msra.mxu0 0.0
    %3760 = vmatprep.subr.mxu0 0.0
    %3761 = vmatpush1.msra.mxu0 0.0
    %3762 = vmatprep.subr.mxu0 0.0
    %3763 = vmatpush1.msra.mxu0 0.0
    %3764 = vmatprep.subr.mxu0 0.0
    %3765 = vmatpush1.msra.mxu0 0.0
    %3766 = vmatprep.subr.mxu0 0.0
    %3767 = vmatpush1.msra.mxu0 0.0
    %3768 = vmatprep.subr.mxu0 0.0
    %3769 = vmatpush1.msra.mxu0 0.0
    %3770 = vmatprep.subr.mxu0 0.0
    %3771 = vmatpush1.msra.mxu0 0.0
    %3772 = vmatprep.subr.mxu0 0.0
    %3773 = vmatpush1.msra.mxu0 0.0
    %3774 = vmatprep.mubr.f32.mxu0 0.0
    %3775 = vmatmul.mubr.f32.gmra.mrb[0].mxu0 %v3708
    %v3776 = vpop.f32.mrb[0].mxu0
    %v3777 = vadd.f32 0.0, %v3776
    %v3778 = vpop.f32.mrb[0].mxu0
    %3779 = vdwg.mxu0
    %v3780 = vadd.f32 %v3697, %v3777
    %s3781 = scalar_lea.vmem %s9, 384
    %v3782 = vld [vmem:[%s3781] sm:$0xff]
    %v3783 = vld [vmem:[%s3781 + $0x8] sm:$0xff]
    %v3784 = vld [vmem:[%s3781 + $0x10] sm:$0xff]
    %v3785 = vld [vmem:[%s3781 + $0x18] sm:$0xff]
    %v3786 = vld [vmem:[%s3781 + $0x20] sm:$0xff]
    %v3787 = vld [vmem:[%s3781 + $0x28] sm:$0xff]
    %v3788 = vld [vmem:[%s3781 + $0x30] sm:$0xff]
    %v3789 = vld [vmem:[%s3781 + $0x38] sm:$0xff]
    %v3790 = vrot.slane %v3284, 6
    %v3791 = vsel %vm2928, %v3790, 0
    %3793 = vmatprep.subr.mxu0 0.0
    %3794 = vmatpush1.msra.mxu0 %v3782
    %3795 = vmatprep.subr.mxu0 0.0
    %3796 = vmatpush1.msra.mxu0 %v3783
    %3797 = vmatprep.subr.mxu0 0.0
    %3798 = vmatpush1.msra.mxu0 %v3784
    %3799 = vmatprep.subr.mxu0 0.0
    %3800 = vmatpush1.msra.mxu0 %v3785
    %3801 = vmatprep.subr.mxu0 0.0
    %3802 = vmatpush1.msra.mxu0 %v3786
    %3803 = vmatprep.subr.mxu0 0.0
    %3804 = vmatpush1.msra.mxu0 %v3787
    %3805 = vmatprep.subr.mxu0 0.0
    %3806 = vmatpush1.msra.mxu0 %v3788
    %3807 = vmatprep.subr.mxu0 0.0
    %3808 = vmatpush1.msra.mxu0 %v3789
    %3809 = vmatprep.subr.mxu0 0.0
    %3810 = vmatpush1.msra.mxu0 0.0
    %3811 = vmatprep.subr.mxu0 0.0
    %3812 = vmatpush1.msra.mxu0 0.0
    %3813 = vmatprep.subr.mxu0 0.0
    %3814 = vmatpush1.msra.mxu0 0.0
    %3815 = vmatprep.subr.mxu0 0.0
    %3816 = vmatpush1.msra.mxu0 0.0
    %3817 = vmatprep.subr.mxu0 0.0
    %3818 = vmatpush1.msra.mxu0 0.0
    %3819 = vmatprep.subr.mxu0 0.0
    %3820 = vmatpush1.msra.mxu0 0.0
    %3821 = vmatprep.subr.mxu0 0.0
    %3822 = vmatpush1.msra.mxu0 0.0
    %3823 = vmatprep.subr.mxu0 0.0
    %3824 = vmatpush1.msra.mxu0 0.0
    %3825 = vmatprep.subr.mxu0 0.0
    %3826 = vmatpush1.msra.mxu0 0.0
    %3827 = vmatprep.subr.mxu0 0.0
    %3828 = vmatpush1.msra.mxu0 0.0
    %3829 = vmatprep.subr.mxu0 0.0
    %3830 = vmatpush1.msra.mxu0 0.0
    %3831 = vmatprep.subr.mxu0 0.0
    %3832 = vmatpush1.msra.mxu0 0.0
    %3833 = vmatprep.subr.mxu0 0.0
    %3834 = vmatpush1.msra.mxu0 0.0
    %3835 = vmatprep.subr.mxu0 0.0
    %3836 = vmatpush1.msra.mxu0 0.0
    %3837 = vmatprep.subr.mxu0 0.0
    %3838 = vmatpush1.msra.mxu0 0.0
    %3839 = vmatprep.subr.mxu0 0.0
    %3840 = vmatpush1.msra.mxu0 0.0
    %3841 = vmatprep.subr.mxu0 0.0
    %3842 = vmatpush1.msra.mxu0 0.0
    %3843 = vmatprep.subr.mxu0 0.0
    %3844 = vmatpush1.msra.mxu0 0.0
    %3845 = vmatprep.subr.mxu0 0.0
    %3846 = vmatpush1.msra.mxu0 0.0
    %3847 = vmatprep.subr.mxu0 0.0
    %3848 = vmatpush1.msra.mxu0 0.0
    %3849 = vmatprep.subr.mxu0 0.0
    %3850 = vmatpush1.msra.mxu0 0.0
    %3851 = vmatprep.subr.mxu0 0.0
    %3852 = vmatpush1.msra.mxu0 0.0
    %3853 = vmatprep.subr.mxu0 0.0
    %3854 = vmatpush1.msra.mxu0 0.0
    %3855 = vmatprep.subr.mxu0 0.0
    %3856 = vmatpush1.msra.mxu0 0.0
    %3857 = vmatprep.mubr.f32.mxu0 0.0
    %3858 = vmatmul.mubr.f32.gmra.mrb[0].mxu0 %v3791
    %v3859 = vpop.f32.mrb[0].mxu0
    %v3860 = vadd.f32 0.0, %v3859
    %v3861 = vpop.f32.mrb[0].mxu0
    %3862 = vdwg.mxu0
    %v3863 = vadd.f32 %v3780, %v3860
    %s3864 = scalar_lea.vmem %s9, 448
    %v3865 = vld [vmem:[%s3864] sm:$0xff]
    %v3866 = vld [vmem:[%s3864 + $0x8] sm:$0xff]
    %v3867 = vld [vmem:[%s3864 + $0x10] sm:$0xff]
    %v3868 = vld [vmem:[%s3864 + $0x18] sm:$0xff]
    %v3869 = vld [vmem:[%s3864 + $0x20] sm:$0xff]
    %v3870 = vld [vmem:[%s3864 + $0x28] sm:$0xff]
    %v3871 = vld [vmem:[%s3864 + $0x30] sm:$0xff]
    %v3872 = vld [vmem:[%s3864 + $0x38] sm:$0xff]
    %v3873 = vrot.slane %v3284, 7
    %v3874 = vsel %vm2928, %v3873, 0
    %3876 = vmatprep.subr.mxu0 0.0
    %3877 = vmatpush1.msra.mxu0 %v3865
    %3878 = vmatprep.subr.mxu0 0.0
    %3879 = vmatpush1.msra.mxu0 %v3866
    %3880 = vmatprep.subr.mxu0 0.0
    %3881 = vmatpush1.msra.mxu0 %v3867
    %3882 = vmatprep.subr.mxu0 0.0
    %3883 = vmatpush1.msra.mxu0 %v3868
    %3884 = vmatprep.subr.mxu0 0.0
    %3885 = vmatpush1.msra.mxu0 %v3869
    %3886 = vmatprep.subr.mxu0 0.0
    %3887 = vmatpush1.msra.mxu0 %v3870
    %3888 = vmatprep.subr.mxu0 0.0
    %3889 = vmatpush1.msra.mxu0 %v3871
    %3890 = vmatprep.subr.mxu0 0.0
    %3891 = vmatpush1.msra.mxu0 %v3872
    %3892 = vmatprep.subr.mxu0 0.0
    %3893 = vmatpush1.msra.mxu0 0.0
    %3894 = vmatprep.subr.mxu0 0.0
    %3895 = vmatpush1.msra.mxu0 0.0
    %3896 = vmatprep.subr.mxu0 0.0
    %3897 = vmatpush1.msra.mxu0 0.0
    %3898 = vmatprep.subr.mxu0 0.0
    %3899 = vmatpush1.msra.mxu0 0.0
    %3900 = vmatprep.subr.mxu0 0.0
    %3901 = vmatpush1.msra.mxu0 0.0
    %3902 = vmatprep.subr.mxu0 0.0
    %3903 = vmatpush1.msra.mxu0 0.0
    %3904 = vmatprep.subr.mxu0 0.0
    %3905 = vmatpush1.msra.mxu0 0.0
    %3906 = vmatprep.subr.mxu0 0.0
    %3907 = vmatpush1.msra.mxu0 0.0
    %3908 = vmatprep.subr.mxu0 0.0
    %3909 = vmatpush1.msra.mxu0 0.0
    %3910 = vmatprep.subr.mxu0 0.0
    %3911 = vmatpush1.msra.mxu0 0.0
    %3912 = vmatprep.subr.mxu0 0.0
    %3913 = vmatpush1.msra.mxu0 0.0
    %3914 = vmatprep.subr.mxu0 0.0
    %3915 = vmatpush1.msra.mxu0 0.0
    %3916 = vmatprep.subr.mxu0 0.0
    %3917 = vmatpush1.msra.mxu0 0.0
    %3918 = vmatprep.subr.mxu0 0.0
    %3919 = vmatpush1.msra.mxu0 0.0
    %3920 = vmatprep.subr.mxu0 0.0
    %3921 = vmatpush1.msra.mxu0 0.0
    %3922 = vmatprep.subr.mxu0 0.0
    %3923 = vmatpush1.msra.mxu0 0.0
    %3924 = vmatprep.subr.mxu0 0.0
    %3925 = vmatpush1.msra.mxu0 0.0
    %3926 = vmatprep.subr.mxu0 0.0
    %3927 = vmatpush1.msra.mxu0 0.0
    %3928 = vmatprep.subr.mxu0 0.0
    %3929 = vmatpush1.msra.mxu0 0.0
    %3930 = vmatprep.subr.mxu0 0.0
    %3931 = vmatpush1.msra.mxu0 0.0
    %3932 = vmatprep.subr.mxu0 0.0
    %3933 = vmatpush1.msra.mxu0 0.0
    %3934 = vmatprep.subr.mxu0 0.0
    %3935 = vmatpush1.msra.mxu0 0.0
    %3936 = vmatprep.subr.mxu0 0.0
    %3937 = vmatpush1.msra.mxu0 0.0
    %3938 = vmatprep.subr.mxu0 0.0
    %3939 = vmatpush1.msra.mxu0 0.0
    %3940 = vmatprep.mubr.f32.mxu0 0.0
    %3941 = vmatmul.mubr.f32.gmra.mrb[0].mxu0 %v3874
    %v3942 = vpop.f32.mrb[0].mxu0
    %v3943 = vadd.f32 0.0, %v3942
    %v3944 = vpop.f32.mrb[0].mxu0
    %3945 = vdwg.mxu0
    %v3946 = vadd.f32 %v3863, %v3943
    %s3947 = scalar_lea.vmem %s9, 512
    %v3948 = vld [vmem:[%s3947] sm:$0xff]
    %v3949 = vld [vmem:[%s3947 + $0x8] sm:$0xff]
    %v3950 = vld [vmem:[%s3947 + $0x10] sm:$0xff]
    %v3951 = vld [vmem:[%s3947 + $0x18] sm:$0xff]
    %v3952 = vld [vmem:[%s3947 + $0x20] sm:$0xff]
    %v3953 = vld [vmem:[%s3947 + $0x28] sm:$0xff]
    %v3954 = vld [vmem:[%s3947 + $0x30] sm:$0xff]
    %v3955 = vld [vmem:[%s3947 + $0x38] sm:$0xff]
    %v3957 = vsel %vm2928, %v3285, 0
    %3959 = vmatprep.subr.mxu0 0.0
    %3960 = vmatpush1.msra.mxu0 %v3948
    %3961 = vmatprep.subr.mxu0 0.0
    %3962 = vmatpush1.msra.mxu0 %v3949
    %3963 = vmatprep.subr.mxu0 0.0
    %3964 = vmatpush1.msra.mxu0 %v3950
    %3965 = vmatprep.subr.mxu0 0.0
    %3966 = vmatpush1.msra.mxu0 %v3951
    %3967 = vmatprep.subr.mxu0 0.0
    %3968 = vmatpush1.msra.mxu0 %v3952
    %3969 = vmatprep.subr.mxu0 0.0
    %3970 = vmatpush1.msra.mxu0 %v3953
    %3971 = vmatprep.subr.mxu0 0.0
    %3972 = vmatpush1.msra.mxu0 %v3954
    %3973 = vmatprep.subr.mxu0 0.0
    %3974 = vmatpush1.msra.mxu0 %v3955
    %3975 = vmatprep.subr.mxu0 0.0
    %3976 = vmatpush1.msra.mxu0 0.0
    %3977 = vmatprep.subr.mxu0 0.0
    %3978 = vmatpush1.msra.mxu0 0.0
    %3979 = vmatprep.subr.mxu0 0.0
    %3980 = vmatpush1.msra.mxu0 0.0
    %3981 = vmatprep.subr.mxu0 0.0
    %3982 = vmatpush1.msra.mxu0 0.0
    %3983 = vmatprep.subr.mxu0 0.0
    %3984 = vmatpush1.msra.mxu0 0.0
    %3985 = vmatprep.subr.mxu0 0.0
    %3986 = vmatpush1.msra.mxu0 0.0
    %3987 = vmatprep.subr.mxu0 0.0
    %3988 = vmatpush1.msra.mxu0 0.0
    %3989 = vmatprep.subr.mxu0 0.0
    %3990 = vmatpush1.msra.mxu0 0.0
    %3991 = vmatprep.subr.mxu0 0.0
    %3992 = vmatpush1.msra.mxu0 0.0
    %3993 = vmatprep.subr.mxu0 0.0
    %3994 = vmatpush1.msra.mxu0 0.0
    %3995 = vmatprep.subr.mxu0 0.0
    %3996 = vmatpush1.msra.mxu0 0.0
    %3997 = vmatprep.subr.mxu0 0.0
    %3998 = vmatpush1.msra.mxu0 0.0
    %3999 = vmatprep.subr.mxu0 0.0
    %4000 = vmatpush1.msra.mxu0 0.0
    %4001 = vmatprep.subr.mxu0 0.0
    %4002 = vmatpush1.msra.mxu0 0.0
    %4003 = vmatprep.subr.mxu0 0.0
    %4004 = vmatpush1.msra.mxu0 0.0
    %4005 = vmatprep.subr.mxu0 0.0
    %4006 = vmatpush1.msra.mxu0 0.0
    %4007 = vmatprep.subr.mxu0 0.0
    %4008 = vmatpush1.msra.mxu0 0.0
    %4009 = vmatprep.subr.mxu0 0.0
    %4010 = vmatpush1.msra.mxu0 0.0
    %4011 = vmatprep.subr.mxu0 0.0
    %4012 = vmatpush1.msra.mxu0 0.0
    %4013 = vmatprep.subr.mxu0 0.0
    %4014 = vmatpush1.msra.mxu0 0.0
    %4015 = vmatprep.subr.mxu0 0.0
    %4016 = vmatpush1.msra.mxu0 0.0
    %4017 = vmatprep.subr.mxu0 0.0
    %4018 = vmatpush1.msra.mxu0 0.0
    %4019 = vmatprep.subr.mxu0 0.0
    %4020 = vmatpush1.msra.mxu0 0.0
    %4021 = vmatprep.subr.mxu0 0.0
    %4022 = vmatpush1.msra.mxu0 0.0
    %4023 = vmatprep.mubr.f32.mxu0 0.0
    %4024 = vmatmul.mubr.f32.gmra.mrb[0].mxu0 %v3957
    %v4025 = vpop.f32.mrb[0].mxu0
    %v4026 = vadd.f32 0.0, %v4025
    %v4027 = vpop.f32.mrb[0].mxu0
    %4028 = vdwg.mxu0
    %v4029 = vadd.f32 %v3946, %v4026
    %s4030 = scalar_lea.vmem %s9, 576
    %v4031 = vld [vmem:[%s4030] sm:$0xff]
    %v4032 = vld [vmem:[%s4030 + $0x8] sm:$0xff]
    %v4033 = vld [vmem:[%s4030 + $0x10] sm:$0xff]
    %v4034 = vld [vmem:[%s4030 + $0x18] sm:$0xff]
    %v4035 = vld [vmem:[%s4030 + $0x20] sm:$0xff]
    %v4036 = vld [vmem:[%s4030 + $0x28] sm:$0xff]
    %v4037 = vld [vmem:[%s4030 + $0x30] sm:$0xff]
    %v4038 = vld [vmem:[%s4030 + $0x38] sm:$0xff]
    %v4039 = vrot.slane %v3285, 1
    %v4040 = vsel %vm2928, %v4039, 0
    %4042 = vmatprep.subr.mxu0 0.0
    %4043 = vmatpush1.msra.mxu0 %v4031
    %4044 = vmatprep.subr.mxu0 0.0
    %4045 = vmatpush1.msra.mxu0 %v4032
    %4046 = vmatprep.subr.mxu0 0.0
    %4047 = vmatpush1.msra.mxu0 %v4033
    %4048 = vmatprep.subr.mxu0 0.0
    %4049 = vmatpush1.msra.mxu0 %v4034
    %4050 = vmatprep.subr.mxu0 0.0
    %4051 = vmatpush1.msra.mxu0 %v4035
    %4052 = vmatprep.subr.mxu0 0.0
    %4053 = vmatpush1.msra.mxu0 %v4036
    %4054 = vmatprep.subr.mxu0 0.0
    %4055 = vmatpush1.msra.mxu0 %v4037
    %4056 = vmatprep.subr.mxu0 0.0
    %4057 = vmatpush1.msra.mxu0 %v4038
    %4058 = vmatprep.subr.mxu0 0.0
    %4059 = vmatpush1.msra.mxu0 0.0
    %4060 = vmatprep.subr.mxu0 0.0
    %4061 = vmatpush1.msra.mxu0 0.0
    %4062 = vmatprep.subr.mxu0 0.0
    %4063 = vmatpush1.msra.mxu0 0.0
    %4064 = vmatprep.subr.mxu0 0.0
    %4065 = vmatpush1.msra.mxu0 0.0
    %4066 = vmatprep.subr.mxu0 0.0
    %4067 = vmatpush1.msra.mxu0 0.0
    %4068 = vmatprep.subr.mxu0 0.0
    %4069 = vmatpush1.msra.mxu0 0.0
    %4070 = vmatprep.subr.mxu0 0.0
    %4071 = vmatpush1.msra.mxu0 0.0
    %4072 = vmatprep.subr.mxu0 0.0
    %4073 = vmatpush1.msra.mxu0 0.0
    %4074 = vmatprep.subr.mxu0 0.0
    %4075 = vmatpush1.msra.mxu0 0.0
    %4076 = vmatprep.subr.mxu0 0.0
    %4077 = vmatpush1.msra.mxu0 0.0
    %4078 = vmatprep.subr.mxu0 0.0
    %4079 = vmatpush1.msra.mxu0 0.0
    %4080 = vmatprep.subr.mxu0 0.0
    %4081 = vmatpush1.msra.mxu0 0.0
    %4082 = vmatprep.subr.mxu0 0.0
    %4083 = vmatpush1.msra.mxu0 0.0
    %4084 = vmatprep.subr.mxu0 0.0
    %4085 = vmatpush1.msra.mxu0 0.0
    %4086 = vmatprep.subr.mxu0 0.0
    %4087 = vmatpush1.msra.mxu0 0.0
    %4088 = vmatprep.subr.mxu0 0.0
    %4089 = vmatpush1.msra.mxu0 0.0
    %4090 = vmatprep.subr.mxu0 0.0
    %4091 = vmatpush1.msra.mxu0 0.0
    %4092 = vmatprep.subr.mxu0 0.0
    %4093 = vmatpush1.msra.mxu0 0.0
    %4094 = vmatprep.subr.mxu0 0.0
    %4095 = vmatpush1.msra.mxu0 0.0
    %4096 = vmatprep.subr.mxu0 0.0
    %4097 = vmatpush1.msra.mxu0 0.0
    %4098 = vmatprep.subr.mxu0 0.0
    %4099 = vmatpush1.msra.mxu0 0.0
    %4100 = vmatprep.subr.mxu0 0.0
    %4101 = vmatpush1.msra.mxu0 0.0
    %4102 = vmatprep.subr.mxu0 0.0
    %4103 = vmatpush1.msra.mxu0 0.0
    %4104 = vmatprep.subr.mxu0 0.0
    %4105 = vmatpush1.msra.mxu0 0.0
    %4106 = vmatprep.mubr.f32.mxu0 0.0
    %4107 = vmatmul.mubr.f32.gmra.mrb[0].mxu0 %v4040
    %v4108 = vpop.f32.mrb[0].mxu0
    %v4109 = vadd.f32 0.0, %v4108
    %v4110 = vpop.f32.mrb[0].mxu0
    %4111 = vdwg.mxu0
    %v4112 = vadd.f32 %v4029, %v4109
    %s4113 = scalar_lea.vmem %s9, 640
    %v4114 = vld [vmem:[%s4113] sm:$0xff]
    %v4115 = vld [vmem:[%s4113 + $0x8] sm:$0xff]
    %v4116 = vld [vmem:[%s4113 + $0x10] sm:$0xff]
    %v4117 = vld [vmem:[%s4113 + $0x18] sm:$0xff]
    %v4118 = vld [vmem:[%s4113 + $0x20] sm:$0xff]
    %v4119 = vld [vmem:[%s4113 + $0x28] sm:$0xff]
    %v4120 = vld [vmem:[%s4113 + $0x30] sm:$0xff]
    %v4121 = vld [vmem:[%s4113 + $0x38] sm:$0xff]
    %v4122 = vrot.slane %v3285, 2
    %v4123 = vsel %vm2928, %v4122, 0
    %4125 = vmatprep.subr.mxu0 0.0
    %4126 = vmatpush1.msra.mxu0 %v4114
    %4127 = vmatprep.subr.mxu0 0.0
    %4128 = vmatpush1.msra.mxu0 %v4115
    %4129 = vmatprep.subr.mxu0 0.0
    %4130 = vmatpush1.msra.mxu0 %v4116
    %4131 = vmatprep.subr.mxu0 0.0
    %4132 = vmatpush1.msra.mxu0 %v4117
    %4133 = vmatprep.subr.mxu0 0.0
    %4134 = vmatpush1.msra.mxu0 %v4118
    %4135 = vmatprep.subr.mxu0 0.0
    %4136 = vmatpush1.msra.mxu0 %v4119
    %4137 = vmatprep.subr.mxu0 0.0
    %4138 = vmatpush1.msra.mxu0 %v4120
    %4139 = vmatprep.subr.mxu0 0.0
    %4140 = vmatpush1.msra.mxu0 %v4121
    %4141 = vmatprep.subr.mxu0 0.0
    %4142 = vmatpush1.msra.mxu0 0.0
    %4143 = vmatprep.subr.mxu0 0.0
    %4144 = vmatpush1.msra.mxu0 0.0
    %4145 = vmatprep.subr.mxu0 0.0
    %4146 = vmatpush1.msra.mxu0 0.0
    %4147 = vmatprep.subr.mxu0 0.0
    %4148 = vmatpush1.msra.mxu0 0.0
    %4149 = vmatprep.subr.mxu0 0.0
    %4150 = vmatpush1.msra.mxu0 0.0
    %4151 = vmatprep.subr.mxu0 0.0
    %4152 = vmatpush1.msra.mxu0 0.0
    %4153 = vmatprep.subr.mxu0 0.0
    %4154 = vmatpush1.msra.mxu0 0.0
    %4155 = vmatprep.subr.mxu0 0.0
    %4156 = vmatpush1.msra.mxu0 0.0
    %4157 = vmatprep.subr.mxu0 0.0
    %4158 = vmatpush1.msra.mxu0 0.0
    %4159 = vmatprep.subr.mxu0 0.0
    %4160 = vmatpush1.msra.mxu0 0.0
    %4161 = vmatprep.subr.mxu0 0.0
    %4162 = vmatpush1.msra.mxu0 0.0
    %4163 = vmatprep.subr.mxu0 0.0
    %4164 = vmatpush1.msra.mxu0 0.0
    %4165 = vmatprep.subr.mxu0 0.0
    %4166 = vmatpush1.msra.mxu0 0.0
    %4167 = vmatprep.subr.mxu0 0.0
    %4168 = vmatpush1.msra.mxu0 0.0
    %4169 = vmatprep.subr.mxu0 0.0
    %4170 = vmatpush1.msra.mxu0 0.0
    %4171 = vmatprep.subr.mxu0 0.0
    %4172 = vmatpush1.msra.mxu0 0.0
    %4173 = vmatprep.subr.mxu0 0.0
    %4174 = vmatpush1.msra.mxu0 0.0
    %4175 = vmatprep.subr.mxu0 0.0
    %4176 = vmatpush1.msra.mxu0 0.0
    %4177 = vmatprep.subr.mxu0 0.0
    %4178 = vmatpush1.msra.mxu0 0.0
    %4179 = vmatprep.subr.mxu0 0.0
    %4180 = vmatpush1.msra.mxu0 0.0
    %4181 = vmatprep.subr.mxu0 0.0
    %4182 = vmatpush1.msra.mxu0 0.0
    %4183 = vmatprep.subr.mxu0 0.0
    %4184 = vmatpush1.msra.mxu0 0.0
    %4185 = vmatprep.subr.mxu0 0.0
    %4186 = vmatpush1.msra.mxu0 0.0
    %4187 = vmatprep.subr.mxu0 0.0
    %4188 = vmatpush1.msra.mxu0 0.0
    %4189 = vmatprep.mubr.f32.mxu0 0.0
    %4190 = vmatmul.mubr.f32.gmra.mrb[0].mxu0 %v4123
    %v4191 = vpop.f32.mrb[0].mxu0
    %v4192 = vadd.f32 0.0, %v4191
    %v4193 = vpop.f32.mrb[0].mxu0
    %4194 = vdwg.mxu0
    %v4195 = vadd.f32 %v4112, %v4192
    %s4196 = scalar_lea.vmem %s9, 704
    %v4197 = vld [vmem:[%s4196] sm:$0xff]
    %v4198 = vld [vmem:[%s4196 + $0x8] sm:$0xff]
    %v4199 = vld [vmem:[%s4196 + $0x10] sm:$0xff]
    %v4200 = vld [vmem:[%s4196 + $0x18] sm:$0xff]
    %v4201 = vld [vmem:[%s4196 + $0x20] sm:$0xff]
    %v4202 = vld [vmem:[%s4196 + $0x28] sm:$0xff]
    %v4203 = vld [vmem:[%s4196 + $0x30] sm:$0xff]
    %v4204 = vld [vmem:[%s4196 + $0x38] sm:$0xff]
    %v4205 = vrot.slane %v3285, 3
    %v4206 = vsel %vm2928, %v4205, 0
    %4208 = vmatprep.subr.mxu0 0.0
    %4209 = vmatpush1.msra.mxu0 %v4197
    %4210 = vmatprep.subr.mxu0 0.0
    %4211 = vmatpush1.msra.mxu0 %v4198
    %4212 = vmatprep.subr.mxu0 0.0
    %4213 = vmatpush1.msra.mxu0 %v4199
    %4214 = vmatprep.subr.mxu0 0.0
    %4215 = vmatpush1.msra.mxu0 %v4200
    %4216 = vmatprep.subr.mxu0 0.0
    %4217 = vmatpush1.msra.mxu0 %v4201
    %4218 = vmatprep.subr.mxu0 0.0
    %4219 = vmatpush1.msra.mxu0 %v4202
    %4220 = vmatprep.subr.mxu0 0.0
    %4221 = vmatpush1.msra.mxu0 %v4203
    %4222 = vmatprep.subr.mxu0 0.0
    %4223 = vmatpush1.msra.mxu0 %v4204
    %4224 = vmatprep.subr.mxu0 0.0
    %4225 = vmatpush1.msra.mxu0 0.0
    %4226 = vmatprep.subr.mxu0 0.0
    %4227 = vmatpush1.msra.mxu0 0.0
    %4228 = vmatprep.subr.mxu0 0.0
    %4229 = vmatpush1.msra.mxu0 0.0
    %4230 = vmatprep.subr.mxu0 0.0
    %4231 = vmatpush1.msra.mxu0 0.0
    %4232 = vmatprep.subr.mxu0 0.0
    %4233 = vmatpush1.msra.mxu0 0.0
    %4234 = vmatprep.subr.mxu0 0.0
    %4235 = vmatpush1.msra.mxu0 0.0
    %4236 = vmatprep.subr.mxu0 0.0
    %4237 = vmatpush1.msra.mxu0 0.0
    %4238 = vmatprep.subr.mxu0 0.0
    %4239 = vmatpush1.msra.mxu0 0.0
    %4240 = vmatprep.subr.mxu0 0.0
    %4241 = vmatpush1.msra.mxu0 0.0
    %4242 = vmatprep.subr.mxu0 0.0
    %4243 = vmatpush1.msra.mxu0 0.0
    %4244 = vmatprep.subr.mxu0 0.0
    %4245 = vmatpush1.msra.mxu0 0.0
    %4246 = vmatprep.subr.mxu0 0.0
    %4247 = vmatpush1.msra.mxu0 0.0
    %4248 = vmatprep.subr.mxu0 0.0
    %4249 = vmatpush1.msra.mxu0 0.0
    %4250 = vmatprep.subr.mxu0 0.0
    %4251 = vmatpush1.msra.mxu0 0.0
    %4252 = vmatprep.subr.mxu0 0.0
    %4253 = vmatpush1.msra.mxu0 0.0
    %4254 = vmatprep.subr.mxu0 0.0
    %4255 = vmatpush1.msra.mxu0 0.0
    %4256 = vmatprep.subr.mxu0 0.0
    %4257 = vmatpush1.msra.mxu0 0.0
    %4258 = vmatprep.subr.mxu0 0.0
    %4259 = vmatpush1.msra.mxu0 0.0
    %4260 = vmatprep.subr.mxu0 0.0
    %4261 = vmatpush1.msra.mxu0 0.0
    %4262 = vmatprep.subr.mxu0 0.0
    %4263 = vmatpush1.msra.mxu0 0.0
    %4264 = vmatprep.subr.mxu0 0.0
    %4265 = vmatpush1.msra.mxu0 0.0
    %4266 = vmatprep.subr.mxu0 0.0
    %4267 = vmatpush1.msra.mxu0 0.0
    %4268 = vmatprep.subr.mxu0 0.0
    %4269 = vmatpush1.msra.mxu0 0.0
    %4270 = vmatprep.subr.mxu0 0.0
    %4271 = vmatpush1.msra.mxu0 0.0
    %4272 = vmatprep.mubr.f32.mxu0 0.0
    %4273 = vmatmul.mubr.f32.gmra.mrb[0].mxu0 %v4206
    %v4274 = vpop.f32.mrb[0].mxu0
    %v4275 = vadd.f32 0.0, %v4274
    %v4276 = vpop.f32.mrb[0].mxu0
    %4277 = vdwg.mxu0
    %v4278 = vadd.f32 %v4195, %v4275
    %s4279 = scalar_lea.vmem %s9, 768
    %v4280 = vld [vmem:[%s4279] sm:$0xff]
    %v4281 = vld [vmem:[%s4279 + $0x8] sm:$0xff]
    %v4282 = vld [vmem:[%s4279 + $0x10] sm:$0xff]
    %v4283 = vld [vmem:[%s4279 + $0x18] sm:$0xff]
    %v4284 = vld [vmem:[%s4279 + $0x20] sm:$0xff]
    %v4285 = vld [vmem:[%s4279 + $0x28] sm:$0xff]
    %v4286 = vld [vmem:[%s4279 + $0x30] sm:$0xff]
    %v4287 = vld [vmem:[%s4279 + $0x38] sm:$0xff]
    %v4288 = vrot.slane %v3285, 4
    %v4289 = vsel %vm2928, %v4288, 0
    %4291 = vmatprep.subr.mxu0 0.0
    %4292 = vmatpush1.msra.mxu0 %v4280
    %4293 = vmatprep.subr.mxu0 0.0
    %4294 = vmatpush1.msra.mxu0 %v4281
    %4295 = vmatprep.subr.mxu0 0.0
    %4296 = vmatpush1.msra.mxu0 %v4282
    %4297 = vmatprep.subr.mxu0 0.0
    %4298 = vmatpush1.msra.mxu0 %v4283
    %4299 = vmatprep.subr.mxu0 0.0
    %4300 = vmatpush1.msra.mxu0 %v4284
    %4301 = vmatprep.subr.mxu0 0.0
    %4302 = vmatpush1.msra.mxu0 %v4285
    %4303 = vmatprep.subr.mxu0 0.0
    %4304 = vmatpush1.msra.mxu0 %v4286
    %4305 = vmatprep.subr.mxu0 0.0
    %4306 = vmatpush1.msra.mxu0 %v4287
    %4307 = vmatprep.subr.mxu0 0.0
    %4308 = vmatpush1.msra.mxu0 0.0
    %4309 = vmatprep.subr.mxu0 0.0
    %4310 = vmatpush1.msra.mxu0 0.0
    %4311 = vmatprep.subr.mxu0 0.0
    %4312 = vmatpush1.msra.mxu0 0.0
    %4313 = vmatprep.subr.mxu0 0.0
    %4314 = vmatpush1.msra.mxu0 0.0
    %4315 = vmatprep.subr.mxu0 0.0
    %4316 = vmatpush1.msra.mxu0 0.0
    %4317 = vmatprep.subr.mxu0 0.0
    %4318 = vmatpush1.msra.mxu0 0.0
    %4319 = vmatprep.subr.mxu0 0.0
    %4320 = vmatpush1.msra.mxu0 0.0
    %4321 = vmatprep.subr.mxu0 0.0
    %4322 = vmatpush1.msra.mxu0 0.0
    %4323 = vmatprep.subr.mxu0 0.0
    %4324 = vmatpush1.msra.mxu0 0.0
    %4325 = vmatprep.subr.mxu0 0.0
    %4326 = vmatpush1.msra.mxu0 0.0
    %4327 = vmatprep.subr.mxu0 0.0
    %4328 = vmatpush1.msra.mxu0 0.0
    %4329 = vmatprep.subr.mxu0 0.0
    %4330 = vmatpush1.msra.mxu0 0.0
    %4331 = vmatprep.subr.mxu0 0.0
    %4332 = vmatpush1.msra.mxu0 0.0
    %4333 = vmatprep.subr.mxu0 0.0
    %4334 = vmatpush1.msra.mxu0 0.0
    %4335 = vmatprep.subr.mxu0 0.0
    %4336 = vmatpush1.msra.mxu0 0.0
    %4337 = vmatprep.subr.mxu0 0.0
    %4338 = vmatpush1.msra.mxu0 0.0
    %4339 = vmatprep.subr.mxu0 0.0
    %4340 = vmatpush1.msra.mxu0 0.0
    %4341 = vmatprep.subr.mxu0 0.0
    %4342 = vmatpush1.msra.mxu0 0.0
    %4343 = vmatprep.subr.mxu0 0.0
    %4344 = vmatpush1.msra.mxu0 0.0
    %4345 = vmatprep.subr.mxu0 0.0
    %4346 = vmatpush1.msra.mxu0 0.0
    %4347 = vmatprep.subr.mxu0 0.0
    %4348 = vmatpush1.msra.mxu0 0.0
    %4349 = vmatprep.subr.mxu0 0.0
    %4350 = vmatpush1.msra.mxu0 0.0
    %4351 = vmatprep.subr.mxu0 0.0
    %4352 = vmatpush1.msra.mxu0 0.0
    %4353 = vmatprep.subr.mxu0 0.0
    %4354 = vmatpush1.msra.mxu0 0.0
    %4355 = vmatprep.mubr.f32.mxu0 0.0
    %4356 = vmatmul.mubr.f32.gmra.mrb[0].mxu0 %v4289
    %v4357 = vpop.f32.mrb[0].mxu0
    %v4358 = vadd.f32 0.0, %v4357
    %v4359 = vpop.f32.mrb[0].mxu0
    %4360 = vdwg.mxu0
    %v4361 = vadd.f32 %v4278, %v4358
    %s4362 = scalar_lea.vmem %s9, 832
    %v4363 = vld [vmem:[%s4362] sm:$0xff]
    %v4364 = vld [vmem:[%s4362 + $0x8] sm:$0xff]
    %v4365 = vld [vmem:[%s4362 + $0x10] sm:$0xff]
    %v4366 = vld [vmem:[%s4362 + $0x18] sm:$0xff]
    %v4367 = vld [vmem:[%s4362 + $0x20] sm:$0xff]
    %v4368 = vld [vmem:[%s4362 + $0x28] sm:$0xff]
    %v4369 = vld [vmem:[%s4362 + $0x30] sm:$0xff]
    %v4370 = vld [vmem:[%s4362 + $0x38] sm:$0xff]
    %v4371 = vrot.slane %v3285, 5
    %v4372 = vsel %vm2928, %v4371, 0
    %4374 = vmatprep.subr.mxu0 0.0
    %4375 = vmatpush1.msra.mxu0 %v4363
    %4376 = vmatprep.subr.mxu0 0.0
    %4377 = vmatpush1.msra.mxu0 %v4364
    %4378 = vmatprep.subr.mxu0 0.0
    %4379 = vmatpush1.msra.mxu0 %v4365
    %4380 = vmatprep.subr.mxu0 0.0
    %4381 = vmatpush1.msra.mxu0 %v4366
    %4382 = vmatprep.subr.mxu0 0.0
    %4383 = vmatpush1.msra.mxu0 %v4367
    %4384 = vmatprep.subr.mxu0 0.0
    %4385 = vmatpush1.msra.mxu0 %v4368
    %4386 = vmatprep.subr.mxu0 0.0
    %4387 = vmatpush1.msra.mxu0 %v4369
    %4388 = vmatprep.subr.mxu0 0.0
    %4389 = vmatpush1.msra.mxu0 %v4370
    %4390 = vmatprep.subr.mxu0 0.0
    %4391 = vmatpush1.msra.mxu0 0.0
    %4392 = vmatprep.subr.mxu0 0.0
    %4393 = vmatpush1.msra.mxu0 0.0
    %4394 = vmatprep.subr.mxu0 0.0
    %4395 = vmatpush1.msra.mxu0 0.0
    %4396 = vmatprep.subr.mxu0 0.0
    %4397 = vmatpush1.msra.mxu0 0.0
    %4398 = vmatprep.subr.mxu0 0.0
    %4399 = vmatpush1.msra.mxu0 0.0
    %4400 = vmatprep.subr.mxu0 0.0
    %4401 = vmatpush1.msra.mxu0 0.0
    %4402 = vmatprep.subr.mxu0 0.0
    %4403 = vmatpush1.msra.mxu0 0.0
    %4404 = vmatprep.subr.mxu0 0.0
    %4405 = vmatpush1.msra.mxu0 0.0
    %4406 = vmatprep.subr.mxu0 0.0
    %4407 = vmatpush1.msra.mxu0 0.0
    %4408 = vmatprep.subr.mxu0 0.0
    %4409 = vmatpush1.msra.mxu0 0.0
    %4410 = vmatprep.subr.mxu0 0.0
    %4411 = vmatpush1.msra.mxu0 0.0
    %4412 = vmatprep.subr.mxu0 0.0
    %4413 = vmatpush1.msra.mxu0 0.0
    %4414 = vmatprep.subr.mxu0 0.0
    %4415 = vmatpush1.msra.mxu0 0.0
    %4416 = vmatprep.subr.mxu0 0.0
    %4417 = vmatpush1.msra.mxu0 0.0
    %4418 = vmatprep.subr.mxu0 0.0
    %4419 = vmatpush1.msra.mxu0 0.0
    %4420 = vmatprep.subr.mxu0 0.0
    %4421 = vmatpush1.msra.mxu0 0.0
    %4422 = vmatprep.subr.mxu0 0.0
    %4423 = vmatpush1.msra.mxu0 0.0
    %4424 = vmatprep.subr.mxu0 0.0
    %4425 = vmatpush1.msra.mxu0 0.0
    %4426 = vmatprep.subr.mxu0 0.0
    %4427 = vmatpush1.msra.mxu0 0.0
    %4428 = vmatprep.subr.mxu0 0.0
    %4429 = vmatpush1.msra.mxu0 0.0
    %4430 = vmatprep.subr.mxu0 0.0
    %4431 = vmatpush1.msra.mxu0 0.0
    %4432 = vmatprep.subr.mxu0 0.0
    %4433 = vmatpush1.msra.mxu0 0.0
    %4434 = vmatprep.subr.mxu0 0.0
    %4435 = vmatpush1.msra.mxu0 0.0
    %4436 = vmatprep.subr.mxu0 0.0
    %4437 = vmatpush1.msra.mxu0 0.0
    %4438 = vmatprep.mubr.f32.mxu0 0.0
    %4439 = vmatmul.mubr.f32.gmra.mrb[0].mxu0 %v4372
    %v4440 = vpop.f32.mrb[0].mxu0
    %v4441 = vadd.f32 0.0, %v4440
    %v4442 = vpop.f32.mrb[0].mxu0
    %4443 = vdwg.mxu0
    %v4444 = vadd.f32 %v4361, %v4441
    %s4445 = scalar_lea.vmem %s9, 896
    %v4446 = vld [vmem:[%s4445] sm:$0xff]
    %v4447 = vld [vmem:[%s4445 + $0x8] sm:$0xff]
    %v4448 = vld [vmem:[%s4445 + $0x10] sm:$0xff]
    %v4449 = vld [vmem:[%s4445 + $0x18] sm:$0xff]
    %v4450 = vld [vmem:[%s4445 + $0x20] sm:$0xff]
    %v4451 = vld [vmem:[%s4445 + $0x28] sm:$0xff]
    %v4452 = vld [vmem:[%s4445 + $0x30] sm:$0xff]
    %v4453 = vld [vmem:[%s4445 + $0x38] sm:$0xff]
    %v4454 = vrot.slane %v3285, 6
    %v4455 = vsel %vm2928, %v4454, 0
    %4457 = vmatprep.subr.mxu0 0.0
    %4458 = vmatpush1.msra.mxu0 %v4446
    %4459 = vmatprep.subr.mxu0 0.0
    %4460 = vmatpush1.msra.mxu0 %v4447
    %4461 = vmatprep.subr.mxu0 0.0
    %4462 = vmatpush1.msra.mxu0 %v4448
    %4463 = vmatprep.subr.mxu0 0.0
    %4464 = vmatpush1.msra.mxu0 %v4449
    %4465 = vmatprep.subr.mxu0 0.0
    %4466 = vmatpush1.msra.mxu0 %v4450
    %4467 = vmatprep.subr.mxu0 0.0
    %4468 = vmatpush1.msra.mxu0 %v4451
    %4469 = vmatprep.subr.mxu0 0.0
    %4470 = vmatpush1.msra.mxu0 %v4452
    %4471 = vmatprep.subr.mxu0 0.0
    %4472 = vmatpush1.msra.mxu0 %v4453
    %4473 = vmatprep.subr.mxu0 0.0
    %4474 = vmatpush1.msra.mxu0 0.0
    %4475 = vmatprep.subr.mxu0 0.0
    %4476 = vmatpush1.msra.mxu0 0.0
    %4477 = vmatprep.subr.mxu0 0.0
    %4478 = vmatpush1.msra.mxu0 0.0
    %4479 = vmatprep.subr.mxu0 0.0
    %4480 = vmatpush1.msra.mxu0 0.0
    %4481 = vmatprep.subr.mxu0 0.0
    %4482 = vmatpush1.msra.mxu0 0.0
    %4483 = vmatprep.subr.mxu0 0.0
    %4484 = vmatpush1.msra.mxu0 0.0
    %4485 = vmatprep.subr.mxu0 0.0
    %4486 = vmatpush1.msra.mxu0 0.0
    %4487 = vmatprep.subr.mxu0 0.0
    %4488 = vmatpush1.msra.mxu0 0.0
    %4489 = vmatprep.subr.mxu0 0.0
    %4490 = vmatpush1.msra.mxu0 0.0
    %4491 = vmatprep.subr.mxu0 0.0
    %4492 = vmatpush1.msra.mxu0 0.0
    %4493 = vmatprep.subr.mxu0 0.0
    %4494 = vmatpush1.msra.mxu0 0.0
    %4495 = vmatprep.subr.mxu0 0.0
    %4496 = vmatpush1.msra.mxu0 0.0
    %4497 = vmatprep.subr.mxu0 0.0
    %4498 = vmatpush1.msra.mxu0 0.0
    %4499 = vmatprep.subr.mxu0 0.0
    %4500 = vmatpush1.msra.mxu0 0.0
    %4501 = vmatprep.subr.mxu0 0.0
    %4502 = vmatpush1.msra.mxu0 0.0
    %4503 = vmatprep.subr.mxu0 0.0
    %4504 = vmatpush1.msra.mxu0 0.0
    %4505 = vmatprep.subr.mxu0 0.0
    %4506 = vmatpush1.msra.mxu0 0.0
    %4507 = vmatprep.subr.mxu0 0.0
    %4508 = vmatpush1.msra.mxu0 0.0
    %4509 = vmatprep.subr.mxu0 0.0
    %4510 = vmatpush1.msra.mxu0 0.0
    %4511 = vmatprep.subr.mxu0 0.0
    %4512 = vmatpush1.msra.mxu0 0.0
    %4513 = vmatprep.subr.mxu0 0.0
    %4514 = vmatpush1.msra.mxu0 0.0
    %4515 = vmatprep.subr.mxu0 0.0
    %4516 = vmatpush1.msra.mxu0 0.0
    %4517 = vmatprep.subr.mxu0 0.0
    %4518 = vmatpush1.msra.mxu0 0.0
    %4519 = vmatprep.subr.mxu0 0.0
    %4520 = vmatpush1.msra.mxu0 0.0
    %4521 = vmatprep.mubr.f32.mxu0 0.0
    %4522 = vmatmul.mubr.f32.gmra.mrb[0].mxu0 %v4455
    %v4523 = vpop.f32.mrb[0].mxu0
    %v4524 = vadd.f32 0.0, %v4523
    %v4525 = vpop.f32.mrb[0].mxu0
    %4526 = vdwg.mxu0
    %v4527 = vadd.f32 %v4444, %v4524
    %s4528 = scalar_lea.vmem %s9, 960
    %v4529 = vld [vmem:[%s4528] sm:$0xff]
    %v4530 = vld [vmem:[%s4528 + $0x8] sm:$0xff]
    %v4531 = vld [vmem:[%s4528 + $0x10] sm:$0xff]
    %v4532 = vld [vmem:[%s4528 + $0x18] sm:$0xff]
    %v4533 = vld [vmem:[%s4528 + $0x20] sm:$0xff]
    %v4534 = vld [vmem:[%s4528 + $0x28] sm:$0xff]
    %v4535 = vld [vmem:[%s4528 + $0x30] sm:$0xff]
    %v4536 = vld [vmem:[%s4528 + $0x38] sm:$0xff]
    %v4537 = vrot.slane %v3285, 7
    %v4538 = vsel %vm2928, %v4537, 0
    %4540 = vmatprep.subr.mxu0 0.0
    %4541 = vmatpush1.msra.mxu0 %v4529
    %4542 = vmatprep.subr.mxu0 0.0
    %4543 = vmatpush1.msra.mxu0 %v4530
    %4544 = vmatprep.subr.mxu0 0.0
    %4545 = vmatpush1.msra.mxu0 %v4531
    %4546 = vmatprep.subr.mxu0 0.0
    %4547 = vmatpush1.msra.mxu0 %v4532
    %4548 = vmatprep.subr.mxu0 0.0
    %4549 = vmatpush1.msra.mxu0 %v4533
    %4550 = vmatprep.subr.mxu0 0.0
    %4551 = vmatpush1.msra.mxu0 %v4534
    %4552 = vmatprep.subr.mxu0 0.0
    %4553 = vmatpush1.msra.mxu0 %v4535
    %4554 = vmatprep.subr.mxu0 0.0
    %4555 = vmatpush1.msra.mxu0 %v4536
    %4556 = vmatprep.subr.mxu0 0.0
    %4557 = vmatpush1.msra.mxu0 0.0
    %4558 = vmatprep.subr.mxu0 0.0
    %4559 = vmatpush1.msra.mxu0 0.0
    %4560 = vmatprep.subr.mxu0 0.0
    %4561 = vmatpush1.msra.mxu0 0.0
    %4562 = vmatprep.subr.mxu0 0.0
    %4563 = vmatpush1.msra.mxu0 0.0
    %4564 = vmatprep.subr.mxu0 0.0
    %4565 = vmatpush1.msra.mxu0 0.0
    %4566 = vmatprep.subr.mxu0 0.0
    %4567 = vmatpush1.msra.mxu0 0.0
    %4568 = vmatprep.subr.mxu0 0.0
    %4569 = vmatpush1.msra.mxu0 0.0
    %4570 = vmatprep.subr.mxu0 0.0
    %4571 = vmatpush1.msra.mxu0 0.0
    %4572 = vmatprep.subr.mxu0 0.0
    %4573 = vmatpush1.msra.mxu0 0.0
    %4574 = vmatprep.subr.mxu0 0.0
    %4575 = vmatpush1.msra.mxu0 0.0
    %4576 = vmatprep.subr.mxu0 0.0
    %4577 = vmatpush1.msra.mxu0 0.0
    %4578 = vmatprep.subr.mxu0 0.0
    %4579 = vmatpush1.msra.mxu0 0.0
    %4580 = vmatprep.subr.mxu0 0.0
    %4581 = vmatpush1.msra.mxu0 0.0
    %4582 = vmatprep.subr.mxu0 0.0
    %4583 = vmatpush1.msra.mxu0 0.0
    %4584 = vmatprep.subr.mxu0 0.0
    %4585 = vmatpush1.msra.mxu0 0.0
    %4586 = vmatprep.subr.mxu0 0.0
    %4587 = vmatpush1.msra.mxu0 0.0
    %4588 = vmatprep.subr.mxu0 0.0
    %4589 = vmatpush1.msra.mxu0 0.0
    %4590 = vmatprep.subr.mxu0 0.0
    %4591 = vmatpush1.msra.mxu0 0.0
    %4592 = vmatprep.subr.mxu0 0.0
    %4593 = vmatpush1.msra.mxu0 0.0
    %4594 = vmatprep.subr.mxu0 0.0
    %4595 = vmatpush1.msra.mxu0 0.0
    %4596 = vmatprep.subr.mxu0 0.0
    %4597 = vmatpush1.msra.mxu0 0.0
    %4598 = vmatprep.subr.mxu0 0.0
    %4599 = vmatpush1.msra.mxu0 0.0
    %4600 = vmatprep.subr.mxu0 0.0
    %4601 = vmatpush1.msra.mxu0 0.0
    %4602 = vmatprep.subr.mxu0 0.0
    %4603 = vmatpush1.msra.mxu0 0.0
    %4604 = vmatprep.mubr.f32.mxu0 0.0
    %4605 = vmatmul.mubr.f32.gmra.mrb[0].mxu0 %v4538
    %v4606 = vpop.f32.mrb[0].mxu0
    %v4607 = vadd.f32 0.0, %v4606
    %v4608 = vpop.f32.mrb[0].mxu0
    %4609 = vdwg.mxu0
    %v4610 = vadd.f32 %v4527, %v4607
    %v4611 = vld [vmem:[%s10] sm:$0x1]
    %v4612 = vadd.f32 %v4610, %v4611
    %v4613 = vmax.f32 %v4612, 0.0
    %v4614 = vld [vmem:[%s11] sm:$0xff]
    %v4615 = vld [vmem:[%s11 + $0x8] sm:$0xff]
    %v4616 = vld [vmem:[%s11 + $0x10] sm:$0xff]
    %v4617 = vld [vmem:[%s11 + $0x18] sm:$0xff]
    %v4618 = vld [vmem:[%s11 + $0x20] sm:$0xff]
    %v4619 = vld [vmem:[%s11 + $0x28] sm:$0xff]
    %v4620 = vld [vmem:[%s11 + $0x30] sm:$0xff]
    %v4621 = vld [vmem:[%s11 + $0x38] sm:$0xff]
    %v4622 = vld [vmem:[%s12] sm:$0x1]
    %v4624 = vsel %vm2928, %v4613, 0
    %4626 = vmatprep.subr.mxu0 0.0
    %4627 = vmatpush1.msra.mxu0 %v4614
    %4628 = vmatprep.subr.mxu0 0.0
    %4629 = vmatpush1.msra.mxu0 %v4615
    %4630 = vmatprep.subr.mxu0 0.0
    %4631 = vmatpush1.msra.mxu0 %v4616
    %4632 = vmatprep.subr.mxu0 0.0
    %4633 = vmatpush1.msra.mxu0 %v4617
    %4634 = vmatprep.subr.mxu0 0.0
    %4635 = vmatpush1.msra.mxu0 %v4618
    %4636 = vmatprep.subr.mxu0 0.0
    %4637 = vmatpush1.msra.mxu0 %v4619
    %4638 = vmatprep.subr.mxu0 0.0
    %4639 = vmatpush1.msra.mxu0 %v4620
    %4640 = vmatprep.subr.mxu0 0.0
    %4641 = vmatpush1.msra.mxu0 %v4621
    %4642 = vmatprep.subr.mxu0 0.0
    %4643 = vmatpush1.msra.mxu0 0.0
    %4644 = vmatprep.subr.mxu0 0.0
    %4645 = vmatpush1.msra.mxu0 0.0
    %4646 = vmatprep.subr.mxu0 0.0
    %4647 = vmatpush1.msra.mxu0 0.0
    %4648 = vmatprep.subr.mxu0 0.0
    %4649 = vmatpush1.msra.mxu0 0.0
    %4650 = vmatprep.subr.mxu0 0.0
    %4651 = vmatpush1.msra.mxu0 0.0
    %4652 = vmatprep.subr.mxu0 0.0
    %4653 = vmatpush1.msra.mxu0 0.0
    %4654 = vmatprep.subr.mxu0 0.0
    %4655 = vmatpush1.msra.mxu0 0.0
    %4656 = vmatprep.subr.mxu0 0.0
    %4657 = vmatpush1.msra.mxu0 0.0
    %4658 = vmatprep.subr.mxu0 0.0
    %4659 = vmatpush1.msra.mxu0 0.0
    %4660 = vmatprep.subr.mxu0 0.0
    %4661 = vmatpush1.msra.mxu0 0.0
    %4662 = vmatprep.subr.mxu0 0.0
    %4663 = vmatpush1.msra.mxu0 0.0
    %4664 = vmatprep.subr.mxu0 0.0
    %4665 = vmatpush1.msra.mxu0 0.0
    %4666 = vmatprep.subr.mxu0 0.0
    %4667 = vmatpush1.msra.mxu0 0.0
    %4668 = vmatprep.subr.mxu0 0.0
    %4669 = vmatpush1.msra.mxu0 0.0
    %4670 = vmatprep.subr.mxu0 0.0
    %4671 = vmatpush1.msra.mxu0 0.0
    %4672 = vmatprep.subr.mxu0 0.0
    %4673 = vmatpush1.msra.mxu0 0.0
    %4674 = vmatprep.subr.mxu0 0.0
    %4675 = vmatpush1.msra.mxu0 0.0
    %4676 = vmatprep.subr.mxu0 0.0
    %4677 = vmatpush1.msra.mxu0 0.0
    %4678 = vmatprep.subr.mxu0 0.0
    %4679 = vmatpush1.msra.mxu0 0.0
    %4680 = vmatprep.subr.mxu0 0.0
    %4681 = vmatpush1.msra.mxu0 0.0
    %4682 = vmatprep.subr.mxu0 0.0
    %4683 = vmatpush1.msra.mxu0 0.0
    %4684 = vmatprep.subr.mxu0 0.0
    %4685 = vmatpush1.msra.mxu0 0.0
    %4686 = vmatprep.subr.mxu0 0.0
    %4687 = vmatpush1.msra.mxu0 0.0
    %4688 = vmatprep.subr.mxu0 0.0
    %4689 = vmatpush1.msra.mxu0 0.0
    %4690 = vmatprep.mubr.f32.mxu0 0.0
    %4691 = vmatmul.mubr.f32.gmra.mrb[0].mxu0 %v4624
    %v4692 = vpop.f32.mrb[0].mxu0
    %v4693 = vadd.f32 %v4622, %v4692
    %v4694 = vpop.f32.mrb[0].mxu0
    %4695 = vdwg.mxu0
    %4696 = vst [vmem:[#allocation2] sm:$0x1] %v4693
    // Predicated region
    $region54: #{forward.1} parent=1 // pred_check
      _
    $region55: #{forward.1} parent=1 // pred_check_branch
      %4698 = sbr.rel (0) target = $region57
    $region56: #{forward.1} parent=1 // pred_region
      %s4700 = ssub.s32 16, 16
      %4701 = vsyncadd [#allocation3], %s4700
      %s4703 = sshll.u32 [#allocation2], 4
      %s4704 = int_to_ptr.vmem [resolvable:$true] %s4703
      %4706 = dma.vmem_to_hbm [thread:$0]  %s4704, 16, %s13, [#allocation3]
    $region57: #{forward.1} parent=1 // pred_fallthru
      _
    // Predicated region
    $region58: #{forward.1} parent=1 // pred_check
      _
    $region59: #{forward.1} parent=1 // pred_check_branch
      %4708 = sbr.rel (0) target = $region61
    $region60: #{forward.1} parent=1 // pred_region
      %4709 = dma.done [#allocation3], 16
    $region61: #{forward.1} parent=1 // pred_fallthru
      _
    %4710 = vsyncpa [#allocation3], 1

</llo_original>
